<compile_context>
chip_gen: v7x
topology: tpu7x:2x2x1
jax: 0.10.0
libtpu: 0.0.40
codegen_flags: <defaults>
</compile_context>

<pallas_src>
import functools

import jax
import jax.numpy as jnp
from jax.experimental import pallas as pl
from jax.experimental.pallas import tpu as pltpu


# ---------------------------------------------------------------------------
# Helpers
# ---------------------------------------------------------------------------

def _pick_chunk(n, target, multiple):
    """Largest chunk <= target that divides n and is a multiple of `multiple`.
    Falls back to the full dim (always a legal block)."""
    if n <= target:
        return n
    c = (target // multiple) * multiple
    while c >= multiple:
        if n % c == 0:
            return c
        c -= multiple
    return n


# ---------------------------------------------------------------------------
# Kernel 1: fused input projection  ->  LSTM input gates for all timesteps
#   gates_x[b, t, :] = GAP(images[b]) @ W_img2g + embed[b, t] @ W_emb2g + b_g
# (W_img2g / W_emb2g / b_g are the one-time algebraic fusion of the CNN
#  stand-in projection, fc_input and W_ih / biases -- see fuse_params.)
# ---------------------------------------------------------------------------

def _gates_kernel(emb_ref, img_ref, w_emb_ref, w_img_ref, b_ref, o_ref):
    # emb_ref : (1, Tc, E)  bf16     img_ref : (1, C, HW) f32
    # w_emb   : (E, 4H)     bf16     w_img   : (C, 4H)    f32
    # b_ref   : (1, 4H)     f32      o_ref   : (1, Tc, 4H) f32
    pooled = jnp.mean(img_ref[0], axis=-1, keepdims=True)               # (C, 1)
    feat_g = jnp.sum(pooled * w_img_ref[...], axis=0, keepdims=True)    # (1, 4H)
    emb_g = jnp.dot(emb_ref[0], w_emb_ref[...],
                    preferred_element_type=jnp.float32)                 # (Tc, 4H)
    o_ref[0] = emb_g + feat_g + b_ref[...]


def input_gates(emb, img_flat, w_emb2g, w_img2g, b_g, *, time_chunk=128):
    """emb: (B, T, E) bf16, img_flat: (B, C, HW) f32 -> gates_x (B, T, 4H) f32."""
    B, T, E = emb.shape
    _, C, HW = img_flat.shape
    G = w_emb2g.shape[1]
    tc = _pick_chunk(T, time_chunk, 8)
    return pl.pallas_call(
        _gates_kernel,
        out_shape=jax.ShapeDtypeStruct((B, T, G), jnp.float32),
        grid=(B, T // tc),
        in_specs=[
            pl.BlockSpec((1, tc, E), lambda b, t: (b, t, 0)),
            pl.BlockSpec((1, C, HW), lambda b, t: (b, 0, 0)),
            pl.BlockSpec((E, G), lambda b, t: (0, 0)),
            pl.BlockSpec((C, G), lambda b, t: (0, 0)),
            pl.BlockSpec((1, G), lambda b, t: (0, 0)),
        ],
        out_specs=pl.BlockSpec((1, tc, G), lambda b, t: (b, t, 0)),
        compiler_params=pltpu.CompilerParams(
            dimension_semantics=("parallel", "parallel"),
        ),
    )(emb, img_flat, w_emb2g, w_img2g, b_g.reshape(1, G))


# ---------------------------------------------------------------------------
# Kernel 2: LSTM recurrence (input-side matmul already hoisted into gates_x).
#   Batch-first blocks, a chunk of Tc timesteps per grid step, carried h/c in
#   VMEM scratch. Only h @ W_hh stays on the serial critical path.
# ---------------------------------------------------------------------------

def _lstm_kernel(gx_ref, whh_ref, o_ref, h_sc, c_sc):
    @pl.when(pl.program_id(0) == 0)
    def _():
        h_sc[...] = jnp.zeros_like(h_sc)
        c_sc[...] = jnp.zeros_like(c_sc)

    h = h_sc[...]
    c = c_sc[...]
    Hd = h_sc.shape[-1]
    tc = gx_ref.shape[1]
    for i in range(tc):  # static unroll over the time chunk
        gates = gx_ref[:, i, :] + jnp.dot(
            h, whh_ref[...], preferred_element_type=jnp.float32)        # (B, 4H)
        i_g = jax.nn.sigmoid(gates[:, 0 * Hd:1 * Hd])
        f_g = jax.nn.sigmoid(gates[:, 1 * Hd:2 * Hd])
        g_g = jnp.tanh(gates[:, 2 * Hd:3 * Hd])
        o_g = jax.nn.sigmoid(gates[:, 3 * Hd:4 * Hd])
        c = f_g * c + i_g * g_g
        h = o_g * jnp.tanh(c)
        o_ref[:, i, :] = h
    h_sc[...] = h
    c_sc[...] = c


def lstm_from_gates(gates_x, w_hh, *, time_chunk=32):
    """gates_x: (B, T, 4H) f32, w_hh: (H, 4H) f32 -> (B, T, H) f32 (batch-first)."""
    B, T, G = gates_x.shape
    H = w_hh.shape[0]
    tc = _pick_chunk(T, time_chunk, 8)
    return pl.pallas_call(
        _lstm_kernel,
        out_shape=jax.ShapeDtypeStruct((B, T, H), jnp.float32),
        grid=(T // tc,),
        in_specs=[
            pl.BlockSpec((B, tc, G), lambda t: (0, t, 0)),
            pl.BlockSpec((H, G), lambda t: (0, 0)),
        ],
        out_specs=pl.BlockSpec((B, tc, H), lambda t: (0, t, 0)),
        scratch_shapes=[
            pltpu.VMEM((B, H), jnp.float32),
            pltpu.VMEM((B, H), jnp.float32),
        ],
        compiler_params=pltpu.CompilerParams(
            dimension_semantics=("arbitrary",),   # sequential: carried h/c state
        ),
    )(gates_x, w_hh)


# ---------------------------------------------------------------------------
# Kernel 3: tiled linear (used for the final hidden -> vocab projection).
# ---------------------------------------------------------------------------

def _matmul_kernel(x_ref, w_ref, b_ref, o_ref, acc_ref):
    k = pl.program_id(2)

    @pl.when(k == 0)
    def _():
        acc_ref[...] = jnp.zeros_like(acc_ref)

    acc_ref[...] += jnp.dot(x_ref[...], w_ref[...],
                            preferred_element_type=jnp.float32)

    @pl.when(k == pl.num_programs(2) - 1)
    def _():
        o_ref[...] = (acc_ref[...] + b_ref[...]).astype(o_ref.dtype)


def linear_tiled(x, w, b, *, tm=256, tn=256, tk=512):
    """x: (M, K) bf16, w: (K, N) bf16, b: (N,) f32 -> (M, N) f32."""
    M, K = x.shape
    N = w.shape[1]
    tm = _pick_chunk(M, tm, 8)
    tn = _pick_chunk(N, tn, 128)
    tk = _pick_chunk(K, tk, 128)
    return pl.pallas_call(
        _matmul_kernel,
        out_shape=jax.ShapeDtypeStruct((M, N), jnp.float32),
        grid=(M // tm, N // tn, K // tk),
        in_specs=[
            pl.BlockSpec((tm, tk), lambda i, j, k: (i, k)),
            pl.BlockSpec((tk, tn), lambda i, j, k: (k, j)),
            pl.BlockSpec((1, tn), lambda i, j, k: (0, j)),
        ],
        out_specs=pl.BlockSpec((tm, tn), lambda i, j, k: (i, j)),
        scratch_shapes=[pltpu.VMEM((tm, tn), jnp.float32)],
        compiler_params=pltpu.CompilerParams(
            dimension_semantics=("parallel", "parallel", "arbitrary"),
        ),
    )(x, w, b.reshape(1, N))


# ---------------------------------------------------------------------------
# Parameters (PyTorch-equivalent layout) + one-time algebraic fusion
# ---------------------------------------------------------------------------

def init_params(key, *, img_channels, vocab_size, embedding_dim, hidden_dim,
                feat_dim=512, scale=0.02):
    ks = jax.random.split(key, 10)
    p = {
        # CNN stand-in: GAP over spatial, then project C -> 512.
        "w_feat": scale * jax.random.normal(ks[0], (img_channels, feat_dim), jnp.float32),
        "b_feat": scale * jax.random.normal(ks[1], (feat_dim,), jnp.float32),
        # nn.Embedding(vocab_size, embedding_dim)
        "embedding": scale * jax.random.normal(ks[2], (vocab_size, embedding_dim), jnp.float32),
        # nn.Linear(512 + embedding_dim, embedding_dim)   (stored as (in, out))
        "w_fc_in": scale * jax.random.normal(ks[3], (feat_dim + embedding_dim, embedding_dim), jnp.float32),
        "b_fc_in": scale * jax.random.normal(ks[4], (embedding_dim,), jnp.float32),
        # nn.LSTM(embedding_dim, hidden_dim, 1, batch_first=True)
        # gate order i,f,g,o; b_lstm == b_ih + b_hh of PyTorch.
        "w_ih": scale * jax.random.normal(ks[5], (embedding_dim, 4 * hidden_dim), jnp.float32),
        "w_hh": scale * jax.random.normal(ks[6], (hidden_dim, 4 * hidden_dim), jnp.float32),
        "b_lstm": scale * jax.random.normal(ks[7], (4 * hidden_dim,), jnp.float32),
        # nn.Linear(hidden_dim, vocab_size)
        "w_fc": scale * jax.random.normal(ks[8], (hidden_dim, vocab_size), jnp.float32),
        "b_fc": scale * jax.random.normal(ks[9], (vocab_size,), jnp.float32),
    }
    return p


def fuse_params(p):
    """One-time weight preprocessing (done once, outside the forward kernels):

    fc_input followed (with no nonlinearity) by the LSTM input projection is
    folded:  W_fused = W_fc_in @ W_ih,  b_fused = b_fc_in @ W_ih + b_lstm.
    The CNN stand-in projection is folded into the feature half of W_fused.
    Big-matmul weights are cast to bf16; the vocab dim is padded to 128 lanes.
    """
    w_fused = p["w_fc_in"] @ p["w_ih"]                     # (512+E, 4H)
    b_fused = p["b_fc_in"] @ p["w_ih"] + p["b_lstm"]       # (4H,)
    feat_dim = p["w_feat"].shape[1]
    w_feat2g = w_fused[:feat_dim]                          # (512, 4H)
    w_emb2g = w_fused[feat_dim:]                           # (E, 4H)
    w_img2g = p["w_feat"] @ w_feat2g                       # (C, 4H)
    b_g = b_fused + p["b_feat"] @ w_feat2g                 # (4H,)

    V = p["w_fc"].shape[1]
    v_pad = ((V + 127) // 128) * 128
    w_fc_pad = jnp.zeros((p["w_fc"].shape[0], v_pad), jnp.float32).at[:, :V].set(p["w_fc"])
    b_fc_pad = jnp.zeros((v_pad,), jnp.float32).at[:V].set(p["b_fc"])

    return {
        "embedding": p["embedding"].astype(jnp.bfloat16),
        "w_emb2g": w_emb2g.astype(jnp.bfloat16),
        "w_img2g": w_img2g.astype(jnp.float32),
        "b_g": b_g.astype(jnp.float32),
        "w_hh": p["w_hh"].astype(jnp.float32),   # recurrence stays f32
        "w_fc_pad": w_fc_pad.astype(jnp.bfloat16),
        "b_fc_pad": b_fc_pad,
    }


# ---------------------------------------------------------------------------
# Forward (mirror of SCSTModel.forward)
# ---------------------------------------------------------------------------

@functools.partial(jax.jit, static_argnames=("vocab_size",))
def scst_forward(fused, images, captions, *, vocab_size):
    """images: (B, C, H, W) f32, captions: (B, T) int32 -> (B, T, V) f32."""
    B, T = captions.shape
    C = images.shape[1]
    img_flat = images.reshape(B, C, -1)                    # (B, C, H*W)

    # embedding lookup (bf16 table halves gather traffic)
    emb = jnp.take(fused["embedding"], captions, axis=0)   # (B, T, E) bf16

    # fused: cnn features + fc_input + x @ W_ih + biases, all timesteps at once
    gates_x = input_gates(emb, img_flat, fused["w_emb2g"],
                          fused["w_img2g"], fused["b_g"])  # (B, T, 4H) f32

    # sequential LSTM recurrence (h @ W_hh only), batch-first in/out
    hseq = lstm_from_gates(gates_x, fused["w_hh"])         # (B, T, H) f32

    # final vocab projection (tiled, bf16 inputs / f32 accumulate, padded lanes)
    H = fused["w_hh"].shape[0]
    logits_pad = linear_tiled(hseq.reshape(B * T, H).astype(jnp.bfloat16),
                              fused["w_fc_pad"], fused["b_fc_pad"])
    logits = logits_pad[:, :vocab_size].reshape(B, T, vocab_size)
    return logits


# ---------------------------------------------------------------------------
# Main
# ---------------------------------------------------------------------------

if __name__ == "__main__":
    B, C, Himg, Wimg = 2, 4, 16, 16
    T = 8
    vocab_size = 32
    embedding_dim = 128
    hidden_dim = 128

    key = jax.random.PRNGKey(0)
    k_params, k_img, k_cap = jax.random.split(key, 3)

    params = init_params(
        k_params,
        img_channels=C,
        vocab_size=vocab_size,
        embedding_dim=embedding_dim,
        hidden_dim=hidden_dim,
    )
    fused = fuse_params(params)

    images = jax.random.normal(k_img, (B, C, Himg, Wimg), jnp.float32)
    captions = jax.random.randint(k_cap, (B, T), 0, vocab_size, jnp.int32)

    out = scst_forward(fused, images, captions, vocab_size=vocab_size)
    out = jax.block_until_ready(out)

    assert out.shape == (B, T, vocab_size), out.shape
    assert out.dtype == jnp.float32
    assert bool(jnp.all(jnp.isfinite(out)))
    print("KERNEL_OK")
</pallas_src>

<mosaic_0001>
module attributes {stable_mosaic.version = 11 : i64} {
  func.func @_gates_kernel(%arg0: i32, %arg1: i32, %arg2: memref<1x8x128xbf16, #tpu.memory_space<vmem>>, %arg3: memref<1x4x256xf32, #tpu.memory_space<vmem>>, %arg4: memref<128x512xbf16, #tpu.memory_space<vmem>>, %arg5: memref<4x512xf32, #tpu.memory_space<vmem>>, %arg6: memref<1x512xf32, #tpu.memory_space<vmem>>, %arg7: memref<1x8x512xf32, #tpu.memory_space<vmem>>) attributes {dimension_semantics = [#tpu.dimension_semantics<parallel>, #tpu.dimension_semantics<parallel>], iteration_bounds = array<i64: 2, 1>, scalar_prefetch = 0 : i64, scratch_operands = 0 : i64, tpu.core_type = #tpu.core_type<tc>, window_params = [{transform_indices = @transform_0, window_bounds = array<i64: 1, 8, 128>}, {transform_indices = @transform_1, window_bounds = array<i64: 1, 4, 256>}, {pipeline_mode = #tpu.pipeline_mode<synchronous>, transform_indices = @transform_2, window_bounds = array<i64: 128, 512>}, {pipeline_mode = #tpu.pipeline_mode<synchronous>, transform_indices = @transform_3, window_bounds = array<i64: 4, 512>}, {pipeline_mode = #tpu.pipeline_mode<synchronous>, transform_indices = @transform_4, window_bounds = array<i64: 1, 512>}, {transform_indices = @transform_5, window_bounds = array<i64: 1, 8, 512>}]} {
    %c0 = arith.constant 0 : index
    %c0_0 = arith.constant 0 : index
    %c0_1 = arith.constant 0 : index
    %0 = vector.load %arg3[%c0, %c0_0, %c0_1] : memref<1x4x256xf32, #tpu.memory_space<vmem>>, vector<1x4x256xf32>
    %1 = vector.shape_cast %0 : vector<1x4x256xf32> to vector<4x256xf32>
    %cst = arith.constant dense<0.000000e+00> : vector<4xf32>
    %2 = vector.multi_reduction <add>, %1, %cst [1] : vector<4x256xf32> to vector<4xf32>
    %3 = vector.shape_cast %2 : vector<4xf32> to vector<4x1xf32>
    %cst_2 = arith.constant 2.560000e+02 : f32
    %4 = vector.broadcast %cst_2 : f32 to vector<4x1xf32>
    %5 = arith.divf %3, %4 : vector<4x1xf32>
    %c0_3 = arith.constant 0 : index
    %c0_4 = arith.constant 0 : index
    %6 = vector.load %arg5[%c0_3, %c0_4] : memref<4x512xf32, #tpu.memory_space<vmem>>, vector<4x512xf32>
    %7 = vector.broadcast %5 : vector<4x1xf32> to vector<4x512xf32>
    %8 = arith.mulf %7, %6 : vector<4x512xf32>
    %cst_5 = arith.constant dense<0.000000e+00> : vector<512xf32>
    %9 = vector.multi_reduction <add>, %8, %cst_5 [0] : vector<4x512xf32> to vector<512xf32>
    %10 = vector.shape_cast %9 : vector<512xf32> to vector<1x512xf32>
    %c0_6 = arith.constant 0 : index
    %c0_7 = arith.constant 0 : index
    %c0_8 = arith.constant 0 : index
    %11 = vector.load %arg2[%c0_6, %c0_7, %c0_8] : memref<1x8x128xbf16, #tpu.memory_space<vmem>>, vector<1x8x128xbf16>
    %12 = vector.shape_cast %11 : vector<1x8x128xbf16> to vector<8x128xbf16>
    %c0_9 = arith.constant 0 : index
    %c0_10 = arith.constant 0 : index
    %13 = vector.load %arg4[%c0_9, %c0_10] : memref<128x512xbf16, #tpu.memory_space<vmem>>, vector<128x512xbf16>
    %cst_11 = arith.constant dense<0.000000e+00> : vector<8x512xf32>
    %14 = tpu.matmul %12, %13, %cst_11 {dimension_numbers = #tpu.dot_dimension_numbers<[1], [0], [0], [1], [0, 0, 1, 1], [], []>} : vector<8x128xbf16>, vector<128x512xbf16>, vector<8x512xf32> -> vector<8x512xf32>
    %15 = vector.broadcast %10 : vector<1x512xf32> to vector<8x512xf32>
    %16 = arith.addf %14, %15 : vector<8x512xf32>
    %c0_12 = arith.constant 0 : index
    %c0_13 = arith.constant 0 : index
    %17 = vector.load %arg6[%c0_12, %c0_13] : memref<1x512xf32, #tpu.memory_space<vmem>>, vector<1x512xf32>
    %18 = vector.broadcast %17 : vector<1x512xf32> to vector<8x512xf32>
    %19 = arith.addf %16, %18 : vector<8x512xf32>
    %c0_14 = arith.constant 0 : index
    %c0_15 = arith.constant 0 : index
    %c0_16 = arith.constant 0 : index
    %20 = vector.load %arg7[%c0_14, %c0_15, %c0_16] : memref<1x8x512xf32, #tpu.memory_space<vmem>>, vector<1x8x512xf32>
    %21 = vector.shape_cast %20 : vector<1x8x512xf32> to vector<8x512xf32>
    %22 = vector.shape_cast %19 : vector<8x512xf32> to vector<1x8x512xf32>
    tpu.vector_store %arg7[%c0_14, %c0_15, %c0_16], %22 {strides = array<i32>} : memref<1x8x512xf32, #tpu.memory_space<vmem>>, vector<1x8x512xf32>,
    return
  }
  func.func @transform_0(%arg0: i32, %arg1: i32) -> (i32, i32, i32) {
    %c0_i32 = arith.constant 0 : i32
    %c0_i32_0 = arith.constant 0 : i32
    return %arg0, %arg1, %c0_i32 : i32, i32, i32
  }
  func.func @transform_1(%arg0: i32, %arg1: i32) -> (i32, i32, i32) {
    %c0_i32 = arith.constant 0 : i32
    %c0_i32_0 = arith.constant 0 : i32
    %c0_i32_1 = arith.constant 0 : i32
    return %arg0, %c0_i32, %c0_i32_0 : i32, i32, i32
  }
  func.func @transform_2(%arg0: i32, %arg1: i32) -> (i32, i32) {
    %c0_i32 = arith.constant 0 : i32
    %c0_i32_0 = arith.constant 0 : i32
    %c0_i32_1 = arith.constant 0 : i32
    return %c0_i32, %c0_i32_0 : i32, i32
  }
  func.func @transform_3(%arg0: i32, %arg1: i32) -> (i32, i32) {
    %c0_i32 = arith.constant 0 : i32
    %c0_i32_0 = arith.constant 0 : i32
    %c0_i32_1 = arith.constant 0 : i32
    return %c0_i32, %c0_i32_0 : i32, i32
  }
  func.func @transform_4(%arg0: i32, %arg1: i32) -> (i32, i32) {
    %c0_i32 = arith.constant 0 : i32
    %c0_i32_0 = arith.constant 0 : i32
    %c0_i32_1 = arith.constant 0 : i32
    return %c0_i32, %c0_i32_0 : i32, i32
  }
  func.func @transform_5(%arg0: i32, %arg1: i32) -> (i32, i32, i32) {
    %c0_i32 = arith.constant 0 : i32
    %c0_i32_0 = arith.constant 0 : i32
    return %arg0, %arg1, %c0_i32 : i32, i32, i32
  }
}

module attributes {stable_mosaic.version = 11 : i64} {
  func.func @_lstm_kernel(%arg0: i32, %arg1: memref<2x8x512xf32, #tpu.memory_space<vmem>>, %arg2: memref<128x512xf32, #tpu.memory_space<vmem>>, %arg3: memref<2x8x128xf32, #tpu.memory_space<vmem>>, %arg4: memref<2x128xf32, #tpu.memory_space<vmem>>, %arg5: memref<2x128xf32, #tpu.memory_space<vmem>>) attributes {dimension_semantics = [#tpu.dimension_semantics<arbitrary>], iteration_bounds = array<i64: 1>, scalar_prefetch = 0 : i64, scratch_operands = 2 : i64, tpu.core_type = #tpu.core_type<tc>, window_params = [{transform_indices = @transform_0, window_bounds = array<i64: 2, 8, 512>}, {pipeline_mode = #tpu.pipeline_mode<synchronous>, transform_indices = @transform_1, window_bounds = array<i64: 128, 512>}, {transform_indices = @transform_2, window_bounds = array<i64: 2, 8, 128>}]} {
    %c0_i32 = arith.constant 0 : i32
    %0 = arith.cmpi eq, %arg0, %c0_i32 : i32
    %1 = arith.extui %0 : i1 to i32
    %c0_i32_0 = arith.constant 0 : i32
    %2 = arith.cmpi ne, %1, %c0_i32_0 : i32
    scf.if %2 {
      %cst_96 = arith.constant 0.000000e+00 : f32
      %271 = vector.broadcast %cst_96 : f32 to vector<2x128xf32>
      %c0_97 = arith.constant 0 : index
      %c0_98 = arith.constant 0 : index
      %272 = vector.load %arg4[%c0_97, %c0_98] : memref<2x128xf32, #tpu.memory_space<vmem>>, vector<2x128xf32>
      tpu.vector_store %arg4[%c0_97, %c0_98], %271 {strides = array<i32>} : memref<2x128xf32, #tpu.memory_space<vmem>>, vector<2x128xf32>,
      %cst_99 = arith.constant 0.000000e+00 : f32
      %273 = vector.broadcast %cst_99 : f32 to vector<2x128xf32>
      %c0_100 = arith.constant 0 : index
      %c0_101 = arith.constant 0 : index
      %274 = vector.load %arg5[%c0_100, %c0_101] : memref<2x128xf32, #tpu.memory_space<vmem>>, vector<2x128xf32>
      tpu.vector_store %arg5[%c0_100, %c0_101], %273 {strides = array<i32>} : memref<2x128xf32, #tpu.memory_space<vmem>>, vector<2x128xf32>,
    } else {
    }
    %c0 = arith.constant 0 : index
    %c0_1 = arith.constant 0 : index
    %3 = vector.load %arg4[%c0, %c0_1] : memref<2x128xf32, #tpu.memory_space<vmem>>, vector<2x128xf32>
    %c0_2 = arith.constant 0 : index
    %c0_3 = arith.constant 0 : index
    %4 = vector.load %arg5[%c0_2, %c0_3] : memref<2x128xf32, #tpu.memory_space<vmem>>, vector<2x128xf32>
    %c0_4 = arith.constant 0 : index
    %c0_5 = arith.constant 0 : index
    %c0_6 = arith.constant 0 : index
    %5 = vector.load %arg1[%c0_4, %c0_5, %c0_6] : memref<2x8x512xf32, #tpu.memory_space<vmem>>, vector<2x1x512xf32>
    %6 = vector.shape_cast %5 : vector<2x1x512xf32> to vector<2x512xf32>
    %c0_7 = arith.constant 0 : index
    %c0_8 = arith.constant 0 : index
    %7 = vector.load %arg2[%c0_7, %c0_8] : memref<128x512xf32, #tpu.memory_space<vmem>>, vector<128x512xf32>
    %cst = arith.constant dense<0.000000e+00> : vector<2x512xf32>
    %8 = tpu.matmul %3, %7, %cst {dimension_numbers = #tpu.dot_dimension_numbers<[1], [0], [0], [1], [0, 0, 1, 1], [], []>} : vector<2x128xf32>, vector<128x512xf32>, vector<2x512xf32> -> vector<2x512xf32>
    %9 = arith.addf %6, %8 : vector<2x512xf32>
    %10 = vector.extract_strided_slice %9 {offsets = [0, 0], sizes = [2, 128], strides = [1, 1]} : vector<2x512xf32> to vector<2x128xf32>
    %11 = arith.negf %10 : vector<2x128xf32>
    %12 = math.exp %11 : vector<2x128xf32>
    %cst_9 = arith.constant 1.000000e+00 : f32
    %13 = vector.broadcast %cst_9 : f32 to vector<2x128xf32>
    %14 = arith.addf %13, %12 : vector<2x128xf32>
    %15 = arith.divf %13, %14 : vector<2x128xf32>
    %16 = vector.extract_strided_slice %9 {offsets = [0, 128], sizes = [2, 128], strides = [1, 1]} : vector<2x512xf32> to vector<2x128xf32>
    %17 = arith.negf %16 : vector<2x128xf32>
    %18 = math.exp %17 : vector<2x128xf32>
    %cst_10 = arith.constant 1.000000e+00 : f32
    %19 = vector.broadcast %cst_10 : f32 to vector<2x128xf32>
    %20 = arith.addf %19, %18 : vector<2x128xf32>
    %21 = arith.divf %19, %20 : vector<2x128xf32>
    %22 = vector.extract_strided_slice %9 {offsets = [0, 256], sizes = [2, 128], strides = [1, 1]} : vector<2x512xf32> to vector<2x128xf32>
    %23 = math.tanh %22 : vector<2x128xf32>
    %24 = vector.extract_strided_slice %9 {offsets = [0, 384], sizes = [2, 128], strides = [1, 1]} : vector<2x512xf32> to vector<2x128xf32>
    %25 = arith.negf %24 : vector<2x128xf32>
    %26 = math.exp %25 : vector<2x128xf32>
    %cst_11 = arith.constant 1.000000e+00 : f32
    %27 = vector.broadcast %cst_11 : f32 to vector<2x128xf32>
    %28 = arith.addf %27, %26 : vector<2x128xf32>
    %29 = arith.divf %27, %28 : vector<2x128xf32>
    %30 = arith.mulf %21, %4 : vector<2x128xf32>
    %31 = arith.mulf %15, %23 : vector<2x128xf32>
    %32 = arith.addf %30, %31 : vector<2x128xf32>
    %33 = math.tanh %32 : vector<2x128xf32>
    %34 = arith.mulf %29, %33 : vector<2x128xf32>
    %c0_12 = arith.constant 0 : index
    %c0_13 = arith.constant 0 : index
    %c0_14 = arith.constant 0 : index
    %35 = vector.load %arg3[%c0_12, %c0_13, %c0_14] : memref<2x8x128xf32, #tpu.memory_space<vmem>>, vector<2x1x128xf32>
    %36 = vector.shape_cast %35 : vector<2x1x128xf32> to vector<2x128xf32>
    %37 = vector.shape_cast %34 : vector<2x128xf32> to vector<2x1x128xf32>
    tpu.vector_store %arg3[%c0_12, %c0_13, %c0_14], %37 {strides = array<i32>} : memref<2x8x128xf32, #tpu.memory_space<vmem>>, vector<2x1x128xf32>,
    %c0_15 = arith.constant 0 : index
    %c1 = arith.constant 1 : index
    %c0_16 = arith.constant 0 : index
    %38 = vector.load %arg1[%c0_15, %c1, %c0_16] : memref<2x8x512xf32, #tpu.memory_space<vmem>>, vector<2x1x512xf32>
    %39 = vector.shape_cast %38 : vector<2x1x512xf32> to vector<2x512xf32>
    %c0_17 = arith.constant 0 : index
    %c0_18 = arith.constant 0 : index
    %40 = vector.load %arg2[%c0_17, %c0_18] : memref<128x512xf32, #tpu.memory_space<vmem>>, vector<128x512xf32>
    %cst_19 = arith.constant dense<0.000000e+00> : vector<2x512xf32>
    %41 = tpu.matmul %34, %40, %cst_19 {dimension_numbers = #tpu.dot_dimension_numbers<[1], [0], [0], [1], [0, 0, 1, 1], [], []>} : vector<2x128xf32>, vector<128x512xf32>, vector<2x512xf32> -> vector<2x512xf32>
    %42 = arith.addf %39, %41 : vector<2x512xf32>
    %43 = vector.extract_strided_slice %42 {offsets = [0, 0], sizes = [2, 128], strides = [1, 1]} : vector<2x512xf32> to vector<2x128xf32>
    %44 = arith.negf %43 : vector<2x128xf32>
    %45 = math.exp %44 : vector<2x128xf32>
    %cst_20 = arith.constant 1.000000e+00 : f32
    %46 = vector.broadcast %cst_20 : f32 to vector<2x128xf32>
    %47 = arith.addf %46, %45 : vector<2x128xf32>
    %48 = arith.divf %46, %47 : vector<2x128xf32>
    %49 = vector.extract_strided_slice %42 {offsets = [0, 128], sizes = [2, 128], strides = [1, 1]} : vector<2x512xf32> to vector<2x128xf32>
    %50 = arith.negf %49 : vector<2x128xf32>
    %51 = math.exp %50 : vector<2x128xf32>
    %cst_21 = arith.constant 1.000000e+00 : f32
    %52 = vector.broadcast %cst_21 : f32 to vector<2x128xf32>
    %53 = arith.addf %52, %51 : vector<2x128xf32>
    %54 = arith.divf %52, %53 : vector<2x128xf32>
    %55 = vector.extract_strided_slice %42 {offsets = [0, 256], sizes = [2, 128], strides = [1, 1]} : vector<2x512xf32> to vector<2x128xf32>
    %56 = math.tanh %55 : vector<2x128xf32>
    %57 = vector.extract_strided_slice %42 {offsets = [0, 384], sizes = [2, 128], strides = [1, 1]} : vector<2x512xf32> to vector<2x128xf32>
    %58 = arith.negf %57 : vector<2x128xf32>
    %59 = math.exp %58 : vector<2x128xf32>
    %cst_22 = arith.constant 1.000000e+00 : f32
    %60 = vector.broadcast %cst_22 : f32 to vector<2x128xf32>
    %61 = arith.addf %60, %59 : vector<2x128xf32>
    %62 = arith.divf %60, %61 : vector<2x128xf32>
    %63 = arith.mulf %54, %32 : vector<2x128xf32>
    %64 = arith.mulf %48, %56 : vector<2x128xf32>
    %65 = arith.addf %63, %64 : vector<2x128xf32>
    %66 = math.tanh %65 : vector<2x128xf32>
    %67 = arith.mulf %62, %66 : vector<2x128xf32>
    %c0_23 = arith.constant 0 : index
    %c1_24 = arith.constant 1 : index
    %c0_25 = arith.constant 0 : index
    %68 = vector.load %arg3[%c0_23, %c1_24, %c0_25] : memref<2x8x128xf32, #tpu.memory_space<vmem>>, vector<2x1x128xf32>
    %69 = vector.shape_cast %68 : vector<2x1x128xf32> to vector<2x128xf32>
    %70 = vector.shape_cast %67 : vector<2x128xf32> to vector<2x1x128xf32>
    tpu.vector_store %arg3[%c0_23, %c1_24, %c0_25], %70 {strides = array<i32>} : memref<2x8x128xf32, #tpu.memory_space<vmem>>, vector<2x1x128xf32>,
    %c0_26 = arith.constant 0 : index
    %c2 = arith.constant 2 : index
    %c0_27 = arith.constant 0 : index
    %71 = vector.load %arg1[%c0_26, %c2, %c0_27] : memref<2x8x512xf32, #tpu.memory_space<vmem>>, vector<2x1x512xf32>
    %72 = vector.shape_cast %71 : vector<2x1x512xf32> to vector<2x512xf32>
    %c0_28 = arith.constant 0 : index
    %c0_29 = arith.constant 0 : index
    %73 = vector.load %arg2[%c0_28, %c0_29] : memref<128x512xf32, #tpu.memory_space<vmem>>, vector<128x512xf32>
    %cst_30 = arith.constant dense<0.000000e+00> : vector<2x512xf32>
    %74 = tpu.matmul %67, %73, %cst_30 {dimension_numbers = #tpu.dot_dimension_numbers<[1], [0], [0], [1], [0, 0, 1, 1], [], []>} : vector<2x128xf32>, vector<128x512xf32>, vector<2x512xf32> -> vector<2x512xf32>
    %75 = arith.addf %72, %74 : vector<2x512xf32>
    %76 = vector.extract_strided_slice %75 {offsets = [0, 0], sizes = [2, 128], strides = [1, 1]} : vector<2x512xf32> to vector<2x128xf32>
    %77 = arith.negf %76 : vector<2x128xf32>
    %78 = math.exp %77 : vector<2x128xf32>
    %cst_31 = arith.constant 1.000000e+00 : f32
    %79 = vector.broadcast %cst_31 : f32 to vector<2x128xf32>
    %80 = arith.addf %79, %78 : vector<2x128xf32>
    %81 = arith.divf %79, %80 : vector<2x128xf32>
    %82 = vector.extract_strided_slice %75 {offsets = [0, 128], sizes = [2, 128], strides = [1, 1]} : vector<2x512xf32> to vector<2x128xf32>
    %83 = arith.negf %82 : vector<2x128xf32>
    %84 = math.exp %83 : vector<2x128xf32>
    %cst_32 = arith.constant 1.000000e+00 : f32
    %85 = vector.broadcast %cst_32 : f32 to vector<2x128xf32>
    %86 = arith.addf %85, %84 : vector<2x128xf32>
    %87 = arith.divf %85, %86 : vector<2x128xf32>
    %88 = vector.extract_strided_slice %75 {offsets = [0, 256], sizes = [2, 128], strides = [1, 1]} : vector<2x512xf32> to vector<2x128xf32>
    %89 = math.tanh %88 : vector<2x128xf32>
    %90 = vector.extract_strided_slice %75 {offsets = [0, 384], sizes = [2, 128], strides = [1, 1]} : vector<2x512xf32> to vector<2x128xf32>
    %91 = arith.negf %90 : vector<2x128xf32>
    %92 = math.exp %91 : vector<2x128xf32>
    %cst_33 = arith.constant 1.000000e+00 : f32
    %93 = vector.broadcast %cst_33 : f32 to vector<2x128xf32>
    %94 = arith.addf %93, %92 : vector<2x128xf32>
    %95 = arith.divf %93, %94 : vector<2x128xf32>
    %96 = arith.mulf %87, %65 : vector<2x128xf32>
    %97 = arith.mulf %81, %89 : vector<2x128xf32>
    %98 = arith.addf %96, %97 : vector<2x128xf32>
    %99 = math.tanh %98 : vector<2x128xf32>
    %100 = arith.mulf %95, %99 : vector<2x128xf32>
    %c0_34 = arith.constant 0 : index
    %c2_35 = arith.constant 2 : index
    %c0_36 = arith.constant 0 : index
    %101 = vector.load %arg3[%c0_34, %c2_35, %c0_36] : memref<2x8x128xf32, #tpu.memory_space<vmem>>, vector<2x1x128xf32>
    %102 = vector.shape_cast %101 : vector<2x1x128xf32> to vector<2x128xf32>
    %103 = vector.shape_cast %100 : vector<2x128xf32> to vector<2x1x128xf32>
    tpu.vector_store %arg3[%c0_34, %c2_35, %c0_36], %103 {strides = array<i32>} : memref<2x8x128xf32, #tpu.memory_space<vmem>>, vector<2x1x128xf32>,
    %c0_37 = arith.constant 0 : index
    %c3 = arith.constant 3 : index
    %c0_38 = arith.constant 0 : index
    %104 = vector.load %arg1[%c0_37, %c3, %c0_38] : memref<2x8x512xf32, #tpu.memory_space<vmem>>, vector<2x1x512xf32>
    %105 = vector.shape_cast %104 : vector<2x1x512xf32> to vector<2x512xf32>
    %c0_39 = arith.constant 0 : index
    %c0_40 = arith.constant 0 : index
    %106 = vector.load %arg2[%c0_39, %c0_40] : memref<128x512xf32, #tpu.memory_space<vmem>>, vector<128x512xf32>
    %cst_41 = arith.constant dense<0.000000e+00> : vector<2x512xf32>
    %107 = tpu.matmul %100, %106, %cst_41 {dimension_numbers = #tpu.dot_dimension_numbers<[1], [0], [0], [1], [0, 0, 1, 1], [], []>} : vector<2x128xf32>, vector<128x512xf32>, vector<2x512xf32> -> vector<2x512xf32>
    %108 = arith.addf %105, %107 : vector<2x512xf32>
    %109 = vector.extract_strided_slice %108 {offsets = [0, 0], sizes = [2, 128], strides = [1, 1]} : vector<2x512xf32> to vector<2x128xf32>
    %110 = arith.negf %109 : vector<2x128xf32>
    %111 = math.exp %110 : vector<2x128xf32>
    %cst_42 = arith.constant 1.000000e+00 : f32
    %112 = vector.broadcast %cst_42 : f32 to vector<2x128xf32>
    %113 = arith.addf %112, %111 : vector<2x128xf32>
    %114 = arith.divf %112, %113 : vector<2x128xf32>
    %115 = vector.extract_strided_slice %108 {offsets = [0, 128], sizes = [2, 128], strides = [1, 1]} : vector<2x512xf32> to vector<2x128xf32>
    %116 = arith.negf %115 : vector<2x128xf32>
    %117 = math.exp %116 : vector<2x128xf32>
    %cst_43 = arith.constant 1.000000e+00 : f32
    %118 = vector.broadcast %cst_43 : f32 to vector<2x128xf32>
    %119 = arith.addf %118, %117 : vector<2x128xf32>
    %120 = arith.divf %118, %119 : vector<2x128xf32>
    %121 = vector.extract_strided_slice %108 {offsets = [0, 256], sizes = [2, 128], strides = [1, 1]} : vector<2x512xf32> to vector<2x128xf32>
    %122 = math.tanh %121 : vector<2x128xf32>
    %123 = vector.extract_strided_slice %108 {offsets = [0, 384], sizes = [2, 128], strides = [1, 1]} : vector<2x512xf32> to vector<2x128xf32>
    %124 = arith.negf %123 : vector<2x128xf32>
    %125 = math.exp %124 : vector<2x128xf32>
    %cst_44 = arith.constant 1.000000e+00 : f32
    %126 = vector.broadcast %cst_44 : f32 to vector<2x128xf32>
    %127 = arith.addf %126, %125 : vector<2x128xf32>
    %128 = arith.divf %126, %127 : vector<2x128xf32>
    %129 = arith.mulf %120, %98 : vector<2x128xf32>
    %130 = arith.mulf %114, %122 : vector<2x128xf32>
    %131 = arith.addf %129, %130 : vector<2x128xf32>
    %132 = math.tanh %131 : vector<2x128xf32>
    %133 = arith.mulf %128, %132 : vector<2x128xf32>
    %c0_45 = arith.constant 0 : index
    %c3_46 = arith.constant 3 : index
    %c0_47 = arith.constant 0 : index
    %134 = vector.load %arg3[%c0_45, %c3_46, %c0_47] : memref<2x8x128xf32, #tpu.memory_space<vmem>>, vector<2x1x128xf32>
    %135 = vector.shape_cast %134 : vector<2x1x128xf32> to vector<2x128xf32>
    %136 = vector.shape_cast %133 : vector<2x128xf32> to vector<2x1x128xf32>
    tpu.vector_store %arg3[%c0_45, %c3_46, %c0_47], %136 {strides = array<i32>} : memref<2x8x128xf32, #tpu.memory_space<vmem>>, vector<2x1x128xf32>,
    %c0_48 = arith.constant 0 : index
    %c4 = arith.constant 4 : index
    %c0_49 = arith.constant 0 : index
    %137 = vector.load %arg1[%c0_48, %c4, %c0_49] : memref<2x8x512xf32, #tpu.memory_space<vmem>>, vector<2x1x512xf32>
    %138 = vector.shape_cast %137 : vector<2x1x512xf32> to vector<2x512xf32>
    %c0_50 = arith.constant 0 : index
    %c0_51 = arith.constant 0 : index
    %139 = vector.load %arg2[%c0_50, %c0_51] : memref<128x512xf32, #tpu.memory_space<vmem>>, vector<128x512xf32>
    %cst_52 = arith.constant dense<0.000000e+00> : vector<2x512xf32>
    %140 = tpu.matmul %133, %139, %cst_52 {dimension_numbers = #tpu.dot_dimension_numbers<[1], [0], [0], [1], [0, 0, 1, 1], [], []>} : vector<2x128xf32>, vector<128x512xf32>, vector<2x512xf32> -> vector<2x512xf32>
    %141 = arith.addf %138, %140 : vector<2x512xf32>
    %142 = vector.extract_strided_slice %141 {offsets = [0, 0], sizes = [2, 128], strides = [1, 1]} : vector<2x512xf32> to vector<2x128xf32>
    %143 = arith.negf %142 : vector<2x128xf32>
    %144 = math.exp %143 : vector<2x128xf32>
    %cst_53 = arith.constant 1.000000e+00 : f32
    %145 = vector.broadcast %cst_53 : f32 to vector<2x128xf32>
    %146 = arith.addf %145, %144 : vector<2x128xf32>
    %147 = arith.divf %145, %146 : vector<2x128xf32>
    %148 = vector.extract_strided_slice %141 {offsets = [0, 128], sizes = [2, 128], strides = [1, 1]} : vector<2x512xf32> to vector<2x128xf32>
    %149 = arith.negf %148 : vector<2x128xf32>
    %150 = math.exp %149 : vector<2x128xf32>
    %cst_54 = arith.constant 1.000000e+00 : f32
    %151 = vector.broadcast %cst_54 : f32 to vector<2x128xf32>
    %152 = arith.addf %151, %150 : vector<2x128xf32>
    %153 = arith.divf %151, %152 : vector<2x128xf32>
    %154 = vector.extract_strided_slice %141 {offsets = [0, 256], sizes = [2, 128], strides = [1, 1]} : vector<2x512xf32> to vector<2x128xf32>
    %155 = math.tanh %154 : vector<2x128xf32>
    %156 = vector.extract_strided_slice %141 {offsets = [0, 384], sizes = [2, 128], strides = [1, 1]} : vector<2x512xf32> to vector<2x128xf32>
    %157 = arith.negf %156 : vector<2x128xf32>
    %158 = math.exp %157 : vector<2x128xf32>
    %cst_55 = arith.constant 1.000000e+00 : f32
    %159 = vector.broadcast %cst_55 : f32 to vector<2x128xf32>
    %160 = arith.addf %159, %158 : vector<2x128xf32>
    %161 = arith.divf %159, %160 : vector<2x128xf32>
    %162 = arith.mulf %153, %131 : vector<2x128xf32>
    %163 = arith.mulf %147, %155 : vector<2x128xf32>
    %164 = arith.addf %162, %163 : vector<2x128xf32>
    %165 = math.tanh %164 : vector<2x128xf32>
    %166 = arith.mulf %161, %165 : vector<2x128xf32>
    %c0_56 = arith.constant 0 : index
    %c4_57 = arith.constant 4 : index
    %c0_58 = arith.constant 0 : index
    %167 = vector.load %arg3[%c0_56, %c4_57, %c0_58] : memref<2x8x128xf32, #tpu.memory_space<vmem>>, vector<2x1x128xf32>
    %168 = vector.shape_cast %167 : vector<2x1x128xf32> to vector<2x128xf32>
    %169 = vector.shape_cast %166 : vector<2x128xf32> to vector<2x1x128xf32>
    tpu.vector_store %arg3[%c0_56, %c4_57, %c0_58], %169 {strides = array<i32>} : memref<2x8x128xf32, #tpu.memory_space<vmem>>, vector<2x1x128xf32>,
    %c0_59 = arith.constant 0 : index
    %c5 = arith.constant 5 : index
    %c0_60 = arith.constant 0 : index
    %170 = vector.load %arg1[%c0_59, %c5, %c0_60] : memref<2x8x512xf32, #tpu.memory_space<vmem>>, vector<2x1x512xf32>
    %171 = vector.shape_cast %170 : vector<2x1x512xf32> to vector<2x512xf32>
    %c0_61 = arith.constant 0 : index
    %c0_62 = arith.constant 0 : index
    %172 = vector.load %arg2[%c0_61, %c0_62] : memref<128x512xf32, #tpu.memory_space<vmem>>, vector<128x512xf32>
    %cst_63 = arith.constant dense<0.000000e+00> : vector<2x512xf32>
    %173 = tpu.matmul %166, %172, %cst_63 {dimension_numbers = #tpu.dot_dimension_numbers<[1], [0], [0], [1], [0, 0, 1, 1], [], []>} : vector<2x128xf32>, vector<128x512xf32>, vector<2x512xf32> -> vector<2x512xf32>
    %174 = arith.addf %171, %173 : vector<2x512xf32>
    %175 = vector.extract_strided_slice %174 {offsets = [0, 0], sizes = [2, 128], strides = [1, 1]} : vector<2x512xf32> to vector<2x128xf32>
    %176 = arith.negf %175 : vector<2x128xf32>
    %177 = math.exp %176 : vector<2x128xf32>
    %cst_64 = arith.constant 1.000000e+00 : f32
    %178 = vector.broadcast %cst_64 : f32 to vector<2x128xf32>
    %179 = arith.addf %178, %177 : vector<2x128xf32>
    %180 = arith.divf %178, %179 : vector<2x128xf32>
    %181 = vector.extract_strided_slice %174 {offsets = [0, 128], sizes = [2, 128], strides = [1, 1]} : vector<2x512xf32> to vector<2x128xf32>
    %182 = arith.negf %181 : vector<2x128xf32>
    %183 = math.exp %182 : vector<2x128xf32>
    %cst_65 = arith.constant 1.000000e+00 : f32
    %184 = vector.broadcast %cst_65 : f32 to vector<2x128xf32>
    %185 = arith.addf %184, %183 : vector<2x128xf32>
    %186 = arith.divf %184, %185 : vector<2x128xf32>
    %187 = vector.extract_strided_slice %174 {offsets = [0, 256], sizes = [2, 128], strides = [1, 1]} : vector<2x512xf32> to vector<2x128xf32>
    %188 = math.tanh %187 : vector<2x128xf32>
    %189 = vector.extract_strided_slice %174 {offsets = [0, 384], sizes = [2, 128], strides = [1, 1]} : vector<2x512xf32> to vector<2x128xf32>
    %190 = arith.negf %189 : vector<2x128xf32>
    %191 = math.exp %190 : vector<2x128xf32>
    %cst_66 = arith.constant 1.000000e+00 : f32
    %192 = vector.broadcast %cst_66 : f32 to vector<2x128xf32>
    %193 = arith.addf %192, %191 : vector<2x128xf32>
    %194 = arith.divf %192, %193 : vector<2x128xf32>
    %195 = arith.mulf %186, %164 : vector<2x128xf32>
    %196 = arith.mulf %180, %188 : vector<2x128xf32>
    %197 = arith.addf %195, %196 : vector<2x128xf32>
    %198 = math.tanh %197 : vector<2x128xf32>
    %199 = arith.mulf %194, %198 : vector<2x128xf32>
    %c0_67 = arith.constant 0 : index
    %c5_68 = arith.constant 5 : index
    %c0_69 = arith.constant 0 : index
    %200 = vector.load %arg3[%c0_67, %c5_68, %c0_69] : memref<2x8x128xf32, #tpu.memory_space<vmem>>, vector<2x1x128xf32>
    %201 = vector.shape_cast %200 : vector<2x1x128xf32> to vector<2x128xf32>
    %202 = vector.shape_cast %199 : vector<2x128xf32> to vector<2x1x128xf32>
    tpu.vector_store %arg3[%c0_67, %c5_68, %c0_69], %202 {strides = array<i32>} : memref<2x8x128xf32, #tpu.memory_space<vmem>>, vector<2x1x128xf32>,
    %c0_70 = arith.constant 0 : index
    %c6 = arith.constant 6 : index
    %c0_71 = arith.constant 0 : index
    %203 = vector.load %arg1[%c0_70, %c6, %c0_71] : memref<2x8x512xf32, #tpu.memory_space<vmem>>, vector<2x1x512xf32>
    %204 = vector.shape_cast %203 : vector<2x1x512xf32> to vector<2x512xf32>
    %c0_72 = arith.constant 0 : index
    %c0_73 = arith.constant 0 : index
    %205 = vector.load %arg2[%c0_72, %c0_73] : memref<128x512xf32, #tpu.memory_space<vmem>>, vector<128x512xf32>
    %cst_74 = arith.constant dense<0.000000e+00> : vector<2x512xf32>
    %206 = tpu.matmul %199, %205, %cst_74 {dimension_numbers = #tpu.dot_dimension_numbers<[1], [0], [0], [1], [0, 0, 1, 1], [], []>} : vector<2x128xf32>, vector<128x512xf32>, vector<2x512xf32> -> vector<2x512xf32>
    %207 = arith.addf %204, %206 : vector<2x512xf32>
    %208 = vector.extract_strided_slice %207 {offsets = [0, 0], sizes = [2, 128], strides = [1, 1]} : vector<2x512xf32> to vector<2x128xf32>
    %209 = arith.negf %208 : vector<2x128xf32>
    %210 = math.exp %209 : vector<2x128xf32>
    %cst_75 = arith.constant 1.000000e+00 : f32
    %211 = vector.broadcast %cst_75 : f32 to vector<2x128xf32>
    %212 = arith.addf %211, %210 : vector<2x128xf32>
    %213 = arith.divf %211, %212 : vector<2x128xf32>
    %214 = vector.extract_strided_slice %207 {offsets = [0, 128], sizes = [2, 128], strides = [1, 1]} : vector<2x512xf32> to vector<2x128xf32>
    %215 = arith.negf %214 : vector<2x128xf32>
    %216 = math.exp %215 : vector<2x128xf32>
    %cst_76 = arith.constant 1.000000e+00 : f32
    %217 = vector.broadcast %cst_76 : f32 to vector<2x128xf32>
    %218 = arith.addf %217, %216 : vector<2x128xf32>
    %219 = arith.divf %217, %218 : vector<2x128xf32>
    %220 = vector.extract_strided_slice %207 {offsets = [0, 256], sizes = [2, 128], strides = [1, 1]} : vector<2x512xf32> to vector<2x128xf32>
    %221 = math.tanh %220 : vector<2x128xf32>
    %222 = vector.extract_strided_slice %207 {offsets = [0, 384], sizes = [2, 128], strides = [1, 1]} : vector<2x512xf32> to vector<2x128xf32>
    %223 = arith.negf %222 : vector<2x128xf32>
    %224 = math.exp %223 : vector<2x128xf32>
    %cst_77 = arith.constant 1.000000e+00 : f32
    %225 = vector.broadcast %cst_77 : f32 to vector<2x128xf32>
    %226 = arith.addf %225, %224 : vector<2x128xf32>
    %227 = arith.divf %225, %226 : vector<2x128xf32>
    %228 = arith.mulf %219, %197 : vector<2x128xf32>
    %229 = arith.mulf %213, %221 : vector<2x128xf32>
    %230 = arith.addf %228, %229 : vector<2x128xf32>
    %231 = math.tanh %230 : vector<2x128xf32>
    %232 = arith.mulf %227, %231 : vector<2x128xf32>
    %c0_78 = arith.constant 0 : index
    %c6_79 = arith.constant 6 : index
    %c0_80 = arith.constant 0 : index
    %233 = vector.load %arg3[%c0_78, %c6_79, %c0_80] : memref<2x8x128xf32, #tpu.memory_space<vmem>>, vector<2x1x128xf32>
    %234 = vector.shape_cast %233 : vector<2x1x128xf32> to vector<2x128xf32>
    %235 = vector.shape_cast %232 : vector<2x128xf32> to vector<2x1x128xf32>
    tpu.vector_store %arg3[%c0_78, %c6_79, %c0_80], %235 {strides = array<i32>} : memref<2x8x128xf32, #tpu.memory_space<vmem>>, vector<2x1x128xf32>,
    %c0_81 = arith.constant 0 : index
    %c7 = arith.constant 7 : index
    %c0_82 = arith.constant 0 : index
    %236 = vector.load %arg1[%c0_81, %c7, %c0_82] : memref<2x8x512xf32, #tpu.memory_space<vmem>>, vector<2x1x512xf32>
    %237 = vector.shape_cast %236 : vector<2x1x512xf32> to vector<2x512xf32>
    %c0_83 = arith.constant 0 : index
    %c0_84 = arith.constant 0 : index
    %238 = vector.load %arg2[%c0_83, %c0_84] : memref<128x512xf32, #tpu.memory_space<vmem>>, vector<128x512xf32>
    %cst_85 = arith.constant dense<0.000000e+00> : vector<2x512xf32>
    %239 = tpu.matmul %232, %238, %cst_85 {dimension_numbers = #tpu.dot_dimension_numbers<[1], [0], [0], [1], [0, 0, 1, 1], [], []>} : vector<2x128xf32>, vector<128x512xf32>, vector<2x512xf32> -> vector<2x512xf32>
    %240 = arith.addf %237, %239 : vector<2x512xf32>
    %241 = vector.extract_strided_slice %240 {offsets = [0, 0], sizes = [2, 128], strides = [1, 1]} : vector<2x512xf32> to vector<2x128xf32>
    %242 = arith.negf %241 : vector<2x128xf32>
    %243 = math.exp %242 : vector<2x128xf32>
    %cst_86 = arith.constant 1.000000e+00 : f32
    %244 = vector.broadcast %cst_86 : f32 to vector<2x128xf32>
    %245 = arith.addf %244, %243 : vector<2x128xf32>
    %246 = arith.divf %244, %245 : vector<2x128xf32>
    %247 = vector.extract_strided_slice %240 {offsets = [0, 128], sizes = [2, 128], strides = [1, 1]} : vector<2x512xf32> to vector<2x128xf32>
    %248 = arith.negf %247 : vector<2x128xf32>
    %249 = math.exp %248 : vector<2x128xf32>
    %cst_87 = arith.constant 1.000000e+00 : f32
    %250 = vector.broadcast %cst_87 : f32 to vector<2x128xf32>
    %251 = arith.addf %250, %249 : vector<2x128xf32>
    %252 = arith.divf %250, %251 : vector<2x128xf32>
    %253 = vector.extract_strided_slice %240 {offsets = [0, 256], sizes = [2, 128], strides = [1, 1]} : vector<2x512xf32> to vector<2x128xf32>
    %254 = math.tanh %253 : vector<2x128xf32>
    %255 = vector.extract_strided_slice %240 {offsets = [0, 384], sizes = [2, 128], strides = [1, 1]} : vector<2x512xf32> to vector<2x128xf32>
    %256 = arith.negf %255 : vector<2x128xf32>
    %257 = math.exp %256 : vector<2x128xf32>
    %cst_88 = arith.constant 1.000000e+00 : f32
    %258 = vector.broadcast %cst_88 : f32 to vector<2x128xf32>
    %259 = arith.addf %258, %257 : vector<2x128xf32>
    %260 = arith.divf %258, %259 : vector<2x128xf32>
    %261 = arith.mulf %252, %230 : vector<2x128xf32>
    %262 = arith.mulf %246, %254 : vector<2x128xf32>
    %263 = arith.addf %261, %262 : vector<2x128xf32>
    %264 = math.tanh %263 : vector<2x128xf32>
    %265 = arith.mulf %260, %264 : vector<2x128xf32>
    %c0_89 = arith.constant 0 : index
    %c7_90 = arith.constant 7 : index
    %c0_91 = arith.constant 0 : index
    %266 = vector.load %arg3[%c0_89, %c7_90, %c0_91] : memref<2x8x128xf32, #tpu.memory_space<vmem>>, vector<2x1x128xf32>
    %267 = vector.shape_cast %266 : vector<2x1x128xf32> to vector<2x128xf32>
    %268 = vector.shape_cast %265 : vector<2x128xf32> to vector<2x1x128xf32>
    tpu.vector_store %arg3[%c0_89, %c7_90, %c0_91], %268 {strides = array<i32>} : memref<2x8x128xf32, #tpu.memory_space<vmem>>, vector<2x1x128xf32>,
    %c0_92 = arith.constant 0 : index
    %c0_93 = arith.constant 0 : index
    %269 = vector.load %arg4[%c0_92, %c0_93] : memref<2x128xf32, #tpu.memory_space<vmem>>, vector<2x128xf32>
    tpu.vector_store %arg4[%c0_92, %c0_93], %265 {strides = array<i32>} : memref<2x128xf32, #tpu.memory_space<vmem>>, vector<2x128xf32>,
    %c0_94 = arith.constant 0 : index
    %c0_95 = arith.constant 0 : index
    %270 = vector.load %arg5[%c0_94, %c0_95] : memref<2x128xf32, #tpu.memory_space<vmem>>, vector<2x128xf32>
    tpu.vector_store %arg5[%c0_94, %c0_95], %263 {strides = array<i32>} : memref<2x128xf32, #tpu.memory_space<vmem>>, vector<2x128xf32>,
    return
  }
  func.func @transform_0(%arg0: i32) -> (i32, i32, i32) {
    %c0_i32 = arith.constant 0 : i32
    %c0_i32_0 = arith.constant 0 : i32
    %c0_i32_1 = arith.constant 0 : i32
    return %c0_i32, %arg0, %c0_i32_0 : i32, i32, i32
  }
  func.func @transform_1(%arg0: i32) -> (i32, i32) {
    %c0_i32 = arith.constant 0 : i32
    %c0_i32_0 = arith.constant 0 : i32
    %c0_i32_1 = arith.constant 0 : i32
    return %c0_i32, %c0_i32_0 : i32, i32
  }
  func.func @transform_2(%arg0: i32) -> (i32, i32, i32) {
    %c0_i32 = arith.constant 0 : i32
    %c0_i32_0 = arith.constant 0 : i32
    %c0_i32_1 = arith.constant 0 : i32
    return %c0_i32, %arg0, %c0_i32_0 : i32, i32, i32
  }
}

module attributes {stable_mosaic.version = 11 : i64} {
  func.func @_matmul_kernel(%arg0: i32, %arg1: i32, %arg2: i32, %arg3: memref<16x128xbf16, #tpu.memory_space<vmem>>, %arg4: memref<128x128xbf16, #tpu.memory_space<vmem>>, %arg5: memref<1x128xf32, #tpu.memory_space<vmem>>, %arg6: memref<16x128xf32, #tpu.memory_space<vmem>>, %arg7: memref<16x128xf32, #tpu.memory_space<vmem>>) attributes {dimension_semantics = [#tpu.dimension_semantics<parallel>, #tpu.dimension_semantics<parallel>, #tpu.dimension_semantics<arbitrary>], iteration_bounds = array<i64: 1, 1, 1>, scalar_prefetch = 0 : i64, scratch_operands = 1 : i64, tpu.core_type = #tpu.core_type<tc>, window_params = [{transform_indices = @transform_0, window_bounds = array<i64: 16, 128>}, {transform_indices = @transform_1, window_bounds = array<i64: 128, 128>}, {transform_indices = @transform_2, window_bounds = array<i64: 1, 128>}, {transform_indices = @transform_3, window_bounds = array<i64: 16, 128>}]} {
    %c0_i32 = arith.constant 0 : i32
    %0 = arith.cmpi eq, %arg2, %c0_i32 : i32
    %1 = arith.extui %0 : i1 to i32
    %c0_i32_0 = arith.constant 0 : i32
    %2 = arith.cmpi ne, %1, %c0_i32_0 : i32
    scf.if %2 {
      %cst_10 = arith.constant 0.000000e+00 : f32
      %12 = vector.broadcast %cst_10 : f32 to vector<16x128xf32>
      %c0_11 = arith.constant 0 : index
      %c0_12 = arith.constant 0 : index
      %13 = vector.load %arg7[%c0_11, %c0_12] : memref<16x128xf32, #tpu.memory_space<vmem>>, vector<16x128xf32>
      tpu.vector_store %arg7[%c0_11, %c0_12], %12 {strides = array<i32>} : memref<16x128xf32, #tpu.memory_space<vmem>>, vector<16x128xf32>,
    } else {
    }
    %c0 = arith.constant 0 : index
    %c0_1 = arith.constant 0 : index
    %3 = vector.load %arg7[%c0, %c0_1] : memref<16x128xf32, #tpu.memory_space<vmem>>, vector<16x128xf32>
    %c0_2 = arith.constant 0 : index
    %c0_3 = arith.constant 0 : index
    %4 = vector.load %arg3[%c0_2, %c0_3] : memref<16x128xbf16, #tpu.memory_space<vmem>>, vector<16x128xbf16>
    %c0_4 = arith.constant 0 : index
    %c0_5 = arith.constant 0 : index
    %5 = vector.load %arg4[%c0_4, %c0_5] : memref<128x128xbf16, #tpu.memory_space<vmem>>, vector<128x128xbf16>
    %cst = arith.constant dense<0.000000e+00> : vector<16x128xf32>
    %6 = tpu.matmul %4, %5, %cst {dimension_numbers = #tpu.dot_dimension_numbers<[1], [0], [0], [1], [0, 0, 1, 1], [], []>} : vector<16x128xbf16>, vector<128x128xbf16>, vector<16x128xf32> -> vector<16x128xf32>
    %7 = arith.addf %3, %6 : vector<16x128xf32>
    %c0_6 = arith.constant 0 : index
    %c0_7 = arith.constant 0 : index
    %8 = vector.load %arg7[%c0_6, %c0_7] : memref<16x128xf32, #tpu.memory_space<vmem>>, vector<16x128xf32>
    tpu.vector_store %arg7[%c0_6, %c0_7], %7 {strides = array<i32>} : memref<16x128xf32, #tpu.memory_space<vmem>>, vector<16x128xf32>,
    %c0_i32_8 = arith.constant 0 : i32
    %9 = arith.cmpi eq, %arg2, %c0_i32_8 : i32
    %10 = arith.extui %9 : i1 to i32
    %c0_i32_9 = arith.constant 0 : i32
    %11 = arith.cmpi ne, %10, %c0_i32_9 : i32
    scf.if %11 {
      %c0_10 = arith.constant 0 : index
      %c0_11 = arith.constant 0 : index
      %12 = vector.load %arg7[%c0_10, %c0_11] : memref<16x128xf32, #tpu.memory_space<vmem>>, vector<16x128xf32>
      %c0_12 = arith.constant 0 : index
      %c0_13 = arith.constant 0 : index
      %13 = vector.load %arg5[%c0_12, %c0_13] : memref<1x128xf32, #tpu.memory_space<vmem>>, vector<1x128xf32>
      %14 = vector.broadcast %13 : vector<1x128xf32> to vector<16x128xf32>
      %15 = arith.addf %12, %14 : vector<16x128xf32>
      %c0_14 = arith.constant 0 : index
      %c0_15 = arith.constant 0 : index
      %16 = vector.load %arg6[%c0_14, %c0_15] : memref<16x128xf32, #tpu.memory_space<vmem>>, vector<16x128xf32>
      tpu.vector_store %arg6[%c0_14, %c0_15], %15 {strides = array<i32>} : memref<16x128xf32, #tpu.memory_space<vmem>>, vector<16x128xf32>,
    } else {
    }
    return
  }
  func.func @transform_0(%arg0: i32, %arg1: i32, %arg2: i32) -> (i32, i32) {
    %c0_i32 = arith.constant 0 : i32
    return %arg0, %arg2 : i32, i32
  }
  func.func @transform_1(%arg0: i32, %arg1: i32, %arg2: i32) -> (i32, i32) {
    %c0_i32 = arith.constant 0 : i32
    return %arg2, %arg1 : i32, i32
  }
  func.func @transform_2(%arg0: i32, %arg1: i32, %arg2: i32) -> (i32, i32) {
    %c0_i32 = arith.constant 0 : i32
    %c0_i32_0 = arith.constant 0 : i32
    return %c0_i32, %arg1 : i32, i32
  }
  func.func @transform_3(%arg0: i32, %arg1: i32, %arg2: i32) -> (i32, i32) {
    %c0_i32 = arith.constant 0 : i32
    return %arg0, %arg1 : i32, i32
  }
}

</mosaic_0001>

<llo_original>
// kernel: scst_forward.5
$region0: #{scst_forward.5}
  #allocation0 [shape = 'u32[]', space=smem, size = 0x4, offset = 0x4, fixed_abs, tag = 'smem constant byte address 0x4 - core index']
  #allocation1 [shape = 'u32[144,128]{1,0:T(1,128)}', space=vmem, size = 0x12000, scoped, tag = 'internal scratch']
  #allocation2 [shape = 'f32[16,128]{1,0:T(8,128)}', space=vmem, size = 0x2000, scoped, tag = 'scratch operand']
  %s0 = inlined_call_operand.vmem [shape: bf16[16,128], index: 0, kind: input, shape index: {}]
  %s1 = inlined_call_operand.vmem [shape: bf16[128,128], index: 1, kind: input, shape index: {}]
  %s2 = inlined_call_operand.vmem [shape: f32[1,128], index: 2, kind: input, shape index: {}]
  %s3 = inlined_call_operand.vmem [shape: f32[16,128], index: 3, kind: output, shape index: {}]
  %s4 = sld [smem:[#allocation0]]
  $region30: #{scst_forward.5} parent=0
    _
  %s6 = ssub.s32 1, %s4
  %s7 = scalar_select 0, %s6, %s4
  // Predicated region
  $region2: #{scst_forward.5} parent=0 // pred_check
    _
  $region3: #{scst_forward.5} parent=0 // pred_check_branch
    %9 = sbr.rel (0) target = $region5
  $region4: #{scst_forward.5} parent=0 // pred_region
    _
  $region5: #{scst_forward.5} parent=0 // pred_fallthru
    _
  // Predicated region
  $region6: #{scst_forward.5} parent=0 // pred_check
    _
  $region7: #{scst_forward.5} parent=0 // pred_check_branch
    %11 = sbr.rel (0) target = $region9
  $region8: #{scst_forward.5} parent=0 // pred_region
    _
  $region9: #{scst_forward.5} parent=0 // pred_fallthru
    _
  // Predicated region
  $region10: #{scst_forward.5} parent=0 // pred_check
    _
  $region11: #{scst_forward.5} parent=0 // pred_check_branch
    %13 = sbr.rel (0) target = $region13
  $region12: #{scst_forward.5} parent=0 // pred_region
    _
  $region13: #{scst_forward.5} parent=0 // pred_fallthru
    _
  %p15 = scmp.eq.s32.totalorder 0, 0
  // Predicated region
  $region14: #{scst_forward.5} parent=0 // pred_check
    %p16 = pneg %p15
  $region15: #{scst_forward.5} parent=0 // pred_check_branch
    %18 = sbr.rel (%p16) target = $region17
  $region16: #{scst_forward.5} parent=0 // pred_region
    %19 = vst [vmem:[#allocation2] sm:$0xff] 0.0
    %20 = vst [vmem:[#allocation2 + $0x8] sm:$0xff] 0.0
  $region17: #{scst_forward.5} parent=0 // pred_fallthru
    _
  %v21 = vld [vmem:[#allocation2] sm:$0xff]
  %v22 = vld [vmem:[#allocation2 + $0x8] sm:$0xff]
  %v23 = vld [vmem:[%s0] sm:$0xf]
  %v24 = vld [vmem:[%s0 + $0x4] sm:$0xf]
  %v25 = vld [vmem:[%s1] sm:$0xf]
  %v26 = vld [vmem:[%s1 + $0x4] sm:$0xf]
  %v27 = vld [vmem:[%s1 + $0x8] sm:$0xf]
  %v28 = vld [vmem:[%s1 + $0xc] sm:$0xf]
  %v29 = vld [vmem:[%s1 + $0x10] sm:$0xf]
  %v30 = vld [vmem:[%s1 + $0x14] sm:$0xf]
  %v31 = vld [vmem:[%s1 + $0x18] sm:$0xf]
  %v32 = vld [vmem:[%s1 + $0x1c] sm:$0xf]
  %v33 = vld [vmem:[%s1 + $0x20] sm:$0xf]
  %v34 = vld [vmem:[%s1 + $0x24] sm:$0xf]
  %v35 = vld [vmem:[%s1 + $0x28] sm:$0xf]
  %v36 = vld [vmem:[%s1 + $0x2c] sm:$0xf]
  %v37 = vld [vmem:[%s1 + $0x30] sm:$0xf]
  %v38 = vld [vmem:[%s1 + $0x34] sm:$0xf]
  %v39 = vld [vmem:[%s1 + $0x38] sm:$0xf]
  %v40 = vld [vmem:[%s1 + $0x3c] sm:$0xf]
  %v43 = vunpack.c.l.b16 %v23
  %v44 = vunpack.c.l.b16 %v24
  %v45 = vpack.c.b16 %v44, %v43
  %v63 = vunpack.c.l.b16 %v25
  %v64 = vunpack.c.l.b16 %v26
  %v65 = vunpack.c.l.b16 %v27
  %v66 = vunpack.c.l.b16 %v28
  %v67 = vunpack.c.l.b16 %v29
  %v68 = vunpack.c.l.b16 %v30
  %v69 = vunpack.c.l.b16 %v31
  %v70 = vunpack.c.l.b16 %v32
  %v71 = vunpack.c.l.b16 %v33
  %v72 = vunpack.c.l.b16 %v34
  %v73 = vunpack.c.l.b16 %v35
  %v74 = vunpack.c.l.b16 %v36
  %v75 = vunpack.c.l.b16 %v37
  %v76 = vunpack.c.l.b16 %v38
  %v77 = vunpack.c.l.b16 %v39
  %v78 = vunpack.c.l.b16 %v40
  %v79 = vpack.c.b16 %v64, %v63
  %v80 = vpack.c.b16 %v66, %v65
  %v81 = vpack.c.b16 %v68, %v67
  %v82 = vpack.c.b16 %v70, %v69
  %v83 = vpack.c.b16 %v72, %v71
  %v84 = vpack.c.b16 %v74, %v73
  %v85 = vpack.c.b16 %v76, %v75
  %v86 = vpack.c.b16 %v78, %v77
  %95 = vmatprep.subr.bf16.mxu0 0
  %96 = vmatpush1.bf16.msra.mxu0 %v79
  %97 = vmatprep.subr.bf16.mxu0 0
  %98 = vmatpush1.bf16.msra.mxu0 %v80
  %99 = vmatprep.subr.bf16.mxu0 0
  %100 = vmatpush1.bf16.msra.mxu0 %v81
  %101 = vmatprep.subr.bf16.mxu0 0
  %102 = vmatpush1.bf16.msra.mxu0 %v82
  %103 = vmatprep.subr.bf16.mxu0 0
  %104 = vmatpush1.bf16.msra.mxu0 %v83
  %105 = vmatprep.subr.bf16.mxu0 0
  %106 = vmatpush1.bf16.msra.mxu0 %v84
  %107 = vmatprep.subr.bf16.mxu0 0
  %108 = vmatpush1.bf16.msra.mxu0 %v85
  %109 = vmatprep.subr.bf16.mxu0 0
  %110 = vmatpush1.bf16.msra.mxu0 %v86
  %111 = vmatprep.subr.bf16.mxu0 0
  %112 = vmatpush1.bf16.msra.mxu0 0
  %113 = vmatprep.subr.bf16.mxu0 0
  %114 = vmatpush1.bf16.msra.mxu0 0
  %115 = vmatprep.subr.bf16.mxu0 0
  %116 = vmatpush1.bf16.msra.mxu0 0
  %117 = vmatprep.subr.bf16.mxu0 0
  %118 = vmatpush1.bf16.msra.mxu0 0
  %119 = vmatprep.subr.bf16.mxu0 0
  %120 = vmatpush1.bf16.msra.mxu0 0
  %121 = vmatprep.subr.bf16.mxu0 0
  %122 = vmatpush1.bf16.msra.mxu0 0
  %123 = vmatprep.subr.bf16.mxu0 0
  %124 = vmatpush1.bf16.msra.mxu0 0
  %125 = vmatprep.subr.bf16.mxu0 0
  %126 = vmatpush1.bf16.msra.mxu0 0
  %127 = vmatprep.mubr.bf16.mxu0 0
  %128 = vmatmul.mubr.bf16.gmra.mrb[0].mxu0 %v45
  %v129 = vpop.f32.mrb[0].mxu0
  %v130 = vadd.f32 0.0, %v129
  %v131 = vpop.f32.mrb[0].mxu0
  %v132 = vpop.f32.mrb[0].mxu0
  %v133 = vadd.f32 0.0, %v132
  %v134 = vpop.f32.mrb[0].mxu0
  %135 = vdwg.mxu0
  %v136 = vadd.f32 %v21, %v130
  %v137 = vadd.f32 %v22, %v133
  %138 = vst [vmem:[#allocation2] sm:$0xff] %v136
  %139 = vst [vmem:[#allocation2 + $0x8] sm:$0xff] %v137
  // Predicated region
  $region18: #{scst_forward.5} parent=0 // pred_check
    %p140 = pneg %p15
  $region19: #{scst_forward.5} parent=0 // pred_check_branch
    %142 = sbr.rel (%p140) target = $region21
  $region20: #{scst_forward.5} parent=0 // pred_region
    %v143 = vld [vmem:[#allocation2] sm:$0xff]
    %v144 = vld [vmem:[#allocation2 + $0x8] sm:$0xff]
    %v145 = vld [vmem:[%s2] sm:$0x1]
    %v147 = vlaneseq
    %v148 = vshrl.u32 %v147, 7
    %v149 = vsub.s32 0, %v148
    %v150 = vrot.slane %v145, %v149
    %v152 = vadd.f32 %v143, %v150
    %v153 = vadd.f32 %v144, %v150
    %154 = vst [vmem:[%s3] sm:$0xff] %v152
    %155 = vst [vmem:[%s3 + $0x8] sm:$0xff] %v153
  $region21: #{scst_forward.5} parent=0 // pred_fallthru
    _
  // Predicated region
  $region22: #{scst_forward.5} parent=0 // pred_check
    _
  $region23: #{scst_forward.5} parent=0 // pred_check_branch
    %157 = sbr.rel (0) target = $region25
  $region24: #{scst_forward.5} parent=0 // pred_region
    _
  $region25: #{scst_forward.5} parent=0 // pred_fallthru
    _
  // Predicated region
  $region26: #{scst_forward.5} parent=0 // pred_check
    _
  $region27: #{scst_forward.5} parent=0 // pred_check_branch
    %159 = sbr.rel (0) target = $region29
  $region28: #{scst_forward.5} parent=0 // pred_region
    _
  $region29: #{scst_forward.5} parent=0 // pred_fallthru
    _

// kernel: scst_forward.3
$region0: #{scst_forward.3}
  #allocation0 [shape = 'u32[]', space=smem, size = 0x4, offset = 0x4, fixed_abs, tag = 'smem constant byte address 0x4 - core index']
  #allocation1 [shape = 'u32[144,128]{1,0:T(1,128)}', space=vmem, size = 0x12000, scoped, tag = 'internal scratch']
  %s0 = inlined_call_operand.vmem [shape: bf16[2,8,128], index: 0, kind: input, shape index: {}]
  %s1 = inlined_call_operand.vmem [shape: f32[2,4,256], index: 1, kind: input, shape index: {}]
  %s2 = inlined_call_operand.hbm [shape: bf16[128,512], index: 2, kind: input, shape index: {}]
  %s3 = inlined_call_operand.hbm [shape: f32[4,512], index: 3, kind: input, shape index: {}]
  %s4 = inlined_call_operand.hbm [shape: f32[1,512], index: 4, kind: input, shape index: {}]
  %s5 = inlined_call_operand.vmem [shape: f32[2,8,512], index: 5, kind: output, shape index: {}]
  %s6 = sld [smem:[#allocation0]]
  $region65: #{scst_forward.3} parent=0
    _
  %s8 = ssub.s32 1, %s6
  %s9 = scalar_select 0, %s8, %s6
  $region1: #{scst_forward.3} parent=0
    #allocation2 [shape = 'u8[131072]{0}', space=vmem, size = 0x20000, scoped, tag = 'input window, operand 2, single buffered']
    #allocation3 [shape = 's32[2]{0}', space=sflag, size = 0x8, scoped, tag = 'scoped memory for scst_forward.3']
    #allocation4 [shape = 'u8[8192]{0}', space=vmem, size = 0x2000, scoped, tag = 'input window, operand 3, single buffered']
    #allocation5 [shape = 's32[1]{0}', space=sflag, size = 0x4, scoped, tag = 'scoped memory for scst_forward.3']
    #allocation6 [shape = 'u8[2048]{0}', space=vmem, size = 0x800, scoped, tag = 'input window, operand 4, single buffered']
    %10 = vsyncpa [#allocation3], 0
    %11 = vsyncpa [#allocation5], 0
    loop: start=0, step=1, limit=4
    $region2: #{scst_forward.3} parent=1 // loop_pre_header
      _
    $region3: #{scst_forward.3} parent=1 // loop_header
      %s13 = sphi 0, %s17
      %p14 = scmp.ge.s32.totalorder %s13, 4
      %s20 = sphi 0, %s32
      %s21 = sphi 0, %s28
      %s22 = sphi 0, %s20
      %s23 = sphi 0, %s21
      %s24 = sphi 0, %s22
      %s25 = sphi 0, %s23
      %s37 = sphi 0, %s39
      %s40 = sphi 0, %s37
      %s41 = sphi 0, %s40
      %s57 = sphi 0, %s41
      %s63 = sphi 0, %s65
      %s66 = sphi 0, %s63
      %s67 = sphi 0, %s66
      %s83 = sphi 0, %s67
      %s87 = sphi 0, %s87
      %s89 = sphi 0, %s87
      %s90 = sphi 0, %s89
      %s104 = sphi 0, %s90
      %s108 = sphi 0, %s108
      %s110 = sphi 0, %s108
      %s111 = sphi 0, %s110
      %s125 = sphi 0, %s111
      %s129 = sphi 0, %s129
      %s131 = sphi 0, %s129
      %s132 = sphi 0, %s131
      %s146 = sphi 0, %s132
      %s154 = sphi 0, %s156
      %s157 = sphi 0, %s154
      %s158 = sphi 0, %s157
      %s174 = sphi 0, %s158
    $region4: #{scst_forward.3} parent=1 // loop_header_branch
      %16 = sbr.rel (%p14) target = $region8
    $region5: #{scst_forward.3} parent=1 // loop_body
      %s18 = ssub.s32 %s13, 1
      %s19 = ssub.s32 %s13, 2
      %s26 = sadd.s32 1, %s21
      %p27 = scmp.ge.s32.totalorder %s26, 1
      %s28 = scalar_select %p27, 0, %s26
      %s29 = sadd.s32 1, %s20
      %s30 = scalar_select %p27, %s29, %s20
      %p31 = scmp.ge.s32.totalorder %s30, 2
      %s32 = scalar_select %p31, 0, %s30
      %s33 = ssub.s32 %s20, %s32
      %s34 = ssub.s32 %s21, %s28
      %s35 = sor.u32 %s33, %s34
      %p36 = scmp.eq.s32.totalorder %s35, 0
      %s38 = sadd.s32 %s37, 1
      %s39 = scalar_select %p36, %s37, %s38
      %p42 = pneg %p36
      %p43 = scmp.eq.s32.totalorder %s13, 1
      %p44 = por %p42, %p43
      %p45 = scmp.ne.s32.totalorder %s37, %s40
      %p46 = scmp.eq.s32.totalorder %s13, 0
      %p47 = por %p45, %p46
      %p48 = scmp.ne.s32.totalorder %s37, %s40
      %p49 = scmp.eq.s32.totalorder %s18, 1
      %p50 = por %p48, %p49
      %p51 = scmp.ne.s32.totalorder %s40, %s41
      %p52 = scmp.eq.s32.totalorder %s18, 0
      %p53 = por %p51, %p52
      %p54 = scmp.ne.s32.totalorder %s40, %s41
      %p55 = scmp.eq.s32.totalorder %s19, 1
      %p56 = por %p54, %p55
      %p58 = scmp.ne.s32.totalorder %s41, %s57
      %p59 = scmp.eq.s32.totalorder %s19, 0
      %p60 = por %p58, %p59
      %s61 = ssub.s32 %s20, %s32
      %p62 = scmp.eq.s32.totalorder %s61, 0
      %s64 = sadd.s32 %s63, 1
      %s65 = scalar_select %p62, %s63, %s64
      %p68 = pneg %p62
      %p69 = scmp.eq.s32.totalorder %s13, 1
      %p70 = por %p68, %p69
      %p71 = scmp.ne.s32.totalorder %s63, %s66
      %p72 = scmp.eq.s32.totalorder %s13, 0
      %p73 = por %p71, %p72
      %p74 = scmp.ne.s32.totalorder %s63, %s66
      %p75 = scmp.eq.s32.totalorder %s18, 1
      %p76 = por %p74, %p75
      %p77 = scmp.ne.s32.totalorder %s66, %s67
      %p78 = scmp.eq.s32.totalorder %s18, 0
      %p79 = por %p77, %p78
      %p80 = scmp.ne.s32.totalorder %s66, %s67
      %p81 = scmp.eq.s32.totalorder %s19, 1
      %p82 = por %p80, %p81
      %p84 = scmp.ne.s32.totalorder %s67, %s83
      %p85 = scmp.eq.s32.totalorder %s19, 0
      %p86 = por %p84, %p85
      %s88 = sadd.s32 %s87, 1
      %p91 = scmp.eq.s32.totalorder %s13, 1
      %p92 = scmp.ne.s32.totalorder %s87, %s89
      %p93 = scmp.eq.s32.totalorder %s13, 0
      %p94 = por %p92, %p93
      %p95 = scmp.ne.s32.totalorder %s87, %s89
      %p96 = scmp.eq.s32.totalorder %s18, 1
      %p97 = por %p95, %p96
      %p98 = scmp.ne.s32.totalorder %s89, %s90
      %p99 = scmp.eq.s32.totalorder %s18, 0
      %p100 = por %p98, %p99
      %p101 = scmp.ne.s32.totalorder %s89, %s90
      %p102 = scmp.eq.s32.totalorder %s19, 1
      %p103 = por %p101, %p102
      %p105 = scmp.ne.s32.totalorder %s90, %s104
      %p106 = scmp.eq.s32.totalorder %s19, 0
      %p107 = por %p105, %p106
      %s109 = sadd.s32 %s108, 1
      %p112 = scmp.eq.s32.totalorder %s13, 1
      %p113 = scmp.ne.s32.totalorder %s108, %s110
      %p114 = scmp.eq.s32.totalorder %s13, 0
      %p115 = por %p113, %p114
      %p116 = scmp.ne.s32.totalorder %s108, %s110
      %p117 = scmp.eq.s32.totalorder %s18, 1
      %p118 = por %p116, %p117
      %p119 = scmp.ne.s32.totalorder %s110, %s111
      %p120 = scmp.eq.s32.totalorder %s18, 0
      %p121 = por %p119, %p120
      %p122 = scmp.ne.s32.totalorder %s110, %s111
      %p123 = scmp.eq.s32.totalorder %s19, 1
      %p124 = por %p122, %p123
      %p126 = scmp.ne.s32.totalorder %s111, %s125
      %p127 = scmp.eq.s32.totalorder %s19, 0
      %p128 = por %p126, %p127
      %s130 = sadd.s32 %s129, 1
      %p133 = scmp.eq.s32.totalorder %s13, 1
      %p134 = scmp.ne.s32.totalorder %s129, %s131
      %p135 = scmp.eq.s32.totalorder %s13, 0
      %p136 = por %p134, %p135
      %p137 = scmp.ne.s32.totalorder %s129, %s131
      %p138 = scmp.eq.s32.totalorder %s18, 1
      %p139 = por %p137, %p138
      %p140 = scmp.ne.s32.totalorder %s131, %s132
      %p141 = scmp.eq.s32.totalorder %s18, 0
      %p142 = por %p140, %p141
      %p143 = scmp.ne.s32.totalorder %s131, %s132
      %p144 = scmp.eq.s32.totalorder %s19, 1
      %p145 = por %p143, %p144
      %p147 = scmp.ne.s32.totalorder %s132, %s146
      %p148 = scmp.eq.s32.totalorder %s19, 0
      %p149 = por %p147, %p148
      %s150 = ssub.s32 %s20, %s32
      %s151 = ssub.s32 %s21, %s28
      %s152 = sor.u32 %s150, %s151
      %p153 = scmp.eq.s32.totalorder %s152, 0
      %s155 = sadd.s32 %s154, 1
      %s156 = scalar_select %p153, %s154, %s155
      %p159 = pneg %p153
      %p160 = scmp.eq.s32.totalorder %s13, 1
      %p161 = por %p159, %p160
      %p162 = scmp.ne.s32.totalorder %s154, %s157
      %p163 = scmp.eq.s32.totalorder %s13, 0
      %p164 = por %p162, %p163
      %p165 = scmp.ne.s32.totalorder %s154, %s157
      %p166 = scmp.eq.s32.totalorder %s18, 1
      %p167 = por %p165, %p166
      %p168 = scmp.ne.s32.totalorder %s157, %s158
      %p169 = scmp.eq.s32.totalorder %s18, 0
      %p170 = por %p168, %p169
      %p171 = scmp.ne.s32.totalorder %s157, %s158
      %p172 = scmp.eq.s32.totalorder %s19, 1
      %p173 = por %p171, %p172
      %p175 = scmp.ne.s32.totalorder %s158, %s174
      %p176 = scmp.eq.s32.totalorder %s19, 0
      %p177 = por %p175, %p176
      %p178 = scmp.le.s32.totalorder 1, %s13
      %p179 = scmp.lt.s32.totalorder %s13, 3
      %p180 = pnand %p178, %p179
      %p181 = pneg %p180
      // Predicated region
      $region9: #{scst_forward.3} parent=5 // pred_check
        _
      $region10: #{scst_forward.3} parent=5 // pred_check_branch
        %183 = sbr.rel (%p180) target = $region12
      $region11: #{scst_forward.3} parent=5 // pred_region
        %s184 = ssub.s32 %s13, 1
        // Predicated region
        $region13: #{scst_forward.3} parent=11 // pred_check
          %p185 = pneg %p100
        $region14: #{scst_forward.3} parent=11 // pred_check_branch
          %187 = sbr.rel (%p185) target = $region16
        $region15: #{scst_forward.3} parent=11 // pred_region
          %s189 = ssub.s32 4096, 4096
          %190 = vsyncadd [#allocation3], %s189
          %s191 = sshll.u32 [#allocation2], 4
          %s192 = int_to_ptr.vmem [resolvable:$true] %s191
          %197 = dma.hbm_to_vmem [thread:$0]  %s2, 4096, %s192, [#allocation3], 256, 256, 16
        $region16: #{scst_forward.3} parent=11 // pred_fallthru
          _
        // Predicated region
        $region17: #{scst_forward.3} parent=11 // pred_check
          %p198 = pneg %p121
        $region18: #{scst_forward.3} parent=11 // pred_check_branch
          %200 = sbr.rel (%p198) target = $region20
        $region19: #{scst_forward.3} parent=11 // pred_region
          %s202 = ssub.s32 256, 256
          %203 = vsyncadd [#allocation5], %s202
          %s205 = sshll.u32 [#allocation4], 4
          %s206 = int_to_ptr.vmem [resolvable:$true] %s205
          %208 = dma.hbm_to_vmem [thread:$0]  %s3, 256, %s206, [#allocation5]
        $region20: #{scst_forward.3} parent=11 // pred_fallthru
          _
        // Predicated region
        $region21: #{scst_forward.3} parent=11 // pred_check
          %p209 = pneg %p142
        $region22: #{scst_forward.3} parent=11 // pred_check_branch
          %211 = sbr.rel (%p209) target = $region24
        $region23: #{scst_forward.3} parent=11 // pred_region
          %s213 = ssub.s32 64, 64
          %214 = vsyncadd [#allocation5], %s213
          %s216 = sshll.u32 [#allocation6], 4
          %s217 = int_to_ptr.vmem [resolvable:$true] %s216
          %219 = dma.hbm_to_vmem [thread:$0]  %s4, 64, %s217, [#allocation5]
        $region24: #{scst_forward.3} parent=11 // pred_fallthru
          _
      $region12: #{scst_forward.3} parent=5 // pred_fallthru
        _
      %p220 = scmp.lt.s32.totalorder %s13, 2
      // Predicated region
      $region25: #{scst_forward.3} parent=5 // pred_check
        %p221 = pneg %p220
      $region26: #{scst_forward.3} parent=5 // pred_check_branch
        %223 = sbr.rel (%p221) target = $region28
      $region27: #{scst_forward.3} parent=5 // pred_region
        // Predicated region
        $region29: #{scst_forward.3} parent=27 // pred_check
          %p224 = pneg %p47
        $region30: #{scst_forward.3} parent=27 // pred_check_branch
          %226 = sbr.rel (%p224) target = $region32
        $region31: #{scst_forward.3} parent=27 // pred_region
          %p227 = scmp.lt.s32.totalorder %s20, 1
          %s228 = scalar_select %p227, %s20, 1
          %p229 = scmp.lt.s32.totalorder %s21, 0
          %s230 = scalar_select %p229, %s21, 0
          %s231 = sadd.s32 %s230, %s228
          %s232 = smul.addr %s231, 4
          %s233 = scalar_lea.vmem %s0, %s232
        $region32: #{scst_forward.3} parent=27 // pred_fallthru
          _
        // Predicated region
        $region33: #{scst_forward.3} parent=27 // pred_check
          %p234 = pneg %p73
        $region34: #{scst_forward.3} parent=27 // pred_check_branch
          %236 = sbr.rel (%p234) target = $region36
        $region35: #{scst_forward.3} parent=27 // pred_region
          %p237 = scmp.lt.s32.totalorder %s20, 1
          %s238 = scalar_select %p237, %s20, 1
          %s239 = smul.addr %s238, 2
          %s240 = smul.addr %s239, 4
          %s241 = scalar_lea.vmem %s1, %s240
        $region36: #{scst_forward.3} parent=27 // pred_fallthru
          _
      $region28: #{scst_forward.3} parent=5 // pred_fallthru
        _
      %p242 = scmp.le.s32.totalorder 1, %s13
      %p243 = scmp.lt.s32.totalorder %s13, 3
      %p244 = pnand %p242, %p243
      %p245 = pneg %p244
      // Predicated region
      $region37: #{scst_forward.3} parent=5 // pred_check
        _
      $region38: #{scst_forward.3} parent=5 // pred_check_branch
        %247 = sbr.rel (%p244) target = $region40
      $region39: #{scst_forward.3} parent=5 // pred_region
        %s248 = ssub.s32 %s13, 1
        // Predicated region
        $region41: #{scst_forward.3} parent=39 // pred_check
          %p249 = pneg %p100
        $region42: #{scst_forward.3} parent=39 // pred_check_branch
          %251 = sbr.rel (%p249) target = $region44
        $region43: #{scst_forward.3} parent=39 // pred_region
          %252 = dma.done [#allocation3], 4096
        $region44: #{scst_forward.3} parent=39 // pred_fallthru
          _
        // Predicated region
        $region45: #{scst_forward.3} parent=39 // pred_check
          %p253 = pneg %p121
        $region46: #{scst_forward.3} parent=39 // pred_check_branch
          %255 = sbr.rel (%p253) target = $region48
        $region47: #{scst_forward.3} parent=39 // pred_region
          %256 = dma.done [#allocation5], 256
        $region48: #{scst_forward.3} parent=39 // pred_fallthru
          _
        // Predicated region
        $region49: #{scst_forward.3} parent=39 // pred_check
          %p257 = pneg %p142
        $region50: #{scst_forward.3} parent=39 // pred_check_branch
          %259 = sbr.rel (%p257) target = $region52
        $region51: #{scst_forward.3} parent=39 // pred_region
          %260 = dma.done [#allocation5], 64
        $region52: #{scst_forward.3} parent=39 // pred_fallthru
          _
        %p261 = scmp.lt.s32.totalorder %s22, 1
        %s262 = scalar_select %p261, %s22, 1
        %p263 = scmp.lt.s32.totalorder %s23, 0
        %s264 = scalar_select %p263, %s23, 0
        %s265 = sadd.s32 %s264, %s262
        %s266 = smul.addr %s265, 4
        %s267 = scalar_lea.vmem %s0, %s266
        %p268 = pneg %p53
        %p269 = pneg %p50
        %p270 = scmp.lt.s32.totalorder %s22, 1
        %s271 = scalar_select %p270, %s22, 1
        %s272 = smul.addr %s271, 2
        %s273 = smul.addr %s272, 4
        %s274 = scalar_lea.vmem %s1, %s273
        %p275 = pneg %p79
        %p276 = pneg %p76
        %p277 = pneg %p100
        %p278 = pneg %p97
        %p279 = pneg %p121
        %p280 = pneg %p118
        %p281 = pneg %p142
        %p282 = pneg %p139
        %p283 = pneg %p170
        %p284 = pneg %p167
        %p285 = scmp.lt.s32.totalorder %s22, 1
        %s286 = scalar_select %p285, %s22, 1
        %p287 = scmp.lt.s32.totalorder %s23, 0
        %s288 = scalar_select %p287, %s23, 0
        %s289 = smul.addr %s288, 4
        %s290 = smul.addr %s286, 4
        %s291 = sadd.s32 %s289, %s290
        %s292 = smul.addr %s291, 8
        %s293 = scalar_lea.vmem %s5, %s292
        %p294 = scmp.lt.s32.totalorder %s22, 1
        %s295 = scalar_select %p294, %s22, 1
        %p296 = scmp.lt.s32.totalorder %s23, 0
        %s297 = scalar_select %p296, %s23, 0
        %s298 = sadd.s32 %s297, %s295
        %s299 = smul.addr %s298, 4
        %s300 = scalar_lea.vmem %s0, %s299
        %p301 = scmp.lt.s32.totalorder %s22, 1
        %s302 = scalar_select %p301, %s22, 1
        %s303 = smul.addr %s302, 2
        %s304 = smul.addr %s303, 4
        %s305 = scalar_lea.vmem %s1, %s304
        %p306 = scmp.lt.s32.totalorder %s22, 1
        %s307 = scalar_select %p306, %s22, 1
        %p308 = scmp.lt.s32.totalorder %s23, 0
        %s309 = scalar_select %p308, %s23, 0
        %s310 = smul.addr %s309, 4
        %s311 = smul.addr %s307, 4
        %s312 = sadd.s32 %s310, %s311
        %s313 = smul.addr %s312, 8
        %s314 = scalar_lea.vmem %s5, %s313
        %v316 = vld [vmem:[%s305] sm:$0xff]
        %v318 = vcombine.high %v316, %v316
        %vm320 = vcmask 1043456
        %v321 = vsel %vm320, %v316, 0.0
        %v322 = vsel %vm320, %v318, 0.0
        %v323 = vadd.f32 %v321, %v322
        %324 = vadd.xlane.f32.xlu0 %v323
        %v325 = vpop.xlane.xlu0 %324
        %v326 = vrcp.pop 256.0
        %v327 = vmul.f32 %v325, %v326
        %v328 = vld [vmem:[#allocation4] sm:$0xff]
        %v329 = vld [vmem:[#allocation4 + $0x8] sm:$0xff]
        %v332 = vcombine.high %v328, %v328
        %v333 = vcombine.high %v329, %v329
        %v336 = vmul.f32 %v327, %v328
        %v337 = vmul.f32 %v327, %v332
        %v338 = vmul.f32 %v327, %v329
        %v339 = vmul.f32 %v327, %v333
        %v340 = vsel %vm320, %v336, 0.0
        %v341 = vrot.slane %v340, 4
        %v342 = vadd.f32 %v340, %v341
        %v343 = vrot.slane %v342, 2
        %v344 = vadd.f32 %v342, %v343
        %v345 = vrot.slane %v344, 1
        %v346 = vadd.f32 %v344, %v345
        %v347 = vsel %vm320, %v337, 0.0
        %v348 = vrot.slane %v347, 4
        %v349 = vadd.f32 %v347, %v348
        %v350 = vrot.slane %v349, 2
        %v351 = vadd.f32 %v349, %v350
        %v352 = vrot.slane %v351, 1
        %v353 = vadd.f32 %v351, %v352
        %v354 = vsel %vm320, %v338, 0.0
        %v355 = vrot.slane %v354, 4
        %v356 = vadd.f32 %v354, %v355
        %v357 = vrot.slane %v356, 2
        %v358 = vadd.f32 %v356, %v357
        %v359 = vrot.slane %v358, 1
        %v360 = vadd.f32 %v358, %v359
        %v361 = vsel %vm320, %v339, 0.0
        %v362 = vrot.slane %v361, 4
        %v363 = vadd.f32 %v361, %v362
        %v364 = vrot.slane %v363, 2
        %v365 = vadd.f32 %v363, %v364
        %v366 = vrot.slane %v365, 1
        %v367 = vadd.f32 %v365, %v366
        %v368 = vld [vmem:[%s300] sm:$0xf]
        %v369 = vld [vmem:[#allocation2] sm:$0xff]
        %v370 = vld [vmem:[#allocation2 + $0x8] sm:$0xff]
        %v371 = vld [vmem:[#allocation2 + $0x10] sm:$0xff]
        %v372 = vld [vmem:[#allocation2 + $0x18] sm:$0xff]
        %v373 = vld [vmem:[#allocation2 + $0x20] sm:$0xff]
        %v374 = vld [vmem:[#allocation2 + $0x28] sm:$0xff]
        %v375 = vld [vmem:[#allocation2 + $0x30] sm:$0xff]
        %v376 = vld [vmem:[#allocation2 + $0x38] sm:$0xff]
        %v377 = vld [vmem:[#allocation2 + $0x40] sm:$0xff]
        %v378 = vld [vmem:[#allocation2 + $0x48] sm:$0xff]
        %v379 = vld [vmem:[#allocation2 + $0x50] sm:$0xff]
        %v380 = vld [vmem:[#allocation2 + $0x58] sm:$0xff]
        %v381 = vld [vmem:[#allocation2 + $0x60] sm:$0xff]
        %v382 = vld [vmem:[#allocation2 + $0x68] sm:$0xff]
        %v383 = vld [vmem:[#allocation2 + $0x70] sm:$0xff]
        %v384 = vld [vmem:[#allocation2 + $0x78] sm:$0xff]
        %v385 = vld [vmem:[#allocation2 + $0x80] sm:$0xff]
        %v386 = vld [vmem:[#allocation2 + $0x88] sm:$0xff]
        %v387 = vld [vmem:[#allocation2 + $0x90] sm:$0xff]
        %v388 = vld [vmem:[#allocation2 + $0x98] sm:$0xff]
        %v389 = vld [vmem:[#allocation2 + $0xa0] sm:$0xff]
        %v390 = vld [vmem:[#allocation2 + $0xa8] sm:$0xff]
        %v391 = vld [vmem:[#allocation2 + $0xb0] sm:$0xff]
        %v392 = vld [vmem:[#allocation2 + $0xb8] sm:$0xff]
        %v393 = vld [vmem:[#allocation2 + $0xc0] sm:$0xff]
        %v394 = vld [vmem:[#allocation2 + $0xc8] sm:$0xff]
        %v395 = vld [vmem:[#allocation2 + $0xd0] sm:$0xff]
        %v396 = vld [vmem:[#allocation2 + $0xd8] sm:$0xff]
        %v397 = vld [vmem:[#allocation2 + $0xe0] sm:$0xff]
        %v398 = vld [vmem:[#allocation2 + $0xe8] sm:$0xff]
        %v399 = vld [vmem:[#allocation2 + $0xf0] sm:$0xff]
        %v400 = vld [vmem:[#allocation2 + $0xf8] sm:$0xff]
        %v433 = vunpack.c.l.b16 %v369
        %v434 = vunpack.c.h.b16 %v369
        %v435 = vunpack.c.l.b16 %v370
        %v436 = vunpack.c.h.b16 %v370
        %v437 = vunpack.c.l.b16 %v371
        %v438 = vunpack.c.h.b16 %v371
        %v439 = vunpack.c.l.b16 %v372
        %v440 = vunpack.c.h.b16 %v372
        %v441 = vunpack.c.l.b16 %v373
        %v442 = vunpack.c.h.b16 %v373
        %v443 = vunpack.c.l.b16 %v374
        %v444 = vunpack.c.h.b16 %v374
        %v445 = vunpack.c.l.b16 %v375
        %v446 = vunpack.c.h.b16 %v375
        %v447 = vunpack.c.l.b16 %v376
        %v448 = vunpack.c.h.b16 %v376
        %v449 = vunpack.c.l.b16 %v377
        %v450 = vunpack.c.h.b16 %v377
        %v451 = vunpack.c.l.b16 %v378
        %v452 = vunpack.c.h.b16 %v378
        %v453 = vunpack.c.l.b16 %v379
        %v454 = vunpack.c.h.b16 %v379
        %v455 = vunpack.c.l.b16 %v380
        %v456 = vunpack.c.h.b16 %v380
        %v457 = vunpack.c.l.b16 %v381
        %v458 = vunpack.c.h.b16 %v381
        %v459 = vunpack.c.l.b16 %v382
        %v460 = vunpack.c.h.b16 %v382
        %v461 = vunpack.c.l.b16 %v383
        %v462 = vunpack.c.h.b16 %v383
        %v463 = vunpack.c.l.b16 %v384
        %v464 = vunpack.c.h.b16 %v384
        %v465 = vunpack.c.l.b16 %v385
        %v466 = vunpack.c.h.b16 %v385
        %v467 = vunpack.c.l.b16 %v386
        %v468 = vunpack.c.h.b16 %v386
        %v469 = vunpack.c.l.b16 %v387
        %v470 = vunpack.c.h.b16 %v387
        %v471 = vunpack.c.l.b16 %v388
        %v472 = vunpack.c.h.b16 %v388
        %v473 = vunpack.c.l.b16 %v389
        %v474 = vunpack.c.h.b16 %v389
        %v475 = vunpack.c.l.b16 %v390
        %v476 = vunpack.c.h.b16 %v390
        %v477 = vunpack.c.l.b16 %v391
        %v478 = vunpack.c.h.b16 %v391
        %v479 = vunpack.c.l.b16 %v392
        %v480 = vunpack.c.h.b16 %v392
        %v481 = vunpack.c.l.b16 %v393
        %v482 = vunpack.c.h.b16 %v393
        %v483 = vunpack.c.l.b16 %v394
        %v484 = vunpack.c.h.b16 %v394
        %v485 = vunpack.c.l.b16 %v395
        %v486 = vunpack.c.h.b16 %v395
        %v487 = vunpack.c.l.b16 %v396
        %v488 = vunpack.c.h.b16 %v396
        %v489 = vunpack.c.l.b16 %v397
        %v490 = vunpack.c.h.b16 %v397
        %v491 = vunpack.c.l.b16 %v398
        %v492 = vunpack.c.h.b16 %v398
        %v493 = vunpack.c.l.b16 %v399
        %v494 = vunpack.c.h.b16 %v399
        %v495 = vunpack.c.l.b16 %v400
        %v496 = vunpack.c.h.b16 %v400
        %v497 = vpack.c.b16 %v437, %v433
        %v498 = vpack.c.b16 %v438, %v434
        %v499 = vpack.c.b16 %v439, %v435
        %v500 = vpack.c.b16 %v440, %v436
        %v501 = vpack.c.b16 %v445, %v441
        %v502 = vpack.c.b16 %v446, %v442
        %v503 = vpack.c.b16 %v447, %v443
        %v504 = vpack.c.b16 %v448, %v444
        %v505 = vpack.c.b16 %v453, %v449
        %v506 = vpack.c.b16 %v454, %v450
        %v507 = vpack.c.b16 %v455, %v451
        %v508 = vpack.c.b16 %v456, %v452
        %v509 = vpack.c.b16 %v461, %v457
        %v510 = vpack.c.b16 %v462, %v458
        %v511 = vpack.c.b16 %v463, %v459
        %v512 = vpack.c.b16 %v464, %v460
        %v513 = vpack.c.b16 %v469, %v465
        %v514 = vpack.c.b16 %v470, %v466
        %v515 = vpack.c.b16 %v471, %v467
        %v516 = vpack.c.b16 %v472, %v468
        %v517 = vpack.c.b16 %v477, %v473
        %v518 = vpack.c.b16 %v478, %v474
        %v519 = vpack.c.b16 %v479, %v475
        %v520 = vpack.c.b16 %v480, %v476
        %v521 = vpack.c.b16 %v485, %v481
        %v522 = vpack.c.b16 %v486, %v482
        %v523 = vpack.c.b16 %v487, %v483
        %v524 = vpack.c.b16 %v488, %v484
        %v525 = vpack.c.b16 %v493, %v489
        %v526 = vpack.c.b16 %v494, %v490
        %v527 = vpack.c.b16 %v495, %v491
        %v528 = vpack.c.b16 %v496, %v492
        %561 = vmatprep.subr.bf16.mxu0 %v498
        %562 = vmatpush1.bf16.msra.mxu0 %v497
        %563 = vmatprep.subr.bf16.mxu0 %v502
        %564 = vmatpush1.bf16.msra.mxu0 %v501
        %565 = vmatprep.subr.bf16.mxu0 %v506
        %566 = vmatpush1.bf16.msra.mxu0 %v505
        %567 = vmatprep.subr.bf16.mxu0 %v510
        %568 = vmatpush1.bf16.msra.mxu0 %v509
        %569 = vmatprep.subr.bf16.mxu0 %v514
        %570 = vmatpush1.bf16.msra.mxu0 %v513
        %571 = vmatprep.subr.bf16.mxu0 %v518
        %572 = vmatpush1.bf16.msra.mxu0 %v517
        %573 = vmatprep.subr.bf16.mxu0 %v522
        %574 = vmatpush1.bf16.msra.mxu0 %v521
        %575 = vmatprep.subr.bf16.mxu0 %v526
        %576 = vmatpush1.bf16.msra.mxu0 %v525
        %577 = vmatprep.subr.bf16.mxu0 0
        %578 = vmatpush1.bf16.msra.mxu0 0
        %579 = vmatprep.subr.bf16.mxu0 0
        %580 = vmatpush1.bf16.msra.mxu0 0
        %581 = vmatprep.subr.bf16.mxu0 0
        %582 = vmatpush1.bf16.msra.mxu0 0
        %583 = vmatprep.subr.bf16.mxu0 0
        %584 = vmatpush1.bf16.msra.mxu0 0
        %585 = vmatprep.subr.bf16.mxu0 0
        %586 = vmatpush1.bf16.msra.mxu0 0
        %587 = vmatprep.subr.bf16.mxu0 0
        %588 = vmatpush1.bf16.msra.mxu0 0
        %589 = vmatprep.subr.bf16.mxu0 0
        %590 = vmatpush1.bf16.msra.mxu0 0
        %591 = vmatprep.subr.bf16.mxu0 0
        %592 = vmatpush1.bf16.msra.mxu0 0
        %593 = vmatprep.mubr.bf16.mxu0 0
        %594 = vmatmul.mubr.bf16.gmra.mrb[0].mxu0 %v368
        %v595 = vpop.f32.mrb[0].mxu0
        %v596 = vadd.f32 %v346, %v595
        %v597 = vpop.f32.mrb[0].mxu0
        %v598 = vadd.f32 %v353, %v597
        %v599 = vpop.f32.mrb[0].mxu0
        %v600 = vpop.f32.mrb[0].mxu0
        %601 = vdwg.mxu0
        %602 = vmatprep.subr.bf16.mxu0 %v500
        %603 = vmatpush1.bf16.msra.mxu0 %v499
        %604 = vmatprep.subr.bf16.mxu0 %v504
        %605 = vmatpush1.bf16.msra.mxu0 %v503
        %606 = vmatprep.subr.bf16.mxu0 %v508
        %607 = vmatpush1.bf16.msra.mxu0 %v507
        %608 = vmatprep.subr.bf16.mxu0 %v512
        %609 = vmatpush1.bf16.msra.mxu0 %v511
        %610 = vmatprep.subr.bf16.mxu0 %v516
        %611 = vmatpush1.bf16.msra.mxu0 %v515
        %612 = vmatprep.subr.bf16.mxu0 %v520
        %613 = vmatpush1.bf16.msra.mxu0 %v519
        %614 = vmatprep.subr.bf16.mxu0 %v524
        %615 = vmatpush1.bf16.msra.mxu0 %v523
        %616 = vmatprep.subr.bf16.mxu0 %v528
        %617 = vmatpush1.bf16.msra.mxu0 %v527
        %618 = vmatprep.subr.bf16.mxu0 0
        %619 = vmatpush1.bf16.msra.mxu0 0
        %620 = vmatprep.subr.bf16.mxu0 0
        %621 = vmatpush1.bf16.msra.mxu0 0
        %622 = vmatprep.subr.bf16.mxu0 0
        %623 = vmatpush1.bf16.msra.mxu0 0
        %624 = vmatprep.subr.bf16.mxu0 0
        %625 = vmatpush1.bf16.msra.mxu0 0
        %626 = vmatprep.subr.bf16.mxu0 0
        %627 = vmatpush1.bf16.msra.mxu0 0
        %628 = vmatprep.subr.bf16.mxu0 0
        %629 = vmatpush1.bf16.msra.mxu0 0
        %630 = vmatprep.subr.bf16.mxu0 0
        %631 = vmatpush1.bf16.msra.mxu0 0
        %632 = vmatprep.subr.bf16.mxu0 0
        %633 = vmatpush1.bf16.msra.mxu0 0
        %634 = vmatprep.mubr.bf16.mxu0 0
        %635 = vmatmul.mubr.bf16.gmra.mrb[0].mxu0 %v368
        %v636 = vpop.f32.mrb[0].mxu0
        %v637 = vadd.f32 %v360, %v636
        %v638 = vpop.f32.mrb[0].mxu0
        %v639 = vadd.f32 %v367, %v638
        %v640 = vpop.f32.mrb[0].mxu0
        %v641 = vpop.f32.mrb[0].mxu0
        %642 = vdwg.mxu0
        %v643 = vld [vmem:[#allocation6] sm:$0xf]
        %v645 = vlaneseq
        %v646 = vshrl.u32 %v645, 7
        %v647 = vsub.s32 0, %v646
        %v648 = vrot.slane %v643, %v647
        %v649 = vlaneseq
        %v650 = vshrl.u32 %v649, 7
        %v651 = vsub.s32 1, %v650
        %v652 = vrot.slane %v643, %v651
        %v653 = vlaneseq
        %v654 = vshrl.u32 %v653, 7
        %v655 = vsub.s32 2, %v654
        %v656 = vrot.slane %v643, %v655
        %v657 = vlaneseq
        %v658 = vshrl.u32 %v657, 7
        %v659 = vsub.s32 3, %v658
        %v660 = vrot.slane %v643, %v659
        %v665 = vadd.f32 %v596, %v648
        %v666 = vadd.f32 %v598, %v652
        %v667 = vadd.f32 %v637, %v656
        %v668 = vadd.f32 %v639, %v660
        %669 = vst [vmem:[%s314] sm:$0xff] %v665
        %670 = vst [vmem:[%s314 + $0x8] sm:$0xff] %v666
        %671 = vst [vmem:[%s314 + $0x10] sm:$0xff] %v667
        %672 = vst [vmem:[%s314 + $0x18] sm:$0xff] %v668
        %p673 = scmp.lt.s32.totalorder %s22, 1
        %s674 = scalar_select %p673, %s22, 1
        %p675 = scmp.lt.s32.totalorder %s23, 0
        %s676 = scalar_select %p675, %s23, 0
        %s677 = smul.addr %s676, 4
        %s678 = smul.addr %s674, 4
        %s679 = sadd.s32 %s677, %s678
        %s680 = smul.addr %s679, 8
        %s681 = scalar_lea.vmem %s5, %s680
        // Predicated region
        $region53: #{scst_forward.3} parent=39 // pred_check
          %p682 = pneg %p167
        $region54: #{scst_forward.3} parent=39 // pred_check_branch
          %684 = sbr.rel (%p682) target = $region56
        $region55: #{scst_forward.3} parent=39 // pred_region
          _
        $region56: #{scst_forward.3} parent=39 // pred_fallthru
          _
      $region40: #{scst_forward.3} parent=5 // pred_fallthru
        _
      %p685 = scmp.le.s32.totalorder 2, %s13
      // Predicated region
      $region57: #{scst_forward.3} parent=5 // pred_check
        %p686 = pneg %p685
      $region58: #{scst_forward.3} parent=5 // pred_check_branch
        %688 = sbr.rel (%p686) target = $region60
      $region59: #{scst_forward.3} parent=5 // pred_region
        %s689 = ssub.s32 %s13, 2
        // Predicated region
        $region61: #{scst_forward.3} parent=59 // pred_check
          %p690 = pneg %p173
        $region62: #{scst_forward.3} parent=59 // pred_check_branch
          %692 = sbr.rel (%p690) target = $region64
        $region63: #{scst_forward.3} parent=59 // pred_region
          %p693 = scmp.lt.s32.totalorder %s24, 1
          %s694 = scalar_select %p693, %s24, 1
          %p695 = scmp.lt.s32.totalorder %s25, 0
          %s696 = scalar_select %p695, %s25, 0
          %s697 = smul.addr %s696, 4
          %s698 = smul.addr %s694, 4
          %s699 = sadd.s32 %s697, %s698
          %s700 = smul.addr %s699, 8
          %s701 = scalar_lea.vmem %s5, %s700
        $region64: #{scst_forward.3} parent=59 // pred_fallthru
          _
      $region60: #{scst_forward.3} parent=5 // pred_fallthru
        _
    $region6: #{scst_forward.3} parent=1 // loop_footer
      %s17 = sadd.s32 1, %s13
    $region7: #{scst_forward.3} parent=1 // loop_footer_branch
      %12 = sbr.rel target = $region3
    $region8: #{scst_forward.3} parent=1 // loop_exit
      _
    %702 = vsyncpa [#allocation3], 1
    %s703 = scalar_lea.sflag [#allocation3], 1
    %704 = vsyncpa %s703, 1
    %705 = vsyncpa [#allocation5], 1

// kernel: scst_forward.4
$region0: #{scst_forward.4}
  #allocation0 [shape = 'u32[]', space=smem, size = 0x4, offset = 0x4, fixed_abs, tag = 'smem constant byte address 0x4 - core index']
  #allocation1 [shape = 'u32[144,128]{1,0:T(1,128)}', space=vmem, size = 0x12000, scoped, tag = 'internal scratch']
  #allocation2 [shape = 'f32[2,128]{1,0:T(2,128)}', space=vmem, size = 0x400, scoped, tag = 'scratch operand']
  #allocation3 [shape = 'f32[2,128]{1,0:T(2,128)}', space=vmem, size = 0x400, scoped, tag = 'scratch operand']
  %s0 = inlined_call_operand.vmem [shape: f32[2,8,512], index: 0, kind: input, shape index: {}]
  %s1 = inlined_call_operand.vmem [shape: f32[128,512], index: 1, kind: input, shape index: {}]
  %s2 = inlined_call_operand.vmem [shape: f32[2,8,128], index: 2, kind: output, shape index: {}]
  %s3 = sld [smem:[#allocation0]]
  $region22: #{scst_forward.4} parent=0
    _
  %s5 = ssub.s32 1, %s3
  %s6 = scalar_select 0, %s5, %s3
  // Predicated region
  $region2: #{scst_forward.4} parent=0 // pred_check
    _
  $region3: #{scst_forward.4} parent=0 // pred_check_branch
    %8 = sbr.rel (0) target = $region5
  $region4: #{scst_forward.4} parent=0 // pred_region
    _
  $region5: #{scst_forward.4} parent=0 // pred_fallthru
    _
  // Predicated region
  $region6: #{scst_forward.4} parent=0 // pred_check
    _
  $region7: #{scst_forward.4} parent=0 // pred_check_branch
    %10 = sbr.rel (0) target = $region9
  $region8: #{scst_forward.4} parent=0 // pred_region
    _
  $region9: #{scst_forward.4} parent=0 // pred_fallthru
    _
  %p11 = scmp.eq.s32.totalorder 0, 0
  // Predicated region
  $region10: #{scst_forward.4} parent=0 // pred_check
    %p12 = pneg %p11
  $region11: #{scst_forward.4} parent=0 // pred_check_branch
    %14 = sbr.rel (%p12) target = $region13
  $region12: #{scst_forward.4} parent=0 // pred_region
    %15 = vst [vmem:[#allocation2] sm:$0x3] 0.0
    %16 = vst [vmem:[#allocation3] sm:$0x3] 0.0
  $region13: #{scst_forward.4} parent=0 // pred_fallthru
    _
  %v17 = vld [vmem:[#allocation2] sm:$0x3]
  %v18 = vld [vmem:[#allocation3] sm:$0x3]
  %v19 = vld [vmem:[%s0] ss:$8 sm:$0xf]
  %s20 = scalar_lea.vmem %s0, 32
  %v21 = vld [vmem:[%s20] ss:$8 sm:$0xf]
  %v22 = vld [vmem:[%s1] sm:$0xff]
  %v23 = vld [vmem:[%s1 + $0x8] sm:$0xff]
  %v24 = vld [vmem:[%s1 + $0x10] sm:$0xff]
  %v25 = vld [vmem:[%s1 + $0x18] sm:$0xff]
  %v26 = vld [vmem:[%s1 + $0x20] sm:$0xff]
  %v27 = vld [vmem:[%s1 + $0x28] sm:$0xff]
  %v28 = vld [vmem:[%s1 + $0x30] sm:$0xff]
  %v29 = vld [vmem:[%s1 + $0x38] sm:$0xff]
  %v30 = vld [vmem:[%s1 + $0x40] sm:$0xff]
  %v31 = vld [vmem:[%s1 + $0x48] sm:$0xff]
  %v32 = vld [vmem:[%s1 + $0x50] sm:$0xff]
  %v33 = vld [vmem:[%s1 + $0x58] sm:$0xff]
  %v34 = vld [vmem:[%s1 + $0x60] sm:$0xff]
  %v35 = vld [vmem:[%s1 + $0x68] sm:$0xff]
  %v36 = vld [vmem:[%s1 + $0x70] sm:$0xff]
  %v37 = vld [vmem:[%s1 + $0x78] sm:$0xff]
  %v38 = vld [vmem:[%s1 + $0x80] sm:$0xff]
  %v39 = vld [vmem:[%s1 + $0x88] sm:$0xff]
  %v40 = vld [vmem:[%s1 + $0x90] sm:$0xff]
  %v41 = vld [vmem:[%s1 + $0x98] sm:$0xff]
  %v42 = vld [vmem:[%s1 + $0xa0] sm:$0xff]
  %v43 = vld [vmem:[%s1 + $0xa8] sm:$0xff]
  %v44 = vld [vmem:[%s1 + $0xb0] sm:$0xff]
  %v45 = vld [vmem:[%s1 + $0xb8] sm:$0xff]
  %v46 = vld [vmem:[%s1 + $0xc0] sm:$0xff]
  %v47 = vld [vmem:[%s1 + $0xc8] sm:$0xff]
  %v48 = vld [vmem:[%s1 + $0xd0] sm:$0xff]
  %v49 = vld [vmem:[%s1 + $0xd8] sm:$0xff]
  %v50 = vld [vmem:[%s1 + $0xe0] sm:$0xff]
  %v51 = vld [vmem:[%s1 + $0xe8] sm:$0xff]
  %v52 = vld [vmem:[%s1 + $0xf0] sm:$0xff]
  %v53 = vld [vmem:[%s1 + $0xf8] sm:$0xff]
  %v54 = vld [vmem:[%s1 + $0x100] sm:$0xff]
  %v55 = vld [vmem:[%s1 + $0x108] sm:$0xff]
  %v56 = vld [vmem:[%s1 + $0x110] sm:$0xff]
  %v57 = vld [vmem:[%s1 + $0x118] sm:$0xff]
  %v58 = vld [vmem:[%s1 + $0x120] sm:$0xff]
  %v59 = vld [vmem:[%s1 + $0x128] sm:$0xff]
  %v60 = vld [vmem:[%s1 + $0x130] sm:$0xff]
  %v61 = vld [vmem:[%s1 + $0x138] sm:$0xff]
  %v62 = vld [vmem:[%s1 + $0x140] sm:$0xff]
  %v63 = vld [vmem:[%s1 + $0x148] sm:$0xff]
  %v64 = vld [vmem:[%s1 + $0x150] sm:$0xff]
  %v65 = vld [vmem:[%s1 + $0x158] sm:$0xff]
  %v66 = vld [vmem:[%s1 + $0x160] sm:$0xff]
  %v67 = vld [vmem:[%s1 + $0x168] sm:$0xff]
  %v68 = vld [vmem:[%s1 + $0x170] sm:$0xff]
  %v69 = vld [vmem:[%s1 + $0x178] sm:$0xff]
  %v70 = vld [vmem:[%s1 + $0x180] sm:$0xff]
  %v71 = vld [vmem:[%s1 + $0x188] sm:$0xff]
  %v72 = vld [vmem:[%s1 + $0x190] sm:$0xff]
  %v73 = vld [vmem:[%s1 + $0x198] sm:$0xff]
  %v74 = vld [vmem:[%s1 + $0x1a0] sm:$0xff]
  %v75 = vld [vmem:[%s1 + $0x1a8] sm:$0xff]
  %v76 = vld [vmem:[%s1 + $0x1b0] sm:$0xff]
  %v77 = vld [vmem:[%s1 + $0x1b8] sm:$0xff]
  %v78 = vld [vmem:[%s1 + $0x1c0] sm:$0xff]
  %v79 = vld [vmem:[%s1 + $0x1c8] sm:$0xff]
  %v80 = vld [vmem:[%s1 + $0x1d0] sm:$0xff]
  %v81 = vld [vmem:[%s1 + $0x1d8] sm:$0xff]
  %v82 = vld [vmem:[%s1 + $0x1e0] sm:$0xff]
  %v83 = vld [vmem:[%s1 + $0x1e8] sm:$0xff]
  %v84 = vld [vmem:[%s1 + $0x1f0] sm:$0xff]
  %v85 = vld [vmem:[%s1 + $0x1f8] sm:$0xff]
  %86 = vmatprep.subr.mxu0 %v23
  %87 = vmatpush1.msra.mxu0 %v22
  %88 = vmatprep.subr.mxu0 %v27
  %89 = vmatpush1.msra.mxu0 %v26
  %90 = vmatprep.subr.mxu0 %v31
  %91 = vmatpush1.msra.mxu0 %v30
  %92 = vmatprep.subr.mxu0 %v35
  %93 = vmatpush1.msra.mxu0 %v34
  %94 = vmatprep.subr.mxu0 %v39
  %95 = vmatpush1.msra.mxu0 %v38
  %96 = vmatprep.subr.mxu0 %v43
  %97 = vmatpush1.msra.mxu0 %v42
  %98 = vmatprep.subr.mxu0 %v47
  %99 = vmatpush1.msra.mxu0 %v46
  %100 = vmatprep.subr.mxu0 %v51
  %101 = vmatpush1.msra.mxu0 %v50
  %102 = vmatprep.subr.mxu0 %v55
  %103 = vmatpush1.msra.mxu0 %v54
  %104 = vmatprep.subr.mxu0 %v59
  %105 = vmatpush1.msra.mxu0 %v58
  %106 = vmatprep.subr.mxu0 %v63
  %107 = vmatpush1.msra.mxu0 %v62
  %108 = vmatprep.subr.mxu0 %v67
  %109 = vmatpush1.msra.mxu0 %v66
  %110 = vmatprep.subr.mxu0 %v71
  %111 = vmatpush1.msra.mxu0 %v70
  %112 = vmatprep.subr.mxu0 %v75
  %113 = vmatpush1.msra.mxu0 %v74
  %114 = vmatprep.subr.mxu0 %v79
  %115 = vmatpush1.msra.mxu0 %v78
  %116 = vmatprep.subr.mxu0 %v83
  %117 = vmatpush1.msra.mxu0 %v82
  %118 = vmatprep.subr.mxu0 0.0
  %119 = vmatpush1.msra.mxu0 0.0
  %120 = vmatprep.subr.mxu0 0.0
  %121 = vmatpush1.msra.mxu0 0.0
  %122 = vmatprep.subr.mxu0 0.0
  %123 = vmatpush1.msra.mxu0 0.0
  %124 = vmatprep.subr.mxu0 0.0
  %125 = vmatpush1.msra.mxu0 0.0
  %126 = vmatprep.subr.mxu0 0.0
  %127 = vmatpush1.msra.mxu0 0.0
  %128 = vmatprep.subr.mxu0 0.0
  %129 = vmatpush1.msra.mxu0 0.0
  %130 = vmatprep.subr.mxu0 0.0
  %131 = vmatpush1.msra.mxu0 0.0
  %132 = vmatprep.subr.mxu0 0.0
  %133 = vmatpush1.msra.mxu0 0.0
  %134 = vmatprep.subr.mxu0 0.0
  %135 = vmatpush1.msra.mxu0 0.0
  %136 = vmatprep.subr.mxu0 0.0
  %137 = vmatpush1.msra.mxu0 0.0
  %138 = vmatprep.subr.mxu0 0.0
  %139 = vmatpush1.msra.mxu0 0.0
  %140 = vmatprep.subr.mxu0 0.0
  %141 = vmatpush1.msra.mxu0 0.0
  %142 = vmatprep.subr.mxu0 0.0
  %143 = vmatpush1.msra.mxu0 0.0
  %144 = vmatprep.subr.mxu0 0.0
  %145 = vmatpush1.msra.mxu0 0.0
  %146 = vmatprep.subr.mxu0 0.0
  %147 = vmatpush1.msra.mxu0 0.0
  %148 = vmatprep.subr.mxu0 0.0
  %149 = vmatpush1.msra.mxu0 0.0
  %150 = vmatprep.mubr.f32.mxu0 0.0
  %151 = vmatmul.mubr.f32.gmra.mrb[0].mxu0 %v17
  %v152 = vpop.f32.mrb[0].mxu0
  %v153 = vadd.f32 0.0, %v152
  %v154 = vpop.f32.mrb[0].mxu0
  %v155 = vadd.f32 0.0, %v154
  %156 = vdwg.mxu0
  %157 = vmatprep.subr.mxu0 %v25
  %158 = vmatpush1.msra.mxu0 %v24
  %159 = vmatprep.subr.mxu0 %v29
  %160 = vmatpush1.msra.mxu0 %v28
  %161 = vmatprep.subr.mxu0 %v33
  %162 = vmatpush1.msra.mxu0 %v32
  %163 = vmatprep.subr.mxu0 %v37
  %164 = vmatpush1.msra.mxu0 %v36
  %165 = vmatprep.subr.mxu0 %v41
  %166 = vmatpush1.msra.mxu0 %v40
  %167 = vmatprep.subr.mxu0 %v45
  %168 = vmatpush1.msra.mxu0 %v44
  %169 = vmatprep.subr.mxu0 %v49
  %170 = vmatpush1.msra.mxu0 %v48
  %171 = vmatprep.subr.mxu0 %v53
  %172 = vmatpush1.msra.mxu0 %v52
  %173 = vmatprep.subr.mxu0 %v57
  %174 = vmatpush1.msra.mxu0 %v56
  %175 = vmatprep.subr.mxu0 %v61
  %176 = vmatpush1.msra.mxu0 %v60
  %177 = vmatprep.subr.mxu0 %v65
  %178 = vmatpush1.msra.mxu0 %v64
  %179 = vmatprep.subr.mxu0 %v69
  %180 = vmatpush1.msra.mxu0 %v68
  %181 = vmatprep.subr.mxu0 %v73
  %182 = vmatpush1.msra.mxu0 %v72
  %183 = vmatprep.subr.mxu0 %v77
  %184 = vmatpush1.msra.mxu0 %v76
  %185 = vmatprep.subr.mxu0 %v81
  %186 = vmatpush1.msra.mxu0 %v80
  %187 = vmatprep.subr.mxu0 %v85
  %188 = vmatpush1.msra.mxu0 %v84
  %189 = vmatprep.subr.mxu0 0.0
  %190 = vmatpush1.msra.mxu0 0.0
  %191 = vmatprep.subr.mxu0 0.0
  %192 = vmatpush1.msra.mxu0 0.0
  %193 = vmatprep.subr.mxu0 0.0
  %194 = vmatpush1.msra.mxu0 0.0
  %195 = vmatprep.subr.mxu0 0.0
  %196 = vmatpush1.msra.mxu0 0.0
  %197 = vmatprep.subr.mxu0 0.0
  %198 = vmatpush1.msra.mxu0 0.0
  %199 = vmatprep.subr.mxu0 0.0
  %200 = vmatpush1.msra.mxu0 0.0
  %201 = vmatprep.subr.mxu0 0.0
  %202 = vmatpush1.msra.mxu0 0.0
  %203 = vmatprep.subr.mxu0 0.0
  %204 = vmatpush1.msra.mxu0 0.0
  %205 = vmatprep.subr.mxu0 0.0
  %206 = vmatpush1.msra.mxu0 0.0
  %207 = vmatprep.subr.mxu0 0.0
  %208 = vmatpush1.msra.mxu0 0.0
  %209 = vmatprep.subr.mxu0 0.0
  %210 = vmatpush1.msra.mxu0 0.0
  %211 = vmatprep.subr.mxu0 0.0
  %212 = vmatpush1.msra.mxu0 0.0
  %213 = vmatprep.subr.mxu0 0.0
  %214 = vmatpush1.msra.mxu0 0.0
  %215 = vmatprep.subr.mxu0 0.0
  %216 = vmatpush1.msra.mxu0 0.0
  %217 = vmatprep.subr.mxu0 0.0
  %218 = vmatpush1.msra.mxu0 0.0
  %219 = vmatprep.subr.mxu0 0.0
  %220 = vmatpush1.msra.mxu0 0.0
  %221 = vmatprep.mubr.f32.mxu0 0.0
  %222 = vmatmul.mubr.f32.gmra.mrb[0].mxu0 %v17
  %v223 = vpop.f32.mrb[0].mxu0
  %v224 = vadd.f32 0.0, %v223
  %v225 = vpop.f32.mrb[0].mxu0
  %v226 = vadd.f32 0.0, %v225
  %227 = vdwg.mxu0
  %v232 = vcombine.low %v153, %v155
  %v233 = vcombine.low %v224, %v226
  %v235 = vunpack.c.l.s4 1966171168
  %v236 = vunpack.c.0.s8 %v235
  %v237 = vlaneseq
  %v238 = vshrl.u32 %v237, 7
  %v239 = vsub.s32 %v236, %v238
  %v240 = vrot.slane %v232, %v239
  %v242 = vunpack.c.l.s4 1966171168
  %v243 = vunpack.c.0.s8 %v242
  %v244 = vlaneseq
  %v245 = vshrl.u32 %v244, 7
  %v246 = vsub.s32 %v243, %v245
  %v247 = vrot.slane %v233, %v246
  %v248 = vcombine.low %v240, %v247
  %v249 = vcombine.high %v240, %v247
  %v251 = vunpack.c.l.s4 1966171168
  %v252 = vunpack.c.0.s8 %v251
  %v253 = vlaneseq
  %v254 = vshrl.u32 %v253, 7
  %v255 = vsub.s32 %v252, %v254
  %v256 = vrot.slane %v248, %v255
  %v258 = vunpack.c.l.s4 1966171168
  %v259 = vunpack.c.0.s8 %v258
  %v260 = vlaneseq
  %v261 = vshrl.u32 %v260, 7
  %v262 = vsub.s32 %v259, %v261
  %v263 = vrot.slane %v249, %v262
  %v266 = vadd.f32 %v19, %v256
  %v267 = vadd.f32 %v21, %v263
  %v268 = vxor.u32 %v266, 2147483648
  %v269 = vxor.u32 %v267, 2147483648
  %v270 = vmul.f32 %v268, 1.442695
  %v271 = vpow.pop %v270
  %v272 = vmul.f32 %v269, 1.442695
  %v273 = vpow.pop %v272
  %v274 = vadd.f32 %v271, 1.0
  %v275 = vadd.f32 %v273, 1.0
  %v276 = vrcp.pop %v274
  %v277 = vmul.f32 1.0, %v276
  %v278 = vrcp.pop %v275
  %v279 = vmul.f32 1.0, %v278
  %v282 = vrot.slane %v266, 1
  %v283 = vrot.slane %v267, 1
  %v286 = vxor.u32 %v282, 2147483648
  %v287 = vxor.u32 %v283, 2147483648
  %v288 = vmul.f32 %v286, 1.442695
  %v289 = vpow.pop %v288
  %v290 = vmul.f32 %v287, 1.442695
  %v291 = vpow.pop %v290
  %v292 = vadd.f32 %v289, 1.0
  %v293 = vadd.f32 %v291, 1.0
  %v294 = vrcp.pop %v292
  %v295 = vmul.f32 1.0, %v294
  %v296 = vrcp.pop %v293
  %v297 = vmul.f32 1.0, %v296
  %v298 = vrot.slane %v266, 2
  %v299 = vrot.slane %v267, 2
  %v302 = vtanh.pop %v298
  %v303 = vtanh.pop %v299
  %v304 = vrot.slane %v266, 3
  %v305 = vrot.slane %v267, 3
  %v308 = vxor.u32 %v304, 2147483648
  %v309 = vxor.u32 %v305, 2147483648
  %v310 = vmul.f32 %v308, 1.442695
  %v311 = vpow.pop %v310
  %v312 = vmul.f32 %v309, 1.442695
  %v313 = vpow.pop %v312
  %v314 = vadd.f32 %v311, 1.0
  %v315 = vadd.f32 %v313, 1.0
  %v316 = vrcp.pop %v314
  %v317 = vmul.f32 1.0, %v316
  %v318 = vrcp.pop %v315
  %v319 = vmul.f32 1.0, %v318
  %v322 = vunpack.c.l.s4 1966171168
  %v323 = vunpack.c.0.s8 %v322
  %v324 = vlaneseq
  %v325 = vshrl.u32 %v324, 7
  %v326 = vsub.s32 %v323, %v325
  %v327 = vrot.slane %v18, %v326
  %v328 = vcombine.high %v327, %v327
  %v330 = vunpack.c.l.s4 1966171168
  %v331 = vunpack.c.0.s8 %v330
  %v332 = vlaneseq
  %v333 = vshrl.u32 %v332, 7
  %v334 = vsub.s32 %v331, %v333
  %v335 = vrot.slane %v327, %v334
  %v337 = vunpack.c.l.s4 1966171168
  %v338 = vunpack.c.0.s8 %v337
  %v339 = vlaneseq
  %v340 = vshrl.u32 %v339, 7
  %v341 = vsub.s32 %v338, %v340
  %v342 = vrot.slane %v328, %v341
  %v345 = vmul.f32 %v295, %v335
  %v346 = vmul.f32 %v297, %v342
  %v347 = vmul.f32 %v277, %v302
  %v348 = vmul.f32 %v279, %v303
  %v349 = vadd.f32 %v345, %v347
  %v350 = vadd.f32 %v346, %v348
  %v351 = vtanh.pop %v349
  %v352 = vtanh.pop %v350
  %v353 = vmul.f32 %v317, %v351
  %v354 = vmul.f32 %v319, %v352
  %355 = vst [vmem:[%s2] sm:$0x1] %v353
  %356 = vst [vmem:[%s2 + $0x8] sm:$0x1] %v354
  %s357 = scalar_lea.vmem %s0, 1
  %v358 = vld [vmem:[%s357] ss:$8 sm:$0xf]
  %s359 = scalar_lea.vmem %s0, 33
  %v360 = vld [vmem:[%s359] ss:$8 sm:$0xf]
  %v361 = vld [vmem:[%s1] sm:$0xff]
  %v362 = vld [vmem:[%s1 + $0x8] sm:$0xff]
  %v363 = vld [vmem:[%s1 + $0x10] sm:$0xff]
  %v364 = vld [vmem:[%s1 + $0x18] sm:$0xff]
  %v365 = vld [vmem:[%s1 + $0x20] sm:$0xff]
  %v366 = vld [vmem:[%s1 + $0x28] sm:$0xff]
  %v367 = vld [vmem:[%s1 + $0x30] sm:$0xff]
  %v368 = vld [vmem:[%s1 + $0x38] sm:$0xff]
  %v369 = vld [vmem:[%s1 + $0x40] sm:$0xff]
  %v370 = vld [vmem:[%s1 + $0x48] sm:$0xff]
  %v371 = vld [vmem:[%s1 + $0x50] sm:$0xff]
  %v372 = vld [vmem:[%s1 + $0x58] sm:$0xff]
  %v373 = vld [vmem:[%s1 + $0x60] sm:$0xff]
  %v374 = vld [vmem:[%s1 + $0x68] sm:$0xff]
  %v375 = vld [vmem:[%s1 + $0x70] sm:$0xff]
  %v376 = vld [vmem:[%s1 + $0x78] sm:$0xff]
  %v377 = vld [vmem:[%s1 + $0x80] sm:$0xff]
  %v378 = vld [vmem:[%s1 + $0x88] sm:$0xff]
  %v379 = vld [vmem:[%s1 + $0x90] sm:$0xff]
  %v380 = vld [vmem:[%s1 + $0x98] sm:$0xff]
  %v381 = vld [vmem:[%s1 + $0xa0] sm:$0xff]
  %v382 = vld [vmem:[%s1 + $0xa8] sm:$0xff]
  %v383 = vld [vmem:[%s1 + $0xb0] sm:$0xff]
  %v384 = vld [vmem:[%s1 + $0xb8] sm:$0xff]
  %v385 = vld [vmem:[%s1 + $0xc0] sm:$0xff]
  %v386 = vld [vmem:[%s1 + $0xc8] sm:$0xff]
  %v387 = vld [vmem:[%s1 + $0xd0] sm:$0xff]
  %v388 = vld [vmem:[%s1 + $0xd8] sm:$0xff]
  %v389 = vld [vmem:[%s1 + $0xe0] sm:$0xff]
  %v390 = vld [vmem:[%s1 + $0xe8] sm:$0xff]
  %v391 = vld [vmem:[%s1 + $0xf0] sm:$0xff]
  %v392 = vld [vmem:[%s1 + $0xf8] sm:$0xff]
  %v393 = vld [vmem:[%s1 + $0x100] sm:$0xff]
  %v394 = vld [vmem:[%s1 + $0x108] sm:$0xff]
  %v395 = vld [vmem:[%s1 + $0x110] sm:$0xff]
  %v396 = vld [vmem:[%s1 + $0x118] sm:$0xff]
  %v397 = vld [vmem:[%s1 + $0x120] sm:$0xff]
  %v398 = vld [vmem:[%s1 + $0x128] sm:$0xff]
  %v399 = vld [vmem:[%s1 + $0x130] sm:$0xff]
  %v400 = vld [vmem:[%s1 + $0x138] sm:$0xff]
  %v401 = vld [vmem:[%s1 + $0x140] sm:$0xff]
  %v402 = vld [vmem:[%s1 + $0x148] sm:$0xff]
  %v403 = vld [vmem:[%s1 + $0x150] sm:$0xff]
  %v404 = vld [vmem:[%s1 + $0x158] sm:$0xff]
  %v405 = vld [vmem:[%s1 + $0x160] sm:$0xff]
  %v406 = vld [vmem:[%s1 + $0x168] sm:$0xff]
  %v407 = vld [vmem:[%s1 + $0x170] sm:$0xff]
  %v408 = vld [vmem:[%s1 + $0x178] sm:$0xff]
  %v409 = vld [vmem:[%s1 + $0x180] sm:$0xff]
  %v410 = vld [vmem:[%s1 + $0x188] sm:$0xff]
  %v411 = vld [vmem:[%s1 + $0x190] sm:$0xff]
  %v412 = vld [vmem:[%s1 + $0x198] sm:$0xff]
  %v413 = vld [vmem:[%s1 + $0x1a0] sm:$0xff]
  %v414 = vld [vmem:[%s1 + $0x1a8] sm:$0xff]
  %v415 = vld [vmem:[%s1 + $0x1b0] sm:$0xff]
  %v416 = vld [vmem:[%s1 + $0x1b8] sm:$0xff]
  %v417 = vld [vmem:[%s1 + $0x1c0] sm:$0xff]
  %v418 = vld [vmem:[%s1 + $0x1c8] sm:$0xff]
  %v419 = vld [vmem:[%s1 + $0x1d0] sm:$0xff]
  %v420 = vld [vmem:[%s1 + $0x1d8] sm:$0xff]
  %v421 = vld [vmem:[%s1 + $0x1e0] sm:$0xff]
  %v422 = vld [vmem:[%s1 + $0x1e8] sm:$0xff]
  %v423 = vld [vmem:[%s1 + $0x1f0] sm:$0xff]
  %v424 = vld [vmem:[%s1 + $0x1f8] sm:$0xff]
  %v427 = vcombine.low %v353, %v354
  %v429 = vunpack.c.l.s4 1966171168
  %v430 = vunpack.c.0.s8 %v429
  %v431 = vlaneseq
  %v432 = vshrl.u32 %v431, 7
  %v433 = vsub.s32 %v430, %v432
  %v434 = vrot.slane %v427, %v433
  %v436 = vunpack.c.l.s4 1966171168
  %v437 = vunpack.c.0.s8 %v436
  %v438 = vlaneseq
  %v439 = vshrl.u32 %v438, 7
  %v440 = vsub.s32 %v437, %v439
  %v441 = vrot.slane %v434, %v440
  %443 = vmatprep.subr.mxu0 %v362
  %444 = vmatpush1.msra.mxu0 %v361
  %445 = vmatprep.subr.mxu0 %v366
  %446 = vmatpush1.msra.mxu0 %v365
  %447 = vmatprep.subr.mxu0 %v370
  %448 = vmatpush1.msra.mxu0 %v369
  %449 = vmatprep.subr.mxu0 %v374
  %450 = vmatpush1.msra.mxu0 %v373
  %451 = vmatprep.subr.mxu0 %v378
  %452 = vmatpush1.msra.mxu0 %v377
  %453 = vmatprep.subr.mxu0 %v382
  %454 = vmatpush1.msra.mxu0 %v381
  %455 = vmatprep.subr.mxu0 %v386
  %456 = vmatpush1.msra.mxu0 %v385
  %457 = vmatprep.subr.mxu0 %v390
  %458 = vmatpush1.msra.mxu0 %v389
  %459 = vmatprep.subr.mxu0 %v394
  %460 = vmatpush1.msra.mxu0 %v393
  %461 = vmatprep.subr.mxu0 %v398
  %462 = vmatpush1.msra.mxu0 %v397
  %463 = vmatprep.subr.mxu0 %v402
  %464 = vmatpush1.msra.mxu0 %v401
  %465 = vmatprep.subr.mxu0 %v406
  %466 = vmatpush1.msra.mxu0 %v405
  %467 = vmatprep.subr.mxu0 %v410
  %468 = vmatpush1.msra.mxu0 %v409
  %469 = vmatprep.subr.mxu0 %v414
  %470 = vmatpush1.msra.mxu0 %v413
  %471 = vmatprep.subr.mxu0 %v418
  %472 = vmatpush1.msra.mxu0 %v417
  %473 = vmatprep.subr.mxu0 %v422
  %474 = vmatpush1.msra.mxu0 %v421
  %475 = vmatprep.subr.mxu0 0.0
  %476 = vmatpush1.msra.mxu0 0.0
  %477 = vmatprep.subr.mxu0 0.0
  %478 = vmatpush1.msra.mxu0 0.0
  %479 = vmatprep.subr.mxu0 0.0
  %480 = vmatpush1.msra.mxu0 0.0
  %481 = vmatprep.subr.mxu0 0.0
  %482 = vmatpush1.msra.mxu0 0.0
  %483 = vmatprep.subr.mxu0 0.0
  %484 = vmatpush1.msra.mxu0 0.0
  %485 = vmatprep.subr.mxu0 0.0
  %486 = vmatpush1.msra.mxu0 0.0
  %487 = vmatprep.subr.mxu0 0.0
  %488 = vmatpush1.msra.mxu0 0.0
  %489 = vmatprep.subr.mxu0 0.0
  %490 = vmatpush1.msra.mxu0 0.0
  %491 = vmatprep.subr.mxu0 0.0
  %492 = vmatpush1.msra.mxu0 0.0
  %493 = vmatprep.subr.mxu0 0.0
  %494 = vmatpush1.msra.mxu0 0.0
  %495 = vmatprep.subr.mxu0 0.0
  %496 = vmatpush1.msra.mxu0 0.0
  %497 = vmatprep.subr.mxu0 0.0
  %498 = vmatpush1.msra.mxu0 0.0
  %499 = vmatprep.subr.mxu0 0.0
  %500 = vmatpush1.msra.mxu0 0.0
  %501 = vmatprep.subr.mxu0 0.0
  %502 = vmatpush1.msra.mxu0 0.0
  %503 = vmatprep.subr.mxu0 0.0
  %504 = vmatpush1.msra.mxu0 0.0
  %505 = vmatprep.subr.mxu0 0.0
  %506 = vmatpush1.msra.mxu0 0.0
  %507 = vmatprep.mubr.f32.mxu0 0.0
  %508 = vmatmul.mubr.f32.gmra.mrb[0].mxu0 %v441
  %v509 = vpop.f32.mrb[0].mxu0
  %v510 = vadd.f32 0.0, %v509
  %v511 = vpop.f32.mrb[0].mxu0
  %v512 = vadd.f32 0.0, %v511
  %513 = vdwg.mxu0
  %514 = vmatprep.subr.mxu0 %v364
  %515 = vmatpush1.msra.mxu0 %v363
  %516 = vmatprep.subr.mxu0 %v368
  %517 = vmatpush1.msra.mxu0 %v367
  %518 = vmatprep.subr.mxu0 %v372
  %519 = vmatpush1.msra.mxu0 %v371
  %520 = vmatprep.subr.mxu0 %v376
  %521 = vmatpush1.msra.mxu0 %v375
  %522 = vmatprep.subr.mxu0 %v380
  %523 = vmatpush1.msra.mxu0 %v379
  %524 = vmatprep.subr.mxu0 %v384
  %525 = vmatpush1.msra.mxu0 %v383
  %526 = vmatprep.subr.mxu0 %v388
  %527 = vmatpush1.msra.mxu0 %v387
  %528 = vmatprep.subr.mxu0 %v392
  %529 = vmatpush1.msra.mxu0 %v391
  %530 = vmatprep.subr.mxu0 %v396
  %531 = vmatpush1.msra.mxu0 %v395
  %532 = vmatprep.subr.mxu0 %v400
  %533 = vmatpush1.msra.mxu0 %v399
  %534 = vmatprep.subr.mxu0 %v404
  %535 = vmatpush1.msra.mxu0 %v403
  %536 = vmatprep.subr.mxu0 %v408
  %537 = vmatpush1.msra.mxu0 %v407
  %538 = vmatprep.subr.mxu0 %v412
  %539 = vmatpush1.msra.mxu0 %v411
  %540 = vmatprep.subr.mxu0 %v416
  %541 = vmatpush1.msra.mxu0 %v415
  %542 = vmatprep.subr.mxu0 %v420
  %543 = vmatpush1.msra.mxu0 %v419
  %544 = vmatprep.subr.mxu0 %v424
  %545 = vmatpush1.msra.mxu0 %v423
  %546 = vmatprep.subr.mxu0 0.0
  %547 = vmatpush1.msra.mxu0 0.0
  %548 = vmatprep.subr.mxu0 0.0
  %549 = vmatpush1.msra.mxu0 0.0
  %550 = vmatprep.subr.mxu0 0.0
  %551 = vmatpush1.msra.mxu0 0.0
  %552 = vmatprep.subr.mxu0 0.0
  %553 = vmatpush1.msra.mxu0 0.0
  %554 = vmatprep.subr.mxu0 0.0
  %555 = vmatpush1.msra.mxu0 0.0
  %556 = vmatprep.subr.mxu0 0.0
  %557 = vmatpush1.msra.mxu0 0.0
  %558 = vmatprep.subr.mxu0 0.0
  %559 = vmatpush1.msra.mxu0 0.0
  %560 = vmatprep.subr.mxu0 0.0
  %561 = vmatpush1.msra.mxu0 0.0
  %562 = vmatprep.subr.mxu0 0.0
  %563 = vmatpush1.msra.mxu0 0.0
  %564 = vmatprep.subr.mxu0 0.0
  %565 = vmatpush1.msra.mxu0 0.0
  %566 = vmatprep.subr.mxu0 0.0
  %567 = vmatpush1.msra.mxu0 0.0
  %568 = vmatprep.subr.mxu0 0.0
  %569 = vmatpush1.msra.mxu0 0.0
  %570 = vmatprep.subr.mxu0 0.0
  %571 = vmatpush1.msra.mxu0 0.0
  %572 = vmatprep.subr.mxu0 0.0
  %573 = vmatpush1.msra.mxu0 0.0
  %574 = vmatprep.subr.mxu0 0.0
  %575 = vmatpush1.msra.mxu0 0.0
  %576 = vmatprep.subr.mxu0 0.0
  %577 = vmatpush1.msra.mxu0 0.0
  %578 = vmatprep.mubr.f32.mxu0 0.0
  %579 = vmatmul.mubr.f32.gmra.mrb[0].mxu0 %v441
  %v580 = vpop.f32.mrb[0].mxu0
  %v581 = vadd.f32 0.0, %v580
  %v582 = vpop.f32.mrb[0].mxu0
  %v583 = vadd.f32 0.0, %v582
  %584 = vdwg.mxu0
  %v589 = vcombine.low %v510, %v512
  %v590 = vcombine.low %v581, %v583
  %v592 = vunpack.c.l.s4 1966171168
  %v593 = vunpack.c.0.s8 %v592
  %v594 = vlaneseq
  %v595 = vshrl.u32 %v594, 7
  %v596 = vsub.s32 %v593, %v595
  %v597 = vrot.slane %v589, %v596
  %v599 = vunpack.c.l.s4 1966171168
  %v600 = vunpack.c.0.s8 %v599
  %v601 = vlaneseq
  %v602 = vshrl.u32 %v601, 7
  %v603 = vsub.s32 %v600, %v602
  %v604 = vrot.slane %v590, %v603
  %v605 = vcombine.low %v597, %v604
  %v606 = vcombine.high %v597, %v604
  %v608 = vunpack.c.l.s4 1966171168
  %v609 = vunpack.c.0.s8 %v608
  %v610 = vlaneseq
  %v611 = vshrl.u32 %v610, 7
  %v612 = vsub.s32 %v609, %v611
  %v613 = vrot.slane %v605, %v612
  %v615 = vunpack.c.l.s4 1966171168
  %v616 = vunpack.c.0.s8 %v615
  %v617 = vlaneseq
  %v618 = vshrl.u32 %v617, 7
  %v619 = vsub.s32 %v616, %v618
  %v620 = vrot.slane %v606, %v619
  %v623 = vadd.f32 %v358, %v613
  %v624 = vadd.f32 %v360, %v620
  %v625 = vxor.u32 %v623, 2147483648
  %v626 = vxor.u32 %v624, 2147483648
  %v627 = vmul.f32 %v625, 1.442695
  %v628 = vpow.pop %v627
  %v629 = vmul.f32 %v626, 1.442695
  %v630 = vpow.pop %v629
  %v631 = vadd.f32 %v628, 1.0
  %v632 = vadd.f32 %v630, 1.0
  %v633 = vrcp.pop %v631
  %v634 = vmul.f32 1.0, %v633
  %v635 = vrcp.pop %v632
  %v636 = vmul.f32 1.0, %v635
  %v639 = vrot.slane %v623, 1
  %v640 = vrot.slane %v624, 1
  %v643 = vxor.u32 %v639, 2147483648
  %v644 = vxor.u32 %v640, 2147483648
  %v645 = vmul.f32 %v643, 1.442695
  %v646 = vpow.pop %v645
  %v647 = vmul.f32 %v644, 1.442695
  %v648 = vpow.pop %v647
  %v649 = vadd.f32 %v646, 1.0
  %v650 = vadd.f32 %v648, 1.0
  %v651 = vrcp.pop %v649
  %v652 = vmul.f32 1.0, %v651
  %v653 = vrcp.pop %v650
  %v654 = vmul.f32 1.0, %v653
  %v655 = vrot.slane %v623, 2
  %v656 = vrot.slane %v624, 2
  %v659 = vtanh.pop %v655
  %v660 = vtanh.pop %v656
  %v661 = vrot.slane %v623, 3
  %v662 = vrot.slane %v624, 3
  %v665 = vxor.u32 %v661, 2147483648
  %v666 = vxor.u32 %v662, 2147483648
  %v667 = vmul.f32 %v665, 1.442695
  %v668 = vpow.pop %v667
  %v669 = vmul.f32 %v666, 1.442695
  %v670 = vpow.pop %v669
  %v671 = vadd.f32 %v668, 1.0
  %v672 = vadd.f32 %v670, 1.0
  %v673 = vrcp.pop %v671
  %v674 = vmul.f32 1.0, %v673
  %v675 = vrcp.pop %v672
  %v676 = vmul.f32 1.0, %v675
  %v677 = vmul.f32 %v652, %v349
  %v678 = vmul.f32 %v654, %v350
  %v679 = vmul.f32 %v634, %v659
  %v680 = vmul.f32 %v636, %v660
  %v681 = vadd.f32 %v677, %v679
  %v682 = vadd.f32 %v678, %v680
  %v683 = vtanh.pop %v681
  %v684 = vtanh.pop %v682
  %v685 = vmul.f32 %v674, %v683
  %v686 = vmul.f32 %v676, %v684
  %687 = vst [vmem:[%s2 + $0x1] sm:$0x1] %v685
  %688 = vst [vmem:[%s2 + $0x9] sm:$0x1] %v686
  %s689 = scalar_lea.vmem %s0, 2
  %v690 = vld [vmem:[%s689] ss:$8 sm:$0xf]
  %s691 = scalar_lea.vmem %s0, 34
  %v692 = vld [vmem:[%s691] ss:$8 sm:$0xf]
  %v693 = vld [vmem:[%s1] sm:$0xff]
  %v694 = vld [vmem:[%s1 + $0x8] sm:$0xff]
  %v695 = vld [vmem:[%s1 + $0x10] sm:$0xff]
  %v696 = vld [vmem:[%s1 + $0x18] sm:$0xff]
  %v697 = vld [vmem:[%s1 + $0x20] sm:$0xff]
  %v698 = vld [vmem:[%s1 + $0x28] sm:$0xff]
  %v699 = vld [vmem:[%s1 + $0x30] sm:$0xff]
  %v700 = vld [vmem:[%s1 + $0x38] sm:$0xff]
  %v701 = vld [vmem:[%s1 + $0x40] sm:$0xff]
  %v702 = vld [vmem:[%s1 + $0x48] sm:$0xff]
  %v703 = vld [vmem:[%s1 + $0x50] sm:$0xff]
  %v704 = vld [vmem:[%s1 + $0x58] sm:$0xff]
  %v705 = vld [vmem:[%s1 + $0x60] sm:$0xff]
  %v706 = vld [vmem:[%s1 + $0x68] sm:$0xff]
  %v707 = vld [vmem:[%s1 + $0x70] sm:$0xff]
  %v708 = vld [vmem:[%s1 + $0x78] sm:$0xff]
  %v709 = vld [vmem:[%s1 + $0x80] sm:$0xff]
  %v710 = vld [vmem:[%s1 + $0x88] sm:$0xff]
  %v711 = vld [vmem:[%s1 + $0x90] sm:$0xff]
  %v712 = vld [vmem:[%s1 + $0x98] sm:$0xff]
  %v713 = vld [vmem:[%s1 + $0xa0] sm:$0xff]
  %v714 = vld [vmem:[%s1 + $0xa8] sm:$0xff]
  %v715 = vld [vmem:[%s1 + $0xb0] sm:$0xff]
  %v716 = vld [vmem:[%s1 + $0xb8] sm:$0xff]
  %v717 = vld [vmem:[%s1 + $0xc0] sm:$0xff]
  %v718 = vld [vmem:[%s1 + $0xc8] sm:$0xff]
  %v719 = vld [vmem:[%s1 + $0xd0] sm:$0xff]
  %v720 = vld [vmem:[%s1 + $0xd8] sm:$0xff]
  %v721 = vld [vmem:[%s1 + $0xe0] sm:$0xff]
  %v722 = vld [vmem:[%s1 + $0xe8] sm:$0xff]
  %v723 = vld [vmem:[%s1 + $0xf0] sm:$0xff]
  %v724 = vld [vmem:[%s1 + $0xf8] sm:$0xff]
  %v725 = vld [vmem:[%s1 + $0x100] sm:$0xff]
  %v726 = vld [vmem:[%s1 + $0x108] sm:$0xff]
  %v727 = vld [vmem:[%s1 + $0x110] sm:$0xff]
  %v728 = vld [vmem:[%s1 + $0x118] sm:$0xff]
  %v729 = vld [vmem:[%s1 + $0x120] sm:$0xff]
  %v730 = vld [vmem:[%s1 + $0x128] sm:$0xff]
  %v731 = vld [vmem:[%s1 + $0x130] sm:$0xff]
  %v732 = vld [vmem:[%s1 + $0x138] sm:$0xff]
  %v733 = vld [vmem:[%s1 + $0x140] sm:$0xff]
  %v734 = vld [vmem:[%s1 + $0x148] sm:$0xff]
  %v735 = vld [vmem:[%s1 + $0x150] sm:$0xff]
  %v736 = vld [vmem:[%s1 + $0x158] sm:$0xff]
  %v737 = vld [vmem:[%s1 + $0x160] sm:$0xff]
  %v738 = vld [vmem:[%s1 + $0x168] sm:$0xff]
  %v739 = vld [vmem:[%s1 + $0x170] sm:$0xff]
  %v740 = vld [vmem:[%s1 + $0x178] sm:$0xff]
  %v741 = vld [vmem:[%s1 + $0x180] sm:$0xff]
  %v742 = vld [vmem:[%s1 + $0x188] sm:$0xff]
  %v743 = vld [vmem:[%s1 + $0x190] sm:$0xff]
  %v744 = vld [vmem:[%s1 + $0x198] sm:$0xff]
  %v745 = vld [vmem:[%s1 + $0x1a0] sm:$0xff]
  %v746 = vld [vmem:[%s1 + $0x1a8] sm:$0xff]
  %v747 = vld [vmem:[%s1 + $0x1b0] sm:$0xff]
  %v748 = vld [vmem:[%s1 + $0x1b8] sm:$0xff]
  %v749 = vld [vmem:[%s1 + $0x1c0] sm:$0xff]
  %v750 = vld [vmem:[%s1 + $0x1c8] sm:$0xff]
  %v751 = vld [vmem:[%s1 + $0x1d0] sm:$0xff]
  %v752 = vld [vmem:[%s1 + $0x1d8] sm:$0xff]
  %v753 = vld [vmem:[%s1 + $0x1e0] sm:$0xff]
  %v754 = vld [vmem:[%s1 + $0x1e8] sm:$0xff]
  %v755 = vld [vmem:[%s1 + $0x1f0] sm:$0xff]
  %v756 = vld [vmem:[%s1 + $0x1f8] sm:$0xff]
  %v759 = vcombine.low %v685, %v686
  %v761 = vunpack.c.l.s4 1966171168
  %v762 = vunpack.c.0.s8 %v761
  %v763 = vlaneseq
  %v764 = vshrl.u32 %v763, 7
  %v765 = vsub.s32 %v762, %v764
  %v766 = vrot.slane %v759, %v765
  %v768 = vunpack.c.l.s4 1966171168
  %v769 = vunpack.c.0.s8 %v768
  %v770 = vlaneseq
  %v771 = vshrl.u32 %v770, 7
  %v772 = vsub.s32 %v769, %v771
  %v773 = vrot.slane %v766, %v772
  %775 = vmatprep.subr.mxu0 %v694
  %776 = vmatpush1.msra.mxu0 %v693
  %777 = vmatprep.subr.mxu0 %v698
  %778 = vmatpush1.msra.mxu0 %v697
  %779 = vmatprep.subr.mxu0 %v702
  %780 = vmatpush1.msra.mxu0 %v701
  %781 = vmatprep.subr.mxu0 %v706
  %782 = vmatpush1.msra.mxu0 %v705
  %783 = vmatprep.subr.mxu0 %v710
  %784 = vmatpush1.msra.mxu0 %v709
  %785 = vmatprep.subr.mxu0 %v714
  %786 = vmatpush1.msra.mxu0 %v713
  %787 = vmatprep.subr.mxu0 %v718
  %788 = vmatpush1.msra.mxu0 %v717
  %789 = vmatprep.subr.mxu0 %v722
  %790 = vmatpush1.msra.mxu0 %v721
  %791 = vmatprep.subr.mxu0 %v726
  %792 = vmatpush1.msra.mxu0 %v725
  %793 = vmatprep.subr.mxu0 %v730
  %794 = vmatpush1.msra.mxu0 %v729
  %795 = vmatprep.subr.mxu0 %v734
  %796 = vmatpush1.msra.mxu0 %v733
  %797 = vmatprep.subr.mxu0 %v738
  %798 = vmatpush1.msra.mxu0 %v737
  %799 = vmatprep.subr.mxu0 %v742
  %800 = vmatpush1.msra.mxu0 %v741
  %801 = vmatprep.subr.mxu0 %v746
  %802 = vmatpush1.msra.mxu0 %v745
  %803 = vmatprep.subr.mxu0 %v750
  %804 = vmatpush1.msra.mxu0 %v749
  %805 = vmatprep.subr.mxu0 %v754
  %806 = vmatpush1.msra.mxu0 %v753
  %807 = vmatprep.subr.mxu0 0.0
  %808 = vmatpush1.msra.mxu0 0.0
  %809 = vmatprep.subr.mxu0 0.0
  %810 = vmatpush1.msra.mxu0 0.0
  %811 = vmatprep.subr.mxu0 0.0
  %812 = vmatpush1.msra.mxu0 0.0
  %813 = vmatprep.subr.mxu0 0.0
  %814 = vmatpush1.msra.mxu0 0.0
  %815 = vmatprep.subr.mxu0 0.0
  %816 = vmatpush1.msra.mxu0 0.0
  %817 = vmatprep.subr.mxu0 0.0
  %818 = vmatpush1.msra.mxu0 0.0
  %819 = vmatprep.subr.mxu0 0.0
  %820 = vmatpush1.msra.mxu0 0.0
  %821 = vmatprep.subr.mxu0 0.0
  %822 = vmatpush1.msra.mxu0 0.0
  %823 = vmatprep.subr.mxu0 0.0
  %824 = vmatpush1.msra.mxu0 0.0
  %825 = vmatprep.subr.mxu0 0.0
  %826 = vmatpush1.msra.mxu0 0.0
  %827 = vmatprep.subr.mxu0 0.0
  %828 = vmatpush1.msra.mxu0 0.0
  %829 = vmatprep.subr.mxu0 0.0
  %830 = vmatpush1.msra.mxu0 0.0
  %831 = vmatprep.subr.mxu0 0.0
  %832 = vmatpush1.msra.mxu0 0.0
  %833 = vmatprep.subr.mxu0 0.0
  %834 = vmatpush1.msra.mxu0 0.0
  %835 = vmatprep.subr.mxu0 0.0
  %836 = vmatpush1.msra.mxu0 0.0
  %837 = vmatprep.subr.mxu0 0.0
  %838 = vmatpush1.msra.mxu0 0.0
  %839 = vmatprep.mubr.f32.mxu0 0.0
  %840 = vmatmul.mubr.f32.gmra.mrb[0].mxu0 %v773
  %v841 = vpop.f32.mrb[0].mxu0
  %v842 = vadd.f32 0.0, %v841
  %v843 = vpop.f32.mrb[0].mxu0
  %v844 = vadd.f32 0.0, %v843
  %845 = vdwg.mxu0
  %846 = vmatprep.subr.mxu0 %v696
  %847 = vmatpush1.msra.mxu0 %v695
  %848 = vmatprep.subr.mxu0 %v700
  %849 = vmatpush1.msra.mxu0 %v699
  %850 = vmatprep.subr.mxu0 %v704
  %851 = vmatpush1.msra.mxu0 %v703
  %852 = vmatprep.subr.mxu0 %v708
  %853 = vmatpush1.msra.mxu0 %v707
  %854 = vmatprep.subr.mxu0 %v712
  %855 = vmatpush1.msra.mxu0 %v711
  %856 = vmatprep.subr.mxu0 %v716
  %857 = vmatpush1.msra.mxu0 %v715
  %858 = vmatprep.subr.mxu0 %v720
  %859 = vmatpush1.msra.mxu0 %v719
  %860 = vmatprep.subr.mxu0 %v724
  %861 = vmatpush1.msra.mxu0 %v723
  %862 = vmatprep.subr.mxu0 %v728
  %863 = vmatpush1.msra.mxu0 %v727
  %864 = vmatprep.subr.mxu0 %v732
  %865 = vmatpush1.msra.mxu0 %v731
  %866 = vmatprep.subr.mxu0 %v736
  %867 = vmatpush1.msra.mxu0 %v735
  %868 = vmatprep.subr.mxu0 %v740
  %869 = vmatpush1.msra.mxu0 %v739
  %870 = vmatprep.subr.mxu0 %v744
  %871 = vmatpush1.msra.mxu0 %v743
  %872 = vmatprep.subr.mxu0 %v748
  %873 = vmatpush1.msra.mxu0 %v747
  %874 = vmatprep.subr.mxu0 %v752
  %875 = vmatpush1.msra.mxu0 %v751
  %876 = vmatprep.subr.mxu0 %v756
  %877 = vmatpush1.msra.mxu0 %v755
  %878 = vmatprep.subr.mxu0 0.0
  %879 = vmatpush1.msra.mxu0 0.0
  %880 = vmatprep.subr.mxu0 0.0
  %881 = vmatpush1.msra.mxu0 0.0
  %882 = vmatprep.subr.mxu0 0.0
  %883 = vmatpush1.msra.mxu0 0.0
  %884 = vmatprep.subr.mxu0 0.0
  %885 = vmatpush1.msra.mxu0 0.0
  %886 = vmatprep.subr.mxu0 0.0
  %887 = vmatpush1.msra.mxu0 0.0
  %888 = vmatprep.subr.mxu0 0.0
  %889 = vmatpush1.msra.mxu0 0.0
  %890 = vmatprep.subr.mxu0 0.0
  %891 = vmatpush1.msra.mxu0 0.0
  %892 = vmatprep.subr.mxu0 0.0
  %893 = vmatpush1.msra.mxu0 0.0
  %894 = vmatprep.subr.mxu0 0.0
  %895 = vmatpush1.msra.mxu0 0.0
  %896 = vmatprep.subr.mxu0 0.0
  %897 = vmatpush1.msra.mxu0 0.0
  %898 = vmatprep.subr.mxu0 0.0
  %899 = vmatpush1.msra.mxu0 0.0
  %900 = vmatprep.subr.mxu0 0.0
  %901 = vmatpush1.msra.mxu0 0.0
  %902 = vmatprep.subr.mxu0 0.0
  %903 = vmatpush1.msra.mxu0 0.0
  %904 = vmatprep.subr.mxu0 0.0
  %905 = vmatpush1.msra.mxu0 0.0
  %906 = vmatprep.subr.mxu0 0.0
  %907 = vmatpush1.msra.mxu0 0.0
  %908 = vmatprep.subr.mxu0 0.0
  %909 = vmatpush1.msra.mxu0 0.0
  %910 = vmatprep.mubr.f32.mxu0 0.0
  %911 = vmatmul.mubr.f32.gmra.mrb[0].mxu0 %v773
  %v912 = vpop.f32.mrb[0].mxu0
  %v913 = vadd.f32 0.0, %v912
  %v914 = vpop.f32.mrb[0].mxu0
  %v915 = vadd.f32 0.0, %v914
  %916 = vdwg.mxu0
  %v921 = vcombine.low %v842, %v844
  %v922 = vcombine.low %v913, %v915
  %v924 = vunpack.c.l.s4 1966171168
  %v925 = vunpack.c.0.s8 %v924
  %v926 = vlaneseq
  %v927 = vshrl.u32 %v926, 7
  %v928 = vsub.s32 %v925, %v927
  %v929 = vrot.slane %v921, %v928
  %v931 = vunpack.c.l.s4 1966171168
  %v932 = vunpack.c.0.s8 %v931
  %v933 = vlaneseq
  %v934 = vshrl.u32 %v933, 7
  %v935 = vsub.s32 %v932, %v934
  %v936 = vrot.slane %v922, %v935
  %v937 = vcombine.low %v929, %v936
  %v938 = vcombine.high %v929, %v936
  %v940 = vunpack.c.l.s4 1966171168
  %v941 = vunpack.c.0.s8 %v940
  %v942 = vlaneseq
  %v943 = vshrl.u32 %v942, 7
  %v944 = vsub.s32 %v941, %v943
  %v945 = vrot.slane %v937, %v944
  %v947 = vunpack.c.l.s4 1966171168
  %v948 = vunpack.c.0.s8 %v947
  %v949 = vlaneseq
  %v950 = vshrl.u32 %v949, 7
  %v951 = vsub.s32 %v948, %v950
  %v952 = vrot.slane %v938, %v951
  %v955 = vadd.f32 %v690, %v945
  %v956 = vadd.f32 %v692, %v952
  %v957 = vxor.u32 %v955, 2147483648
  %v958 = vxor.u32 %v956, 2147483648
  %v959 = vmul.f32 %v957, 1.442695
  %v960 = vpow.pop %v959
  %v961 = vmul.f32 %v958, 1.442695
  %v962 = vpow.pop %v961
  %v963 = vadd.f32 %v960, 1.0
  %v964 = vadd.f32 %v962, 1.0
  %v965 = vrcp.pop %v963
  %v966 = vmul.f32 1.0, %v965
  %v967 = vrcp.pop %v964
  %v968 = vmul.f32 1.0, %v967
  %v971 = vrot.slane %v955, 1
  %v972 = vrot.slane %v956, 1
  %v975 = vxor.u32 %v971, 2147483648
  %v976 = vxor.u32 %v972, 2147483648
  %v977 = vmul.f32 %v975, 1.442695
  %v978 = vpow.pop %v977
  %v979 = vmul.f32 %v976, 1.442695
  %v980 = vpow.pop %v979
  %v981 = vadd.f32 %v978, 1.0
  %v982 = vadd.f32 %v980, 1.0
  %v983 = vrcp.pop %v981
  %v984 = vmul.f32 1.0, %v983
  %v985 = vrcp.pop %v982
  %v986 = vmul.f32 1.0, %v985
  %v987 = vrot.slane %v955, 2
  %v988 = vrot.slane %v956, 2
  %v991 = vtanh.pop %v987
  %v992 = vtanh.pop %v988
  %v993 = vrot.slane %v955, 3
  %v994 = vrot.slane %v956, 3
  %v997 = vxor.u32 %v993, 2147483648
  %v998 = vxor.u32 %v994, 2147483648
  %v999 = vmul.f32 %v997, 1.442695
  %v1000 = vpow.pop %v999
  %v1001 = vmul.f32 %v998, 1.442695
  %v1002 = vpow.pop %v1001
  %v1003 = vadd.f32 %v1000, 1.0
  %v1004 = vadd.f32 %v1002, 1.0
  %v1005 = vrcp.pop %v1003
  %v1006 = vmul.f32 1.0, %v1005
  %v1007 = vrcp.pop %v1004
  %v1008 = vmul.f32 1.0, %v1007
  %v1009 = vmul.f32 %v984, %v681
  %v1010 = vmul.f32 %v986, %v682
  %v1011 = vmul.f32 %v966, %v991
  %v1012 = vmul.f32 %v968, %v992
  %v1013 = vadd.f32 %v1009, %v1011
  %v1014 = vadd.f32 %v1010, %v1012
  %v1015 = vtanh.pop %v1013
  %v1016 = vtanh.pop %v1014
  %v1017 = vmul.f32 %v1006, %v1015
  %v1018 = vmul.f32 %v1008, %v1016
  %1019 = vst [vmem:[%s2 + $0x2] sm:$0x1] %v1017
  %1020 = vst [vmem:[%s2 + $0xa] sm:$0x1] %v1018
  %s1021 = scalar_lea.vmem %s0, 3
  %v1022 = vld [vmem:[%s1021] ss:$8 sm:$0xf]
  %s1023 = scalar_lea.vmem %s0, 35
  %v1024 = vld [vmem:[%s1023] ss:$8 sm:$0xf]
  %v1025 = vld [vmem:[%s1] sm:$0xff]
  %v1026 = vld [vmem:[%s1 + $0x8] sm:$0xff]
  %v1027 = vld [vmem:[%s1 + $0x10] sm:$0xff]
  %v1028 = vld [vmem:[%s1 + $0x18] sm:$0xff]
  %v1029 = vld [vmem:[%s1 + $0x20] sm:$0xff]
  %v1030 = vld [vmem:[%s1 + $0x28] sm:$0xff]
  %v1031 = vld [vmem:[%s1 + $0x30] sm:$0xff]
  %v1032 = vld [vmem:[%s1 + $0x38] sm:$0xff]
  %v1033 = vld [vmem:[%s1 + $0x40] sm:$0xff]
  %v1034 = vld [vmem:[%s1 + $0x48] sm:$0xff]
  %v1035 = vld [vmem:[%s1 + $0x50] sm:$0xff]
  %v1036 = vld [vmem:[%s1 + $0x58] sm:$0xff]
  %v1037 = vld [vmem:[%s1 + $0x60] sm:$0xff]
  %v1038 = vld [vmem:[%s1 + $0x68] sm:$0xff]
  %v1039 = vld [vmem:[%s1 + $0x70] sm:$0xff]
  %v1040 = vld [vmem:[%s1 + $0x78] sm:$0xff]
  %v1041 = vld [vmem:[%s1 + $0x80] sm:$0xff]
  %v1042 = vld [vmem:[%s1 + $0x88] sm:$0xff]
  %v1043 = vld [vmem:[%s1 + $0x90] sm:$0xff]
  %v1044 = vld [vmem:[%s1 + $0x98] sm:$0xff]
  %v1045 = vld [vmem:[%s1 + $0xa0] sm:$0xff]
  %v1046 = vld [vmem:[%s1 + $0xa8] sm:$0xff]
  %v1047 = vld [vmem:[%s1 + $0xb0] sm:$0xff]
  %v1048 = vld [vmem:[%s1 + $0xb8] sm:$0xff]
  %v1049 = vld [vmem:[%s1 + $0xc0] sm:$0xff]
  %v1050 = vld [vmem:[%s1 + $0xc8] sm:$0xff]
  %v1051 = vld [vmem:[%s1 + $0xd0] sm:$0xff]
  %v1052 = vld [vmem:[%s1 + $0xd8] sm:$0xff]
  %v1053 = vld [vmem:[%s1 + $0xe0] sm:$0xff]
  %v1054 = vld [vmem:[%s1 + $0xe8] sm:$0xff]
  %v1055 = vld [vmem:[%s1 + $0xf0] sm:$0xff]
  %v1056 = vld [vmem:[%s1 + $0xf8] sm:$0xff]
  %v1057 = vld [vmem:[%s1 + $0x100] sm:$0xff]
  %v1058 = vld [vmem:[%s1 + $0x108] sm:$0xff]
  %v1059 = vld [vmem:[%s1 + $0x110] sm:$0xff]
  %v1060 = vld [vmem:[%s1 + $0x118] sm:$0xff]
  %v1061 = vld [vmem:[%s1 + $0x120] sm:$0xff]
  %v1062 = vld [vmem:[%s1 + $0x128] sm:$0xff]
  %v1063 = vld [vmem:[%s1 + $0x130] sm:$0xff]
  %v1064 = vld [vmem:[%s1 + $0x138] sm:$0xff]
  %v1065 = vld [vmem:[%s1 + $0x140] sm:$0xff]
  %v1066 = vld [vmem:[%s1 + $0x148] sm:$0xff]
  %v1067 = vld [vmem:[%s1 + $0x150] sm:$0xff]
  %v1068 = vld [vmem:[%s1 + $0x158] sm:$0xff]
  %v1069 = vld [vmem:[%s1 + $0x160] sm:$0xff]
  %v1070 = vld [vmem:[%s1 + $0x168] sm:$0xff]
  %v1071 = vld [vmem:[%s1 + $0x170] sm:$0xff]
  %v1072 = vld [vmem:[%s1 + $0x178] sm:$0xff]
  %v1073 = vld [vmem:[%s1 + $0x180] sm:$0xff]
  %v1074 = vld [vmem:[%s1 + $0x188] sm:$0xff]
  %v1075 = vld [vmem:[%s1 + $0x190] sm:$0xff]
  %v1076 = vld [vmem:[%s1 + $0x198] sm:$0xff]
  %v1077 = vld [vmem:[%s1 + $0x1a0] sm:$0xff]
  %v1078 = vld [vmem:[%s1 + $0x1a8] sm:$0xff]
  %v1079 = vld [vmem:[%s1 + $0x1b0] sm:$0xff]
  %v1080 = vld [vmem:[%s1 + $0x1b8] sm:$0xff]
  %v1081 = vld [vmem:[%s1 + $0x1c0] sm:$0xff]
  %v1082 = vld [vmem:[%s1 + $0x1c8] sm:$0xff]
  %v1083 = vld [vmem:[%s1 + $0x1d0] sm:$0xff]
  %v1084 = vld [vmem:[%s1 + $0x1d8] sm:$0xff]
  %v1085 = vld [vmem:[%s1 + $0x1e0] sm:$0xff]
  %v1086 = vld [vmem:[%s1 + $0x1e8] sm:$0xff]
  %v1087 = vld [vmem:[%s1 + $0x1f0] sm:$0xff]
  %v1088 = vld [vmem:[%s1 + $0x1f8] sm:$0xff]
  %v1091 = vcombine.low %v1017, %v1018
  %v1093 = vunpack.c.l.s4 1966171168
  %v1094 = vunpack.c.0.s8 %v1093
  %v1095 = vlaneseq
  %v1096 = vshrl.u32 %v1095, 7
  %v1097 = vsub.s32 %v1094, %v1096
  %v1098 = vrot.slane %v1091, %v1097
  %v1100 = vunpack.c.l.s4 1966171168
  %v1101 = vunpack.c.0.s8 %v1100
  %v1102 = vlaneseq
  %v1103 = vshrl.u32 %v1102, 7
  %v1104 = vsub.s32 %v1101, %v1103
  %v1105 = vrot.slane %v1098, %v1104
  %1107 = vmatprep.subr.mxu0 %v1026
  %1108 = vmatpush1.msra.mxu0 %v1025
  %1109 = vmatprep.subr.mxu0 %v1030
  %1110 = vmatpush1.msra.mxu0 %v1029
  %1111 = vmatprep.subr.mxu0 %v1034
  %1112 = vmatpush1.msra.mxu0 %v1033
  %1113 = vmatprep.subr.mxu0 %v1038
  %1114 = vmatpush1.msra.mxu0 %v1037
  %1115 = vmatprep.subr.mxu0 %v1042
  %1116 = vmatpush1.msra.mxu0 %v1041
  %1117 = vmatprep.subr.mxu0 %v1046
  %1118 = vmatpush1.msra.mxu0 %v1045
  %1119 = vmatprep.subr.mxu0 %v1050
  %1120 = vmatpush1.msra.mxu0 %v1049
  %1121 = vmatprep.subr.mxu0 %v1054
  %1122 = vmatpush1.msra.mxu0 %v1053
  %1123 = vmatprep.subr.mxu0 %v1058
  %1124 = vmatpush1.msra.mxu0 %v1057
  %1125 = vmatprep.subr.mxu0 %v1062
  %1126 = vmatpush1.msra.mxu0 %v1061
  %1127 = vmatprep.subr.mxu0 %v1066
  %1128 = vmatpush1.msra.mxu0 %v1065
  %1129 = vmatprep.subr.mxu0 %v1070
  %1130 = vmatpush1.msra.mxu0 %v1069
  %1131 = vmatprep.subr.mxu0 %v1074
  %1132 = vmatpush1.msra.mxu0 %v1073
  %1133 = vmatprep.subr.mxu0 %v1078
  %1134 = vmatpush1.msra.mxu0 %v1077
  %1135 = vmatprep.subr.mxu0 %v1082
  %1136 = vmatpush1.msra.mxu0 %v1081
  %1137 = vmatprep.subr.mxu0 %v1086
  %1138 = vmatpush1.msra.mxu0 %v1085
  %1139 = vmatprep.subr.mxu0 0.0
  %1140 = vmatpush1.msra.mxu0 0.0
  %1141 = vmatprep.subr.mxu0 0.0
  %1142 = vmatpush1.msra.mxu0 0.0
  %1143 = vmatprep.subr.mxu0 0.0
  %1144 = vmatpush1.msra.mxu0 0.0
  %1145 = vmatprep.subr.mxu0 0.0
  %1146 = vmatpush1.msra.mxu0 0.0
  %1147 = vmatprep.subr.mxu0 0.0
  %1148 = vmatpush1.msra.mxu0 0.0
  %1149 = vmatprep.subr.mxu0 0.0
  %1150 = vmatpush1.msra.mxu0 0.0
  %1151 = vmatprep.subr.mxu0 0.0
  %1152 = vmatpush1.msra.mxu0 0.0
  %1153 = vmatprep.subr.mxu0 0.0
  %1154 = vmatpush1.msra.mxu0 0.0
  %1155 = vmatprep.subr.mxu0 0.0
  %1156 = vmatpush1.msra.mxu0 0.0
  %1157 = vmatprep.subr.mxu0 0.0
  %1158 = vmatpush1.msra.mxu0 0.0
  %1159 = vmatprep.subr.mxu0 0.0
  %1160 = vmatpush1.msra.mxu0 0.0
  %1161 = vmatprep.subr.mxu0 0.0
  %1162 = vmatpush1.msra.mxu0 0.0
  %1163 = vmatprep.subr.mxu0 0.0
  %1164 = vmatpush1.msra.mxu0 0.0
  %1165 = vmatprep.subr.mxu0 0.0
  %1166 = vmatpush1.msra.mxu0 0.0
  %1167 = vmatprep.subr.mxu0 0.0
  %1168 = vmatpush1.msra.mxu0 0.0
  %1169 = vmatprep.subr.mxu0 0.0
  %1170 = vmatpush1.msra.mxu0 0.0
  %1171 = vmatprep.mubr.f32.mxu0 0.0
  %1172 = vmatmul.mubr.f32.gmra.mrb[0].mxu0 %v1105
  %v1173 = vpop.f32.mrb[0].mxu0
  %v1174 = vadd.f32 0.0, %v1173
  %v1175 = vpop.f32.mrb[0].mxu0
  %v1176 = vadd.f32 0.0, %v1175
  %1177 = vdwg.mxu0
  %1178 = vmatprep.subr.mxu0 %v1028
  %1179 = vmatpush1.msra.mxu0 %v1027
  %1180 = vmatprep.subr.mxu0 %v1032
  %1181 = vmatpush1.msra.mxu0 %v1031
  %1182 = vmatprep.subr.mxu0 %v1036
  %1183 = vmatpush1.msra.mxu0 %v1035
  %1184 = vmatprep.subr.mxu0 %v1040
  %1185 = vmatpush1.msra.mxu0 %v1039
  %1186 = vmatprep.subr.mxu0 %v1044
  %1187 = vmatpush1.msra.mxu0 %v1043
  %1188 = vmatprep.subr.mxu0 %v1048
  %1189 = vmatpush1.msra.mxu0 %v1047
  %1190 = vmatprep.subr.mxu0 %v1052
  %1191 = vmatpush1.msra.mxu0 %v1051
  %1192 = vmatprep.subr.mxu0 %v1056
  %1193 = vmatpush1.msra.mxu0 %v1055
  %1194 = vmatprep.subr.mxu0 %v1060
  %1195 = vmatpush1.msra.mxu0 %v1059
  %1196 = vmatprep.subr.mxu0 %v1064
  %1197 = vmatpush1.msra.mxu0 %v1063
  %1198 = vmatprep.subr.mxu0 %v1068
  %1199 = vmatpush1.msra.mxu0 %v1067
  %1200 = vmatprep.subr.mxu0 %v1072
  %1201 = vmatpush1.msra.mxu0 %v1071
  %1202 = vmatprep.subr.mxu0 %v1076
  %1203 = vmatpush1.msra.mxu0 %v1075
  %1204 = vmatprep.subr.mxu0 %v1080
  %1205 = vmatpush1.msra.mxu0 %v1079
  %1206 = vmatprep.subr.mxu0 %v1084
  %1207 = vmatpush1.msra.mxu0 %v1083
  %1208 = vmatprep.subr.mxu0 %v1088
  %1209 = vmatpush1.msra.mxu0 %v1087
  %1210 = vmatprep.subr.mxu0 0.0
  %1211 = vmatpush1.msra.mxu0 0.0
  %1212 = vmatprep.subr.mxu0 0.0
  %1213 = vmatpush1.msra.mxu0 0.0
  %1214 = vmatprep.subr.mxu0 0.0
  %1215 = vmatpush1.msra.mxu0 0.0
  %1216 = vmatprep.subr.mxu0 0.0
  %1217 = vmatpush1.msra.mxu0 0.0
  %1218 = vmatprep.subr.mxu0 0.0
  %1219 = vmatpush1.msra.mxu0 0.0
  %1220 = vmatprep.subr.mxu0 0.0
  %1221 = vmatpush1.msra.mxu0 0.0
  %1222 = vmatprep.subr.mxu0 0.0
  %1223 = vmatpush1.msra.mxu0 0.0
  %1224 = vmatprep.subr.mxu0 0.0
  %1225 = vmatpush1.msra.mxu0 0.0
  %1226 = vmatprep.subr.mxu0 0.0
  %1227 = vmatpush1.msra.mxu0 0.0
  %1228 = vmatprep.subr.mxu0 0.0
  %1229 = vmatpush1.msra.mxu0 0.0
  %1230 = vmatprep.subr.mxu0 0.0
  %1231 = vmatpush1.msra.mxu0 0.0
  %1232 = vmatprep.subr.mxu0 0.0
  %1233 = vmatpush1.msra.mxu0 0.0
  %1234 = vmatprep.subr.mxu0 0.0
  %1235 = vmatpush1.msra.mxu0 0.0
  %1236 = vmatprep.subr.mxu0 0.0
  %1237 = vmatpush1.msra.mxu0 0.0
  %1238 = vmatprep.subr.mxu0 0.0
  %1239 = vmatpush1.msra.mxu0 0.0
  %1240 = vmatprep.subr.mxu0 0.0
  %1241 = vmatpush1.msra.mxu0 0.0
  %1242 = vmatprep.mubr.f32.mxu0 0.0
  %1243 = vmatmul.mubr.f32.gmra.mrb[0].mxu0 %v1105
  %v1244 = vpop.f32.mrb[0].mxu0
  %v1245 = vadd.f32 0.0, %v1244
  %v1246 = vpop.f32.mrb[0].mxu0
  %v1247 = vadd.f32 0.0, %v1246
  %1248 = vdwg.mxu0
  %v1253 = vcombine.low %v1174, %v1176
  %v1254 = vcombine.low %v1245, %v1247
  %v1256 = vunpack.c.l.s4 1966171168
  %v1257 = vunpack.c.0.s8 %v1256
  %v1258 = vlaneseq
  %v1259 = vshrl.u32 %v1258, 7
  %v1260 = vsub.s32 %v1257, %v1259
  %v1261 = vrot.slane %v1253, %v1260
  %v1263 = vunpack.c.l.s4 1966171168
  %v1264 = vunpack.c.0.s8 %v1263
  %v1265 = vlaneseq
  %v1266 = vshrl.u32 %v1265, 7
  %v1267 = vsub.s32 %v1264, %v1266
  %v1268 = vrot.slane %v1254, %v1267
  %v1269 = vcombine.low %v1261, %v1268
  %v1270 = vcombine.high %v1261, %v1268
  %v1272 = vunpack.c.l.s4 1966171168
  %v1273 = vunpack.c.0.s8 %v1272
  %v1274 = vlaneseq
  %v1275 = vshrl.u32 %v1274, 7
  %v1276 = vsub.s32 %v1273, %v1275
  %v1277 = vrot.slane %v1269, %v1276
  %v1279 = vunpack.c.l.s4 1966171168
  %v1280 = vunpack.c.0.s8 %v1279
  %v1281 = vlaneseq
  %v1282 = vshrl.u32 %v1281, 7
  %v1283 = vsub.s32 %v1280, %v1282
  %v1284 = vrot.slane %v1270, %v1283
  %v1287 = vadd.f32 %v1022, %v1277
  %v1288 = vadd.f32 %v1024, %v1284
  %v1289 = vxor.u32 %v1287, 2147483648
  %v1290 = vxor.u32 %v1288, 2147483648
  %v1291 = vmul.f32 %v1289, 1.442695
  %v1292 = vpow.pop %v1291
  %v1293 = vmul.f32 %v1290, 1.442695
  %v1294 = vpow.pop %v1293
  %v1295 = vadd.f32 %v1292, 1.0
  %v1296 = vadd.f32 %v1294, 1.0
  %v1297 = vrcp.pop %v1295
  %v1298 = vmul.f32 1.0, %v1297
  %v1299 = vrcp.pop %v1296
  %v1300 = vmul.f32 1.0, %v1299
  %v1303 = vrot.slane %v1287, 1
  %v1304 = vrot.slane %v1288, 1
  %v1307 = vxor.u32 %v1303, 2147483648
  %v1308 = vxor.u32 %v1304, 2147483648
  %v1309 = vmul.f32 %v1307, 1.442695
  %v1310 = vpow.pop %v1309
  %v1311 = vmul.f32 %v1308, 1.442695
  %v1312 = vpow.pop %v1311
  %v1313 = vadd.f32 %v1310, 1.0
  %v1314 = vadd.f32 %v1312, 1.0
  %v1315 = vrcp.pop %v1313
  %v1316 = vmul.f32 1.0, %v1315
  %v1317 = vrcp.pop %v1314
  %v1318 = vmul.f32 1.0, %v1317
  %v1319 = vrot.slane %v1287, 2
  %v1320 = vrot.slane %v1288, 2
  %v1323 = vtanh.pop %v1319
  %v1324 = vtanh.pop %v1320
  %v1325 = vrot.slane %v1287, 3
  %v1326 = vrot.slane %v1288, 3
  %v1329 = vxor.u32 %v1325, 2147483648
  %v1330 = vxor.u32 %v1326, 2147483648
  %v1331 = vmul.f32 %v1329, 1.442695
  %v1332 = vpow.pop %v1331
  %v1333 = vmul.f32 %v1330, 1.442695
  %v1334 = vpow.pop %v1333
  %v1335 = vadd.f32 %v1332, 1.0
  %v1336 = vadd.f32 %v1334, 1.0
  %v1337 = vrcp.pop %v1335
  %v1338 = vmul.f32 1.0, %v1337
  %v1339 = vrcp.pop %v1336
  %v1340 = vmul.f32 1.0, %v1339
  %v1341 = vmul.f32 %v1316, %v1013
  %v1342 = vmul.f32 %v1318, %v1014
  %v1343 = vmul.f32 %v1298, %v1323
  %v1344 = vmul.f32 %v1300, %v1324
  %v1345 = vadd.f32 %v1341, %v1343
  %v1346 = vadd.f32 %v1342, %v1344
  %v1347 = vtanh.pop %v1345
  %v1348 = vtanh.pop %v1346
  %v1349 = vmul.f32 %v1338, %v1347
  %v1350 = vmul.f32 %v1340, %v1348
  %1351 = vst [vmem:[%s2 + $0x3] sm:$0x1] %v1349
  %1352 = vst [vmem:[%s2 + $0xb] sm:$0x1] %v1350
  %s1353 = scalar_lea.vmem %s0, 4
  %v1354 = vld [vmem:[%s1353] ss:$8 sm:$0xf]
  %s1355 = scalar_lea.vmem %s0, 36
  %v1356 = vld [vmem:[%s1355] ss:$8 sm:$0xf]
  %v1357 = vld [vmem:[%s1] sm:$0xff]
  %v1358 = vld [vmem:[%s1 + $0x8] sm:$0xff]
  %v1359 = vld [vmem:[%s1 + $0x10] sm:$0xff]
  %v1360 = vld [vmem:[%s1 + $0x18] sm:$0xff]
  %v1361 = vld [vmem:[%s1 + $0x20] sm:$0xff]
  %v1362 = vld [vmem:[%s1 + $0x28] sm:$0xff]
  %v1363 = vld [vmem:[%s1 + $0x30] sm:$0xff]
  %v1364 = vld [vmem:[%s1 + $0x38] sm:$0xff]
  %v1365 = vld [vmem:[%s1 + $0x40] sm:$0xff]
  %v1366 = vld [vmem:[%s1 + $0x48] sm:$0xff]
  %v1367 = vld [vmem:[%s1 + $0x50] sm:$0xff]
  %v1368 = vld [vmem:[%s1 + $0x58] sm:$0xff]
  %v1369 = vld [vmem:[%s1 + $0x60] sm:$0xff]
  %v1370 = vld [vmem:[%s1 + $0x68] sm:$0xff]
  %v1371 = vld [vmem:[%s1 + $0x70] sm:$0xff]
  %v1372 = vld [vmem:[%s1 + $0x78] sm:$0xff]
  %v1373 = vld [vmem:[%s1 + $0x80] sm:$0xff]
  %v1374 = vld [vmem:[%s1 + $0x88] sm:$0xff]
  %v1375 = vld [vmem:[%s1 + $0x90] sm:$0xff]
  %v1376 = vld [vmem:[%s1 + $0x98] sm:$0xff]
  %v1377 = vld [vmem:[%s1 + $0xa0] sm:$0xff]
  %v1378 = vld [vmem:[%s1 + $0xa8] sm:$0xff]
  %v1379 = vld [vmem:[%s1 + $0xb0] sm:$0xff]
  %v1380 = vld [vmem:[%s1 + $0xb8] sm:$0xff]
  %v1381 = vld [vmem:[%s1 + $0xc0] sm:$0xff]
  %v1382 = vld [vmem:[%s1 + $0xc8] sm:$0xff]
  %v1383 = vld [vmem:[%s1 + $0xd0] sm:$0xff]
  %v1384 = vld [vmem:[%s1 + $0xd8] sm:$0xff]
  %v1385 = vld [vmem:[%s1 + $0xe0] sm:$0xff]
  %v1386 = vld [vmem:[%s1 + $0xe8] sm:$0xff]
  %v1387 = vld [vmem:[%s1 + $0xf0] sm:$0xff]
  %v1388 = vld [vmem:[%s1 + $0xf8] sm:$0xff]
  %v1389 = vld [vmem:[%s1 + $0x100] sm:$0xff]
  %v1390 = vld [vmem:[%s1 + $0x108] sm:$0xff]
  %v1391 = vld [vmem:[%s1 + $0x110] sm:$0xff]
  %v1392 = vld [vmem:[%s1 + $0x118] sm:$0xff]
  %v1393 = vld [vmem:[%s1 + $0x120] sm:$0xff]
  %v1394 = vld [vmem:[%s1 + $0x128] sm:$0xff]
  %v1395 = vld [vmem:[%s1 + $0x130] sm:$0xff]
  %v1396 = vld [vmem:[%s1 + $0x138] sm:$0xff]
  %v1397 = vld [vmem:[%s1 + $0x140] sm:$0xff]
  %v1398 = vld [vmem:[%s1 + $0x148] sm:$0xff]
  %v1399 = vld [vmem:[%s1 + $0x150] sm:$0xff]
  %v1400 = vld [vmem:[%s1 + $0x158] sm:$0xff]
  %v1401 = vld [vmem:[%s1 + $0x160] sm:$0xff]
  %v1402 = vld [vmem:[%s1 + $0x168] sm:$0xff]
  %v1403 = vld [vmem:[%s1 + $0x170] sm:$0xff]
  %v1404 = vld [vmem:[%s1 + $0x178] sm:$0xff]
  %v1405 = vld [vmem:[%s1 + $0x180] sm:$0xff]
  %v1406 = vld [vmem:[%s1 + $0x188] sm:$0xff]
  %v1407 = vld [vmem:[%s1 + $0x190] sm:$0xff]
  %v1408 = vld [vmem:[%s1 + $0x198] sm:$0xff]
  %v1409 = vld [vmem:[%s1 + $0x1a0] sm:$0xff]
  %v1410 = vld [vmem:[%s1 + $0x1a8] sm:$0xff]
  %v1411 = vld [vmem:[%s1 + $0x1b0] sm:$0xff]
  %v1412 = vld [vmem:[%s1 + $0x1b8] sm:$0xff]
  %v1413 = vld [vmem:[%s1 + $0x1c0] sm:$0xff]
  %v1414 = vld [vmem:[%s1 + $0x1c8] sm:$0xff]
  %v1415 = vld [vmem:[%s1 + $0x1d0] sm:$0xff]
  %v1416 = vld [vmem:[%s1 + $0x1d8] sm:$0xff]
  %v1417 = vld [vmem:[%s1 + $0x1e0] sm:$0xff]
  %v1418 = vld [vmem:[%s1 + $0x1e8] sm:$0xff]
  %v1419 = vld [vmem:[%s1 + $0x1f0] sm:$0xff]
  %v1420 = vld [vmem:[%s1 + $0x1f8] sm:$0xff]
  %v1423 = vcombine.low %v1349, %v1350
  %v1425 = vunpack.c.l.s4 1966171168
  %v1426 = vunpack.c.0.s8 %v1425
  %v1427 = vlaneseq
  %v1428 = vshrl.u32 %v1427, 7
  %v1429 = vsub.s32 %v1426, %v1428
  %v1430 = vrot.slane %v1423, %v1429
  %v1432 = vunpack.c.l.s4 1966171168
  %v1433 = vunpack.c.0.s8 %v1432
  %v1434 = vlaneseq
  %v1435 = vshrl.u32 %v1434, 7
  %v1436 = vsub.s32 %v1433, %v1435
  %v1437 = vrot.slane %v1430, %v1436
  %1439 = vmatprep.subr.mxu0 %v1358
  %1440 = vmatpush1.msra.mxu0 %v1357
  %1441 = vmatprep.subr.mxu0 %v1362
  %1442 = vmatpush1.msra.mxu0 %v1361
  %1443 = vmatprep.subr.mxu0 %v1366
  %1444 = vmatpush1.msra.mxu0 %v1365
  %1445 = vmatprep.subr.mxu0 %v1370
  %1446 = vmatpush1.msra.mxu0 %v1369
  %1447 = vmatprep.subr.mxu0 %v1374
  %1448 = vmatpush1.msra.mxu0 %v1373
  %1449 = vmatprep.subr.mxu0 %v1378
  %1450 = vmatpush1.msra.mxu0 %v1377
  %1451 = vmatprep.subr.mxu0 %v1382
  %1452 = vmatpush1.msra.mxu0 %v1381
  %1453 = vmatprep.subr.mxu0 %v1386
  %1454 = vmatpush1.msra.mxu0 %v1385
  %1455 = vmatprep.subr.mxu0 %v1390
  %1456 = vmatpush1.msra.mxu0 %v1389
  %1457 = vmatprep.subr.mxu0 %v1394
  %1458 = vmatpush1.msra.mxu0 %v1393
  %1459 = vmatprep.subr.mxu0 %v1398
  %1460 = vmatpush1.msra.mxu0 %v1397
  %1461 = vmatprep.subr.mxu0 %v1402
  %1462 = vmatpush1.msra.mxu0 %v1401
  %1463 = vmatprep.subr.mxu0 %v1406
  %1464 = vmatpush1.msra.mxu0 %v1405
  %1465 = vmatprep.subr.mxu0 %v1410
  %1466 = vmatpush1.msra.mxu0 %v1409
  %1467 = vmatprep.subr.mxu0 %v1414
  %1468 = vmatpush1.msra.mxu0 %v1413
  %1469 = vmatprep.subr.mxu0 %v1418
  %1470 = vmatpush1.msra.mxu0 %v1417
  %1471 = vmatprep.subr.mxu0 0.0
  %1472 = vmatpush1.msra.mxu0 0.0
  %1473 = vmatprep.subr.mxu0 0.0
  %1474 = vmatpush1.msra.mxu0 0.0
  %1475 = vmatprep.subr.mxu0 0.0
  %1476 = vmatpush1.msra.mxu0 0.0
  %1477 = vmatprep.subr.mxu0 0.0
  %1478 = vmatpush1.msra.mxu0 0.0
  %1479 = vmatprep.subr.mxu0 0.0
  %1480 = vmatpush1.msra.mxu0 0.0
  %1481 = vmatprep.subr.mxu0 0.0
  %1482 = vmatpush1.msra.mxu0 0.0
  %1483 = vmatprep.subr.mxu0 0.0
  %1484 = vmatpush1.msra.mxu0 0.0
  %1485 = vmatprep.subr.mxu0 0.0
  %1486 = vmatpush1.msra.mxu0 0.0
  %1487 = vmatprep.subr.mxu0 0.0
  %1488 = vmatpush1.msra.mxu0 0.0
  %1489 = vmatprep.subr.mxu0 0.0
  %1490 = vmatpush1.msra.mxu0 0.0
  %1491 = vmatprep.subr.mxu0 0.0
  %1492 = vmatpush1.msra.mxu0 0.0
  %1493 = vmatprep.subr.mxu0 0.0
  %1494 = vmatpush1.msra.mxu0 0.0
  %1495 = vmatprep.subr.mxu0 0.0
  %1496 = vmatpush1.msra.mxu0 0.0
  %1497 = vmatprep.subr.mxu0 0.0
  %1498 = vmatpush1.msra.mxu0 0.0
  %1499 = vmatprep.subr.mxu0 0.0
  %1500 = vmatpush1.msra.mxu0 0.0
  %1501 = vmatprep.subr.mxu0 0.0
  %1502 = vmatpush1.msra.mxu0 0.0
  %1503 = vmatprep.mubr.f32.mxu0 0.0
  %1504 = vmatmul.mubr.f32.gmra.mrb[0].mxu0 %v1437
  %v1505 = vpop.f32.mrb[0].mxu0
  %v1506 = vadd.f32 0.0, %v1505
  %v1507 = vpop.f32.mrb[0].mxu0
  %v1508 = vadd.f32 0.0, %v1507
  %1509 = vdwg.mxu0
  %1510 = vmatprep.subr.mxu0 %v1360
  %1511 = vmatpush1.msra.mxu0 %v1359
  %1512 = vmatprep.subr.mxu0 %v1364
  %1513 = vmatpush1.msra.mxu0 %v1363
  %1514 = vmatprep.subr.mxu0 %v1368
  %1515 = vmatpush1.msra.mxu0 %v1367
  %1516 = vmatprep.subr.mxu0 %v1372
  %1517 = vmatpush1.msra.mxu0 %v1371
  %1518 = vmatprep.subr.mxu0 %v1376
  %1519 = vmatpush1.msra.mxu0 %v1375
  %1520 = vmatprep.subr.mxu0 %v1380
  %1521 = vmatpush1.msra.mxu0 %v1379
  %1522 = vmatprep.subr.mxu0 %v1384
  %1523 = vmatpush1.msra.mxu0 %v1383
  %1524 = vmatprep.subr.mxu0 %v1388
  %1525 = vmatpush1.msra.mxu0 %v1387
  %1526 = vmatprep.subr.mxu0 %v1392
  %1527 = vmatpush1.msra.mxu0 %v1391
  %1528 = vmatprep.subr.mxu0 %v1396
  %1529 = vmatpush1.msra.mxu0 %v1395
  %1530 = vmatprep.subr.mxu0 %v1400
  %1531 = vmatpush1.msra.mxu0 %v1399
  %1532 = vmatprep.subr.mxu0 %v1404
  %1533 = vmatpush1.msra.mxu0 %v1403
  %1534 = vmatprep.subr.mxu0 %v1408
  %1535 = vmatpush1.msra.mxu0 %v1407
  %1536 = vmatprep.subr.mxu0 %v1412
  %1537 = vmatpush1.msra.mxu0 %v1411
  %1538 = vmatprep.subr.mxu0 %v1416
  %1539 = vmatpush1.msra.mxu0 %v1415
  %1540 = vmatprep.subr.mxu0 %v1420
  %1541 = vmatpush1.msra.mxu0 %v1419
  %1542 = vmatprep.subr.mxu0 0.0
  %1543 = vmatpush1.msra.mxu0 0.0
  %1544 = vmatprep.subr.mxu0 0.0
  %1545 = vmatpush1.msra.mxu0 0.0
  %1546 = vmatprep.subr.mxu0 0.0
  %1547 = vmatpush1.msra.mxu0 0.0
  %1548 = vmatprep.subr.mxu0 0.0
  %1549 = vmatpush1.msra.mxu0 0.0
  %1550 = vmatprep.subr.mxu0 0.0
  %1551 = vmatpush1.msra.mxu0 0.0
  %1552 = vmatprep.subr.mxu0 0.0
  %1553 = vmatpush1.msra.mxu0 0.0
  %1554 = vmatprep.subr.mxu0 0.0
  %1555 = vmatpush1.msra.mxu0 0.0
  %1556 = vmatprep.subr.mxu0 0.0
  %1557 = vmatpush1.msra.mxu0 0.0
  %1558 = vmatprep.subr.mxu0 0.0
  %1559 = vmatpush1.msra.mxu0 0.0
  %1560 = vmatprep.subr.mxu0 0.0
  %1561 = vmatpush1.msra.mxu0 0.0
  %1562 = vmatprep.subr.mxu0 0.0
  %1563 = vmatpush1.msra.mxu0 0.0
  %1564 = vmatprep.subr.mxu0 0.0
  %1565 = vmatpush1.msra.mxu0 0.0
  %1566 = vmatprep.subr.mxu0 0.0
  %1567 = vmatpush1.msra.mxu0 0.0
  %1568 = vmatprep.subr.mxu0 0.0
  %1569 = vmatpush1.msra.mxu0 0.0
  %1570 = vmatprep.subr.mxu0 0.0
  %1571 = vmatpush1.msra.mxu0 0.0
  %1572 = vmatprep.subr.mxu0 0.0
  %1573 = vmatpush1.msra.mxu0 0.0
  %1574 = vmatprep.mubr.f32.mxu0 0.0
  %1575 = vmatmul.mubr.f32.gmra.mrb[0].mxu0 %v1437
  %v1576 = vpop.f32.mrb[0].mxu0
  %v1577 = vadd.f32 0.0, %v1576
  %v1578 = vpop.f32.mrb[0].mxu0
  %v1579 = vadd.f32 0.0, %v1578
  %1580 = vdwg.mxu0
  %v1585 = vcombine.low %v1506, %v1508
  %v1586 = vcombine.low %v1577, %v1579
  %v1588 = vunpack.c.l.s4 1966171168
  %v1589 = vunpack.c.0.s8 %v1588
  %v1590 = vlaneseq
  %v1591 = vshrl.u32 %v1590, 7
  %v1592 = vsub.s32 %v1589, %v1591
  %v1593 = vrot.slane %v1585, %v1592
  %v1595 = vunpack.c.l.s4 1966171168
  %v1596 = vunpack.c.0.s8 %v1595
  %v1597 = vlaneseq
  %v1598 = vshrl.u32 %v1597, 7
  %v1599 = vsub.s32 %v1596, %v1598
  %v1600 = vrot.slane %v1586, %v1599
  %v1601 = vcombine.low %v1593, %v1600
  %v1602 = vcombine.high %v1593, %v1600
  %v1604 = vunpack.c.l.s4 1966171168
  %v1605 = vunpack.c.0.s8 %v1604
  %v1606 = vlaneseq
  %v1607 = vshrl.u32 %v1606, 7
  %v1608 = vsub.s32 %v1605, %v1607
  %v1609 = vrot.slane %v1601, %v1608
  %v1611 = vunpack.c.l.s4 1966171168
  %v1612 = vunpack.c.0.s8 %v1611
  %v1613 = vlaneseq
  %v1614 = vshrl.u32 %v1613, 7
  %v1615 = vsub.s32 %v1612, %v1614
  %v1616 = vrot.slane %v1602, %v1615
  %v1619 = vadd.f32 %v1354, %v1609
  %v1620 = vadd.f32 %v1356, %v1616
  %v1621 = vxor.u32 %v1619, 2147483648
  %v1622 = vxor.u32 %v1620, 2147483648
  %v1623 = vmul.f32 %v1621, 1.442695
  %v1624 = vpow.pop %v1623
  %v1625 = vmul.f32 %v1622, 1.442695
  %v1626 = vpow.pop %v1625
  %v1627 = vadd.f32 %v1624, 1.0
  %v1628 = vadd.f32 %v1626, 1.0
  %v1629 = vrcp.pop %v1627
  %v1630 = vmul.f32 1.0, %v1629
  %v1631 = vrcp.pop %v1628
  %v1632 = vmul.f32 1.0, %v1631
  %v1635 = vrot.slane %v1619, 1
  %v1636 = vrot.slane %v1620, 1
  %v1639 = vxor.u32 %v1635, 2147483648
  %v1640 = vxor.u32 %v1636, 2147483648
  %v1641 = vmul.f32 %v1639, 1.442695
  %v1642 = vpow.pop %v1641
  %v1643 = vmul.f32 %v1640, 1.442695
  %v1644 = vpow.pop %v1643
  %v1645 = vadd.f32 %v1642, 1.0
  %v1646 = vadd.f32 %v1644, 1.0
  %v1647 = vrcp.pop %v1645
  %v1648 = vmul.f32 1.0, %v1647
  %v1649 = vrcp.pop %v1646
  %v1650 = vmul.f32 1.0, %v1649
  %v1651 = vrot.slane %v1619, 2
  %v1652 = vrot.slane %v1620, 2
  %v1655 = vtanh.pop %v1651
  %v1656 = vtanh.pop %v1652
  %v1657 = vrot.slane %v1619, 3
  %v1658 = vrot.slane %v1620, 3
  %v1661 = vxor.u32 %v1657, 2147483648
  %v1662 = vxor.u32 %v1658, 2147483648
  %v1663 = vmul.f32 %v1661, 1.442695
  %v1664 = vpow.pop %v1663
  %v1665 = vmul.f32 %v1662, 1.442695
  %v1666 = vpow.pop %v1665
  %v1667 = vadd.f32 %v1664, 1.0
  %v1668 = vadd.f32 %v1666, 1.0
  %v1669 = vrcp.pop %v1667
  %v1670 = vmul.f32 1.0, %v1669
  %v1671 = vrcp.pop %v1668
  %v1672 = vmul.f32 1.0, %v1671
  %v1673 = vmul.f32 %v1648, %v1345
  %v1674 = vmul.f32 %v1650, %v1346
  %v1675 = vmul.f32 %v1630, %v1655
  %v1676 = vmul.f32 %v1632, %v1656
  %v1677 = vadd.f32 %v1673, %v1675
  %v1678 = vadd.f32 %v1674, %v1676
  %v1679 = vtanh.pop %v1677
  %v1680 = vtanh.pop %v1678
  %v1681 = vmul.f32 %v1670, %v1679
  %v1682 = vmul.f32 %v1672, %v1680
  %1683 = vst [vmem:[%s2 + $0x4] sm:$0x1] %v1681
  %1684 = vst [vmem:[%s2 + $0xc] sm:$0x1] %v1682
  %s1685 = scalar_lea.vmem %s0, 5
  %v1686 = vld [vmem:[%s1685] ss:$8 sm:$0xf]
  %s1687 = scalar_lea.vmem %s0, 37
  %v1688 = vld [vmem:[%s1687] ss:$8 sm:$0xf]
  %v1689 = vld [vmem:[%s1] sm:$0xff]
  %v1690 = vld [vmem:[%s1 + $0x8] sm:$0xff]
  %v1691 = vld [vmem:[%s1 + $0x10] sm:$0xff]
  %v1692 = vld [vmem:[%s1 + $0x18] sm:$0xff]
  %v1693 = vld [vmem:[%s1 + $0x20] sm:$0xff]
  %v1694 = vld [vmem:[%s1 + $0x28] sm:$0xff]
  %v1695 = vld [vmem:[%s1 + $0x30] sm:$0xff]
  %v1696 = vld [vmem:[%s1 + $0x38] sm:$0xff]
  %v1697 = vld [vmem:[%s1 + $0x40] sm:$0xff]
  %v1698 = vld [vmem:[%s1 + $0x48] sm:$0xff]
  %v1699 = vld [vmem:[%s1 + $0x50] sm:$0xff]
  %v1700 = vld [vmem:[%s1 + $0x58] sm:$0xff]
  %v1701 = vld [vmem:[%s1 + $0x60] sm:$0xff]
  %v1702 = vld [vmem:[%s1 + $0x68] sm:$0xff]
  %v1703 = vld [vmem:[%s1 + $0x70] sm:$0xff]
  %v1704 = vld [vmem:[%s1 + $0x78] sm:$0xff]
  %v1705 = vld [vmem:[%s1 + $0x80] sm:$0xff]
  %v1706 = vld [vmem:[%s1 + $0x88] sm:$0xff]
  %v1707 = vld [vmem:[%s1 + $0x90] sm:$0xff]
  %v1708 = vld [vmem:[%s1 + $0x98] sm:$0xff]
  %v1709 = vld [vmem:[%s1 + $0xa0] sm:$0xff]
  %v1710 = vld [vmem:[%s1 + $0xa8] sm:$0xff]
  %v1711 = vld [vmem:[%s1 + $0xb0] sm:$0xff]
  %v1712 = vld [vmem:[%s1 + $0xb8] sm:$0xff]
  %v1713 = vld [vmem:[%s1 + $0xc0] sm:$0xff]
  %v1714 = vld [vmem:[%s1 + $0xc8] sm:$0xff]
  %v1715 = vld [vmem:[%s1 + $0xd0] sm:$0xff]
  %v1716 = vld [vmem:[%s1 + $0xd8] sm:$0xff]
  %v1717 = vld [vmem:[%s1 + $0xe0] sm:$0xff]
  %v1718 = vld [vmem:[%s1 + $0xe8] sm:$0xff]
  %v1719 = vld [vmem:[%s1 + $0xf0] sm:$0xff]
  %v1720 = vld [vmem:[%s1 + $0xf8] sm:$0xff]
  %v1721 = vld [vmem:[%s1 + $0x100] sm:$0xff]
  %v1722 = vld [vmem:[%s1 + $0x108] sm:$0xff]
  %v1723 = vld [vmem:[%s1 + $0x110] sm:$0xff]
  %v1724 = vld [vmem:[%s1 + $0x118] sm:$0xff]
  %v1725 = vld [vmem:[%s1 + $0x120] sm:$0xff]
  %v1726 = vld [vmem:[%s1 + $0x128] sm:$0xff]
  %v1727 = vld [vmem:[%s1 + $0x130] sm:$0xff]
  %v1728 = vld [vmem:[%s1 + $0x138] sm:$0xff]
  %v1729 = vld [vmem:[%s1 + $0x140] sm:$0xff]
  %v1730 = vld [vmem:[%s1 + $0x148] sm:$0xff]
  %v1731 = vld [vmem:[%s1 + $0x150] sm:$0xff]
  %v1732 = vld [vmem:[%s1 + $0x158] sm:$0xff]
  %v1733 = vld [vmem:[%s1 + $0x160] sm:$0xff]
  %v1734 = vld [vmem:[%s1 + $0x168] sm:$0xff]
  %v1735 = vld [vmem:[%s1 + $0x170] sm:$0xff]
  %v1736 = vld [vmem:[%s1 + $0x178] sm:$0xff]
  %v1737 = vld [vmem:[%s1 + $0x180] sm:$0xff]
  %v1738 = vld [vmem:[%s1 + $0x188] sm:$0xff]
  %v1739 = vld [vmem:[%s1 + $0x190] sm:$0xff]
  %v1740 = vld [vmem:[%s1 + $0x198] sm:$0xff]
  %v1741 = vld [vmem:[%s1 + $0x1a0] sm:$0xff]
  %v1742 = vld [vmem:[%s1 + $0x1a8] sm:$0xff]
  %v1743 = vld [vmem:[%s1 + $0x1b0] sm:$0xff]
  %v1744 = vld [vmem:[%s1 + $0x1b8] sm:$0xff]
  %v1745 = vld [vmem:[%s1 + $0x1c0] sm:$0xff]
  %v1746 = vld [vmem:[%s1 + $0x1c8] sm:$0xff]
  %v1747 = vld [vmem:[%s1 + $0x1d0] sm:$0xff]
  %v1748 = vld [vmem:[%s1 + $0x1d8] sm:$0xff]
  %v1749 = vld [vmem:[%s1 + $0x1e0] sm:$0xff]
  %v1750 = vld [vmem:[%s1 + $0x1e8] sm:$0xff]
  %v1751 = vld [vmem:[%s1 + $0x1f0] sm:$0xff]
  %v1752 = vld [vmem:[%s1 + $0x1f8] sm:$0xff]
  %v1755 = vcombine.low %v1681, %v1682
  %v1757 = vunpack.c.l.s4 1966171168
  %v1758 = vunpack.c.0.s8 %v1757
  %v1759 = vlaneseq
  %v1760 = vshrl.u32 %v1759, 7
  %v1761 = vsub.s32 %v1758, %v1760
  %v1762 = vrot.slane %v1755, %v1761
  %v1764 = vunpack.c.l.s4 1966171168
  %v1765 = vunpack.c.0.s8 %v1764
  %v1766 = vlaneseq
  %v1767 = vshrl.u32 %v1766, 7
  %v1768 = vsub.s32 %v1765, %v1767
  %v1769 = vrot.slane %v1762, %v1768
  %1771 = vmatprep.subr.mxu0 %v1690
  %1772 = vmatpush1.msra.mxu0 %v1689
  %1773 = vmatprep.subr.mxu0 %v1694
  %1774 = vmatpush1.msra.mxu0 %v1693
  %1775 = vmatprep.subr.mxu0 %v1698
  %1776 = vmatpush1.msra.mxu0 %v1697
  %1777 = vmatprep.subr.mxu0 %v1702
  %1778 = vmatpush1.msra.mxu0 %v1701
  %1779 = vmatprep.subr.mxu0 %v1706
  %1780 = vmatpush1.msra.mxu0 %v1705
  %1781 = vmatprep.subr.mxu0 %v1710
  %1782 = vmatpush1.msra.mxu0 %v1709
  %1783 = vmatprep.subr.mxu0 %v1714
  %1784 = vmatpush1.msra.mxu0 %v1713
  %1785 = vmatprep.subr.mxu0 %v1718
  %1786 = vmatpush1.msra.mxu0 %v1717
  %1787 = vmatprep.subr.mxu0 %v1722
  %1788 = vmatpush1.msra.mxu0 %v1721
  %1789 = vmatprep.subr.mxu0 %v1726
  %1790 = vmatpush1.msra.mxu0 %v1725
  %1791 = vmatprep.subr.mxu0 %v1730
  %1792 = vmatpush1.msra.mxu0 %v1729
  %1793 = vmatprep.subr.mxu0 %v1734
  %1794 = vmatpush1.msra.mxu0 %v1733
  %1795 = vmatprep.subr.mxu0 %v1738
  %1796 = vmatpush1.msra.mxu0 %v1737
  %1797 = vmatprep.subr.mxu0 %v1742
  %1798 = vmatpush1.msra.mxu0 %v1741
  %1799 = vmatprep.subr.mxu0 %v1746
  %1800 = vmatpush1.msra.mxu0 %v1745
  %1801 = vmatprep.subr.mxu0 %v1750
  %1802 = vmatpush1.msra.mxu0 %v1749
  %1803 = vmatprep.subr.mxu0 0.0
  %1804 = vmatpush1.msra.mxu0 0.0
  %1805 = vmatprep.subr.mxu0 0.0
  %1806 = vmatpush1.msra.mxu0 0.0
  %1807 = vmatprep.subr.mxu0 0.0
  %1808 = vmatpush1.msra.mxu0 0.0
  %1809 = vmatprep.subr.mxu0 0.0
  %1810 = vmatpush1.msra.mxu0 0.0
  %1811 = vmatprep.subr.mxu0 0.0
  %1812 = vmatpush1.msra.mxu0 0.0
  %1813 = vmatprep.subr.mxu0 0.0
  %1814 = vmatpush1.msra.mxu0 0.0
  %1815 = vmatprep.subr.mxu0 0.0
  %1816 = vmatpush1.msra.mxu0 0.0
  %1817 = vmatprep.subr.mxu0 0.0
  %1818 = vmatpush1.msra.mxu0 0.0
  %1819 = vmatprep.subr.mxu0 0.0
  %1820 = vmatpush1.msra.mxu0 0.0
  %1821 = vmatprep.subr.mxu0 0.0
  %1822 = vmatpush1.msra.mxu0 0.0
  %1823 = vmatprep.subr.mxu0 0.0
  %1824 = vmatpush1.msra.mxu0 0.0
  %1825 = vmatprep.subr.mxu0 0.0
  %1826 = vmatpush1.msra.mxu0 0.0
  %1827 = vmatprep.subr.mxu0 0.0
  %1828 = vmatpush1.msra.mxu0 0.0
  %1829 = vmatprep.subr.mxu0 0.0
  %1830 = vmatpush1.msra.mxu0 0.0
  %1831 = vmatprep.subr.mxu0 0.0
  %1832 = vmatpush1.msra.mxu0 0.0
  %1833 = vmatprep.subr.mxu0 0.0
  %1834 = vmatpush1.msra.mxu0 0.0
  %1835 = vmatprep.mubr.f32.mxu0 0.0
  %1836 = vmatmul.mubr.f32.gmra.mrb[0].mxu0 %v1769
  %v1837 = vpop.f32.mrb[0].mxu0
  %v1838 = vadd.f32 0.0, %v1837
  %v1839 = vpop.f32.mrb[0].mxu0
  %v1840 = vadd.f32 0.0, %v1839
  %1841 = vdwg.mxu0
  %1842 = vmatprep.subr.mxu0 %v1692
  %1843 = vmatpush1.msra.mxu0 %v1691
  %1844 = vmatprep.subr.mxu0 %v1696
  %1845 = vmatpush1.msra.mxu0 %v1695
  %1846 = vmatprep.subr.mxu0 %v1700
  %1847 = vmatpush1.msra.mxu0 %v1699
  %1848 = vmatprep.subr.mxu0 %v1704
  %1849 = vmatpush1.msra.mxu0 %v1703
  %1850 = vmatprep.subr.mxu0 %v1708
  %1851 = vmatpush1.msra.mxu0 %v1707
  %1852 = vmatprep.subr.mxu0 %v1712
  %1853 = vmatpush1.msra.mxu0 %v1711
  %1854 = vmatprep.subr.mxu0 %v1716
  %1855 = vmatpush1.msra.mxu0 %v1715
  %1856 = vmatprep.subr.mxu0 %v1720
  %1857 = vmatpush1.msra.mxu0 %v1719
  %1858 = vmatprep.subr.mxu0 %v1724
  %1859 = vmatpush1.msra.mxu0 %v1723
  %1860 = vmatprep.subr.mxu0 %v1728
  %1861 = vmatpush1.msra.mxu0 %v1727
  %1862 = vmatprep.subr.mxu0 %v1732
  %1863 = vmatpush1.msra.mxu0 %v1731
  %1864 = vmatprep.subr.mxu0 %v1736
  %1865 = vmatpush1.msra.mxu0 %v1735
  %1866 = vmatprep.subr.mxu0 %v1740
  %1867 = vmatpush1.msra.mxu0 %v1739
  %1868 = vmatprep.subr.mxu0 %v1744
  %1869 = vmatpush1.msra.mxu0 %v1743
  %1870 = vmatprep.subr.mxu0 %v1748
  %1871 = vmatpush1.msra.mxu0 %v1747
  %1872 = vmatprep.subr.mxu0 %v1752
  %1873 = vmatpush1.msra.mxu0 %v1751
  %1874 = vmatprep.subr.mxu0 0.0
  %1875 = vmatpush1.msra.mxu0 0.0
  %1876 = vmatprep.subr.mxu0 0.0
  %1877 = vmatpush1.msra.mxu0 0.0
  %1878 = vmatprep.subr.mxu0 0.0
  %1879 = vmatpush1.msra.mxu0 0.0
  %1880 = vmatprep.subr.mxu0 0.0
  %1881 = vmatpush1.msra.mxu0 0.0
  %1882 = vmatprep.subr.mxu0 0.0
  %1883 = vmatpush1.msra.mxu0 0.0
  %1884 = vmatprep.subr.mxu0 0.0
  %1885 = vmatpush1.msra.mxu0 0.0
  %1886 = vmatprep.subr.mxu0 0.0
  %1887 = vmatpush1.msra.mxu0 0.0
  %1888 = vmatprep.subr.mxu0 0.0
  %1889 = vmatpush1.msra.mxu0 0.0
  %1890 = vmatprep.subr.mxu0 0.0
  %1891 = vmatpush1.msra.mxu0 0.0
  %1892 = vmatprep.subr.mxu0 0.0
  %1893 = vmatpush1.msra.mxu0 0.0
  %1894 = vmatprep.subr.mxu0 0.0
  %1895 = vmatpush1.msra.mxu0 0.0
  %1896 = vmatprep.subr.mxu0 0.0
  %1897 = vmatpush1.msra.mxu0 0.0
  %1898 = vmatprep.subr.mxu0 0.0
  %1899 = vmatpush1.msra.mxu0 0.0
  %1900 = vmatprep.subr.mxu0 0.0
  %1901 = vmatpush1.msra.mxu0 0.0
  %1902 = vmatprep.subr.mxu0 0.0
  %1903 = vmatpush1.msra.mxu0 0.0
  %1904 = vmatprep.subr.mxu0 0.0
  %1905 = vmatpush1.msra.mxu0 0.0
  %1906 = vmatprep.mubr.f32.mxu0 0.0
  %1907 = vmatmul.mubr.f32.gmra.mrb[0].mxu0 %v1769
  %v1908 = vpop.f32.mrb[0].mxu0
  %v1909 = vadd.f32 0.0, %v1908
  %v1910 = vpop.f32.mrb[0].mxu0
  %v1911 = vadd.f32 0.0, %v1910
  %1912 = vdwg.mxu0
  %v1917 = vcombine.low %v1838, %v1840
  %v1918 = vcombine.low %v1909, %v1911
  %v1920 = vunpack.c.l.s4 1966171168
  %v1921 = vunpack.c.0.s8 %v1920
  %v1922 = vlaneseq
  %v1923 = vshrl.u32 %v1922, 7
  %v1924 = vsub.s32 %v1921, %v1923
  %v1925 = vrot.slane %v1917, %v1924
  %v1927 = vunpack.c.l.s4 1966171168
  %v1928 = vunpack.c.0.s8 %v1927
  %v1929 = vlaneseq
  %v1930 = vshrl.u32 %v1929, 7
  %v1931 = vsub.s32 %v1928, %v1930
  %v1932 = vrot.slane %v1918, %v1931
  %v1933 = vcombine.low %v1925, %v1932
  %v1934 = vcombine.high %v1925, %v1932
  %v1936 = vunpack.c.l.s4 1966171168
  %v1937 = vunpack.c.0.s8 %v1936
  %v1938 = vlaneseq
  %v1939 = vshrl.u32 %v1938, 7
  %v1940 = vsub.s32 %v1937, %v1939
  %v1941 = vrot.slane %v1933, %v1940
  %v1943 = vunpack.c.l.s4 1966171168
  %v1944 = vunpack.c.0.s8 %v1943
  %v1945 = vlaneseq
  %v1946 = vshrl.u32 %v1945, 7
  %v1947 = vsub.s32 %v1944, %v1946
  %v1948 = vrot.slane %v1934, %v1947
  %v1951 = vadd.f32 %v1686, %v1941
  %v1952 = vadd.f32 %v1688, %v1948
  %v1953 = vxor.u32 %v1951, 2147483648
  %v1954 = vxor.u32 %v1952, 2147483648
  %v1955 = vmul.f32 %v1953, 1.442695
  %v1956 = vpow.pop %v1955
  %v1957 = vmul.f32 %v1954, 1.442695
  %v1958 = vpow.pop %v1957
  %v1959 = vadd.f32 %v1956, 1.0
  %v1960 = vadd.f32 %v1958, 1.0
  %v1961 = vrcp.pop %v1959
  %v1962 = vmul.f32 1.0, %v1961
  %v1963 = vrcp.pop %v1960
  %v1964 = vmul.f32 1.0, %v1963
  %v1967 = vrot.slane %v1951, 1
  %v1968 = vrot.slane %v1952, 1
  %v1971 = vxor.u32 %v1967, 2147483648
  %v1972 = vxor.u32 %v1968, 2147483648
  %v1973 = vmul.f32 %v1971, 1.442695
  %v1974 = vpow.pop %v1973
  %v1975 = vmul.f32 %v1972, 1.442695
  %v1976 = vpow.pop %v1975
  %v1977 = vadd.f32 %v1974, 1.0
  %v1978 = vadd.f32 %v1976, 1.0
  %v1979 = vrcp.pop %v1977
  %v1980 = vmul.f32 1.0, %v1979
  %v1981 = vrcp.pop %v1978
  %v1982 = vmul.f32 1.0, %v1981
  %v1983 = vrot.slane %v1951, 2
  %v1984 = vrot.slane %v1952, 2
  %v1987 = vtanh.pop %v1983
  %v1988 = vtanh.pop %v1984
  %v1989 = vrot.slane %v1951, 3
  %v1990 = vrot.slane %v1952, 3
  %v1993 = vxor.u32 %v1989, 2147483648
  %v1994 = vxor.u32 %v1990, 2147483648
  %v1995 = vmul.f32 %v1993, 1.442695
  %v1996 = vpow.pop %v1995
  %v1997 = vmul.f32 %v1994, 1.442695
  %v1998 = vpow.pop %v1997
  %v1999 = vadd.f32 %v1996, 1.0
  %v2000 = vadd.f32 %v1998, 1.0
  %v2001 = vrcp.pop %v1999
  %v2002 = vmul.f32 1.0, %v2001
  %v2003 = vrcp.pop %v2000
  %v2004 = vmul.f32 1.0, %v2003
  %v2005 = vmul.f32 %v1980, %v1677
  %v2006 = vmul.f32 %v1982, %v1678
  %v2007 = vmul.f32 %v1962, %v1987
  %v2008 = vmul.f32 %v1964, %v1988
  %v2009 = vadd.f32 %v2005, %v2007
  %v2010 = vadd.f32 %v2006, %v2008
  %v2011 = vtanh.pop %v2009
  %v2012 = vtanh.pop %v2010
  %v2013 = vmul.f32 %v2002, %v2011
  %v2014 = vmul.f32 %v2004, %v2012
  %2015 = vst [vmem:[%s2 + $0x5] sm:$0x1] %v2013
  %2016 = vst [vmem:[%s2 + $0xd] sm:$0x1] %v2014
  %s2017 = scalar_lea.vmem %s0, 6
  %v2018 = vld [vmem:[%s2017] ss:$8 sm:$0xf]
  %s2019 = scalar_lea.vmem %s0, 38
  %v2020 = vld [vmem:[%s2019] ss:$8 sm:$0xf]
  %v2021 = vld [vmem:[%s1] sm:$0xff]
  %v2022 = vld [vmem:[%s1 + $0x8] sm:$0xff]
  %v2023 = vld [vmem:[%s1 + $0x10] sm:$0xff]
  %v2024 = vld [vmem:[%s1 + $0x18] sm:$0xff]
  %v2025 = vld [vmem:[%s1 + $0x20] sm:$0xff]
  %v2026 = vld [vmem:[%s1 + $0x28] sm:$0xff]
  %v2027 = vld [vmem:[%s1 + $0x30] sm:$0xff]
  %v2028 = vld [vmem:[%s1 + $0x38] sm:$0xff]
  %v2029 = vld [vmem:[%s1 + $0x40] sm:$0xff]
  %v2030 = vld [vmem:[%s1 + $0x48] sm:$0xff]
  %v2031 = vld [vmem:[%s1 + $0x50] sm:$0xff]
  %v2032 = vld [vmem:[%s1 + $0x58] sm:$0xff]
  %v2033 = vld [vmem:[%s1 + $0x60] sm:$0xff]
  %v2034 = vld [vmem:[%s1 + $0x68] sm:$0xff]
  %v2035 = vld [vmem:[%s1 + $0x70] sm:$0xff]
  %v2036 = vld [vmem:[%s1 + $0x78] sm:$0xff]
  %v2037 = vld [vmem:[%s1 + $0x80] sm:$0xff]
  %v2038 = vld [vmem:[%s1 + $0x88] sm:$0xff]
  %v2039 = vld [vmem:[%s1 + $0x90] sm:$0xff]
  %v2040 = vld [vmem:[%s1 + $0x98] sm:$0xff]
  %v2041 = vld [vmem:[%s1 + $0xa0] sm:$0xff]
  %v2042 = vld [vmem:[%s1 + $0xa8] sm:$0xff]
  %v2043 = vld [vmem:[%s1 + $0xb0] sm:$0xff]
  %v2044 = vld [vmem:[%s1 + $0xb8] sm:$0xff]
  %v2045 = vld [vmem:[%s1 + $0xc0] sm:$0xff]
  %v2046 = vld [vmem:[%s1 + $0xc8] sm:$0xff]
  %v2047 = vld [vmem:[%s1 + $0xd0] sm:$0xff]
  %v2048 = vld [vmem:[%s1 + $0xd8] sm:$0xff]
  %v2049 = vld [vmem:[%s1 + $0xe0] sm:$0xff]
  %v2050 = vld [vmem:[%s1 + $0xe8] sm:$0xff]
  %v2051 = vld [vmem:[%s1 + $0xf0] sm:$0xff]
  %v2052 = vld [vmem:[%s1 + $0xf8] sm:$0xff]
  %v2053 = vld [vmem:[%s1 + $0x100] sm:$0xff]
  %v2054 = vld [vmem:[%s1 + $0x108] sm:$0xff]
  %v2055 = vld [vmem:[%s1 + $0x110] sm:$0xff]
  %v2056 = vld [vmem:[%s1 + $0x118] sm:$0xff]
  %v2057 = vld [vmem:[%s1 + $0x120] sm:$0xff]
  %v2058 = vld [vmem:[%s1 + $0x128] sm:$0xff]
  %v2059 = vld [vmem:[%s1 + $0x130] sm:$0xff]
  %v2060 = vld [vmem:[%s1 + $0x138] sm:$0xff]
  %v2061 = vld [vmem:[%s1 + $0x140] sm:$0xff]
  %v2062 = vld [vmem:[%s1 + $0x148] sm:$0xff]
  %v2063 = vld [vmem:[%s1 + $0x150] sm:$0xff]
  %v2064 = vld [vmem:[%s1 + $0x158] sm:$0xff]
  %v2065 = vld [vmem:[%s1 + $0x160] sm:$0xff]
  %v2066 = vld [vmem:[%s1 + $0x168] sm:$0xff]
  %v2067 = vld [vmem:[%s1 + $0x170] sm:$0xff]
  %v2068 = vld [vmem:[%s1 + $0x178] sm:$0xff]
  %v2069 = vld [vmem:[%s1 + $0x180] sm:$0xff]
  %v2070 = vld [vmem:[%s1 + $0x188] sm:$0xff]
  %v2071 = vld [vmem:[%s1 + $0x190] sm:$0xff]
  %v2072 = vld [vmem:[%s1 + $0x198] sm:$0xff]
  %v2073 = vld [vmem:[%s1 + $0x1a0] sm:$0xff]
  %v2074 = vld [vmem:[%s1 + $0x1a8] sm:$0xff]
  %v2075 = vld [vmem:[%s1 + $0x1b0] sm:$0xff]
  %v2076 = vld [vmem:[%s1 + $0x1b8] sm:$0xff]
  %v2077 = vld [vmem:[%s1 + $0x1c0] sm:$0xff]
  %v2078 = vld [vmem:[%s1 + $0x1c8] sm:$0xff]
  %v2079 = vld [vmem:[%s1 + $0x1d0] sm:$0xff]
  %v2080 = vld [vmem:[%s1 + $0x1d8] sm:$0xff]
  %v2081 = vld [vmem:[%s1 + $0x1e0] sm:$0xff]
  %v2082 = vld [vmem:[%s1 + $0x1e8] sm:$0xff]
  %v2083 = vld [vmem:[%s1 + $0x1f0] sm:$0xff]
  %v2084 = vld [vmem:[%s1 + $0x1f8] sm:$0xff]
  %v2087 = vcombine.low %v2013, %v2014
  %v2089 = vunpack.c.l.s4 1966171168
  %v2090 = vunpack.c.0.s8 %v2089
  %v2091 = vlaneseq
  %v2092 = vshrl.u32 %v2091, 7
  %v2093 = vsub.s32 %v2090, %v2092
  %v2094 = vrot.slane %v2087, %v2093
  %v2096 = vunpack.c.l.s4 1966171168
  %v2097 = vunpack.c.0.s8 %v2096
  %v2098 = vlaneseq
  %v2099 = vshrl.u32 %v2098, 7
  %v2100 = vsub.s32 %v2097, %v2099
  %v2101 = vrot.slane %v2094, %v2100
  %2103 = vmatprep.subr.mxu0 %v2022
  %2104 = vmatpush1.msra.mxu0 %v2021
  %2105 = vmatprep.subr.mxu0 %v2026
  %2106 = vmatpush1.msra.mxu0 %v2025
  %2107 = vmatprep.subr.mxu0 %v2030
  %2108 = vmatpush1.msra.mxu0 %v2029
  %2109 = vmatprep.subr.mxu0 %v2034
  %2110 = vmatpush1.msra.mxu0 %v2033
  %2111 = vmatprep.subr.mxu0 %v2038
  %2112 = vmatpush1.msra.mxu0 %v2037
  %2113 = vmatprep.subr.mxu0 %v2042
  %2114 = vmatpush1.msra.mxu0 %v2041
  %2115 = vmatprep.subr.mxu0 %v2046
  %2116 = vmatpush1.msra.mxu0 %v2045
  %2117 = vmatprep.subr.mxu0 %v2050
  %2118 = vmatpush1.msra.mxu0 %v2049
  %2119 = vmatprep.subr.mxu0 %v2054
  %2120 = vmatpush1.msra.mxu0 %v2053
  %2121 = vmatprep.subr.mxu0 %v2058
  %2122 = vmatpush1.msra.mxu0 %v2057
  %2123 = vmatprep.subr.mxu0 %v2062
  %2124 = vmatpush1.msra.mxu0 %v2061
  %2125 = vmatprep.subr.mxu0 %v2066
  %2126 = vmatpush1.msra.mxu0 %v2065
  %2127 = vmatprep.subr.mxu0 %v2070
  %2128 = vmatpush1.msra.mxu0 %v2069
  %2129 = vmatprep.subr.mxu0 %v2074
  %2130 = vmatpush1.msra.mxu0 %v2073
  %2131 = vmatprep.subr.mxu0 %v2078
  %2132 = vmatpush1.msra.mxu0 %v2077
  %2133 = vmatprep.subr.mxu0 %v2082
  %2134 = vmatpush1.msra.mxu0 %v2081
  %2135 = vmatprep.subr.mxu0 0.0
  %2136 = vmatpush1.msra.mxu0 0.0
  %2137 = vmatprep.subr.mxu0 0.0
  %2138 = vmatpush1.msra.mxu0 0.0
  %2139 = vmatprep.subr.mxu0 0.0
  %2140 = vmatpush1.msra.mxu0 0.0
  %2141 = vmatprep.subr.mxu0 0.0
  %2142 = vmatpush1.msra.mxu0 0.0
  %2143 = vmatprep.subr.mxu0 0.0
  %2144 = vmatpush1.msra.mxu0 0.0
  %2145 = vmatprep.subr.mxu0 0.0
  %2146 = vmatpush1.msra.mxu0 0.0
  %2147 = vmatprep.subr.mxu0 0.0
  %2148 = vmatpush1.msra.mxu0 0.0
  %2149 = vmatprep.subr.mxu0 0.0
  %2150 = vmatpush1.msra.mxu0 0.0
  %2151 = vmatprep.subr.mxu0 0.0
  %2152 = vmatpush1.msra.mxu0 0.0
  %2153 = vmatprep.subr.mxu0 0.0
  %2154 = vmatpush1.msra.mxu0 0.0
  %2155 = vmatprep.subr.mxu0 0.0
  %2156 = vmatpush1.msra.mxu0 0.0
  %2157 = vmatprep.subr.mxu0 0.0
  %2158 = vmatpush1.msra.mxu0 0.0
  %2159 = vmatprep.subr.mxu0 0.0
  %2160 = vmatpush1.msra.mxu0 0.0
  %2161 = vmatprep.subr.mxu0 0.0
  %2162 = vmatpush1.msra.mxu0 0.0
  %2163 = vmatprep.subr.mxu0 0.0
  %2164 = vmatpush1.msra.mxu0 0.0
  %2165 = vmatprep.subr.mxu0 0.0
  %2166 = vmatpush1.msra.mxu0 0.0
  %2167 = vmatprep.mubr.f32.mxu0 0.0
  %2168 = vmatmul.mubr.f32.gmra.mrb[0].mxu0 %v2101
  %v2169 = vpop.f32.mrb[0].mxu0
  %v2170 = vadd.f32 0.0, %v2169
  %v2171 = vpop.f32.mrb[0].mxu0
  %v2172 = vadd.f32 0.0, %v2171
  %2173 = vdwg.mxu0
  %2174 = vmatprep.subr.mxu0 %v2024
  %2175 = vmatpush1.msra.mxu0 %v2023
  %2176 = vmatprep.subr.mxu0 %v2028
  %2177 = vmatpush1.msra.mxu0 %v2027
  %2178 = vmatprep.subr.mxu0 %v2032
  %2179 = vmatpush1.msra.mxu0 %v2031
  %2180 = vmatprep.subr.mxu0 %v2036
  %2181 = vmatpush1.msra.mxu0 %v2035
  %2182 = vmatprep.subr.mxu0 %v2040
  %2183 = vmatpush1.msra.mxu0 %v2039
  %2184 = vmatprep.subr.mxu0 %v2044
  %2185 = vmatpush1.msra.mxu0 %v2043
  %2186 = vmatprep.subr.mxu0 %v2048
  %2187 = vmatpush1.msra.mxu0 %v2047
  %2188 = vmatprep.subr.mxu0 %v2052
  %2189 = vmatpush1.msra.mxu0 %v2051
  %2190 = vmatprep.subr.mxu0 %v2056
  %2191 = vmatpush1.msra.mxu0 %v2055
  %2192 = vmatprep.subr.mxu0 %v2060
  %2193 = vmatpush1.msra.mxu0 %v2059
  %2194 = vmatprep.subr.mxu0 %v2064
  %2195 = vmatpush1.msra.mxu0 %v2063
  %2196 = vmatprep.subr.mxu0 %v2068
  %2197 = vmatpush1.msra.mxu0 %v2067
  %2198 = vmatprep.subr.mxu0 %v2072
  %2199 = vmatpush1.msra.mxu0 %v2071
  %2200 = vmatprep.subr.mxu0 %v2076
  %2201 = vmatpush1.msra.mxu0 %v2075
  %2202 = vmatprep.subr.mxu0 %v2080
  %2203 = vmatpush1.msra.mxu0 %v2079
  %2204 = vmatprep.subr.mxu0 %v2084
  %2205 = vmatpush1.msra.mxu0 %v2083
  %2206 = vmatprep.subr.mxu0 0.0
  %2207 = vmatpush1.msra.mxu0 0.0
  %2208 = vmatprep.subr.mxu0 0.0
  %2209 = vmatpush1.msra.mxu0 0.0
  %2210 = vmatprep.subr.mxu0 0.0
  %2211 = vmatpush1.msra.mxu0 0.0
  %2212 = vmatprep.subr.mxu0 0.0
  %2213 = vmatpush1.msra.mxu0 0.0
  %2214 = vmatprep.subr.mxu0 0.0
  %2215 = vmatpush1.msra.mxu0 0.0
  %2216 = vmatprep.subr.mxu0 0.0
  %2217 = vmatpush1.msra.mxu0 0.0
  %2218 = vmatprep.subr.mxu0 0.0
  %2219 = vmatpush1.msra.mxu0 0.0
  %2220 = vmatprep.subr.mxu0 0.0
  %2221 = vmatpush1.msra.mxu0 0.0
  %2222 = vmatprep.subr.mxu0 0.0
  %2223 = vmatpush1.msra.mxu0 0.0
  %2224 = vmatprep.subr.mxu0 0.0
  %2225 = vmatpush1.msra.mxu0 0.0
  %2226 = vmatprep.subr.mxu0 0.0
  %2227 = vmatpush1.msra.mxu0 0.0
  %2228 = vmatprep.subr.mxu0 0.0
  %2229 = vmatpush1.msra.mxu0 0.0
  %2230 = vmatprep.subr.mxu0 0.0
  %2231 = vmatpush1.msra.mxu0 0.0
  %2232 = vmatprep.subr.mxu0 0.0
  %2233 = vmatpush1.msra.mxu0 0.0
  %2234 = vmatprep.subr.mxu0 0.0
  %2235 = vmatpush1.msra.mxu0 0.0
  %2236 = vmatprep.subr.mxu0 0.0
  %2237 = vmatpush1.msra.mxu0 0.0
  %2238 = vmatprep.mubr.f32.mxu0 0.0
  %2239 = vmatmul.mubr.f32.gmra.mrb[0].mxu0 %v2101
  %v2240 = vpop.f32.mrb[0].mxu0
  %v2241 = vadd.f32 0.0, %v2240
  %v2242 = vpop.f32.mrb[0].mxu0
  %v2243 = vadd.f32 0.0, %v2242
  %2244 = vdwg.mxu0
  %v2249 = vcombine.low %v2170, %v2172
  %v2250 = vcombine.low %v2241, %v2243
  %v2252 = vunpack.c.l.s4 1966171168
  %v2253 = vunpack.c.0.s8 %v2252
  %v2254 = vlaneseq
  %v2255 = vshrl.u32 %v2254, 7
  %v2256 = vsub.s32 %v2253, %v2255
  %v2257 = vrot.slane %v2249, %v2256
  %v2259 = vunpack.c.l.s4 1966171168
  %v2260 = vunpack.c.0.s8 %v2259
  %v2261 = vlaneseq
  %v2262 = vshrl.u32 %v2261, 7
  %v2263 = vsub.s32 %v2260, %v2262
  %v2264 = vrot.slane %v2250, %v2263
  %v2265 = vcombine.low %v2257, %v2264
  %v2266 = vcombine.high %v2257, %v2264
  %v2268 = vunpack.c.l.s4 1966171168
  %v2269 = vunpack.c.0.s8 %v2268
  %v2270 = vlaneseq
  %v2271 = vshrl.u32 %v2270, 7
  %v2272 = vsub.s32 %v2269, %v2271
  %v2273 = vrot.slane %v2265, %v2272
  %v2275 = vunpack.c.l.s4 1966171168
  %v2276 = vunpack.c.0.s8 %v2275
  %v2277 = vlaneseq
  %v2278 = vshrl.u32 %v2277, 7
  %v2279 = vsub.s32 %v2276, %v2278
  %v2280 = vrot.slane %v2266, %v2279
  %v2283 = vadd.f32 %v2018, %v2273
  %v2284 = vadd.f32 %v2020, %v2280
  %v2285 = vxor.u32 %v2283, 2147483648
  %v2286 = vxor.u32 %v2284, 2147483648
  %v2287 = vmul.f32 %v2285, 1.442695
  %v2288 = vpow.pop %v2287
  %v2289 = vmul.f32 %v2286, 1.442695
  %v2290 = vpow.pop %v2289
  %v2291 = vadd.f32 %v2288, 1.0
  %v2292 = vadd.f32 %v2290, 1.0
  %v2293 = vrcp.pop %v2291
  %v2294 = vmul.f32 1.0, %v2293
  %v2295 = vrcp.pop %v2292
  %v2296 = vmul.f32 1.0, %v2295
  %v2299 = vrot.slane %v2283, 1
  %v2300 = vrot.slane %v2284, 1
  %v2303 = vxor.u32 %v2299, 2147483648
  %v2304 = vxor.u32 %v2300, 2147483648
  %v2305 = vmul.f32 %v2303, 1.442695
  %v2306 = vpow.pop %v2305
  %v2307 = vmul.f32 %v2304, 1.442695
  %v2308 = vpow.pop %v2307
  %v2309 = vadd.f32 %v2306, 1.0
  %v2310 = vadd.f32 %v2308, 1.0
  %v2311 = vrcp.pop %v2309
  %v2312 = vmul.f32 1.0, %v2311
  %v2313 = vrcp.pop %v2310
  %v2314 = vmul.f32 1.0, %v2313
  %v2315 = vrot.slane %v2283, 2
  %v2316 = vrot.slane %v2284, 2
  %v2319 = vtanh.pop %v2315
  %v2320 = vtanh.pop %v2316
  %v2321 = vrot.slane %v2283, 3
  %v2322 = vrot.slane %v2284, 3
  %v2325 = vxor.u32 %v2321, 2147483648
  %v2326 = vxor.u32 %v2322, 2147483648
  %v2327 = vmul.f32 %v2325, 1.442695
  %v2328 = vpow.pop %v2327
  %v2329 = vmul.f32 %v2326, 1.442695
  %v2330 = vpow.pop %v2329
  %v2331 = vadd.f32 %v2328, 1.0
  %v2332 = vadd.f32 %v2330, 1.0
  %v2333 = vrcp.pop %v2331
  %v2334 = vmul.f32 1.0, %v2333
  %v2335 = vrcp.pop %v2332
  %v2336 = vmul.f32 1.0, %v2335
  %v2337 = vmul.f32 %v2312, %v2009
  %v2338 = vmul.f32 %v2314, %v2010
  %v2339 = vmul.f32 %v2294, %v2319
  %v2340 = vmul.f32 %v2296, %v2320
  %v2341 = vadd.f32 %v2337, %v2339
  %v2342 = vadd.f32 %v2338, %v2340
  %v2343 = vtanh.pop %v2341
  %v2344 = vtanh.pop %v2342
  %v2345 = vmul.f32 %v2334, %v2343
  %v2346 = vmul.f32 %v2336, %v2344
  %2347 = vst [vmem:[%s2 + $0x6] sm:$0x1] %v2345
  %2348 = vst [vmem:[%s2 + $0xe] sm:$0x1] %v2346
  %s2349 = scalar_lea.vmem %s0, 7
  %v2350 = vld [vmem:[%s2349] ss:$8 sm:$0xf]
  %s2351 = scalar_lea.vmem %s0, 39
  %v2352 = vld [vmem:[%s2351] ss:$8 sm:$0xf]
  %v2353 = vld [vmem:[%s1] sm:$0xff]
  %v2354 = vld [vmem:[%s1 + $0x8] sm:$0xff]
  %v2355 = vld [vmem:[%s1 + $0x10] sm:$0xff]
  %v2356 = vld [vmem:[%s1 + $0x18] sm:$0xff]
  %v2357 = vld [vmem:[%s1 + $0x20] sm:$0xff]
  %v2358 = vld [vmem:[%s1 + $0x28] sm:$0xff]
  %v2359 = vld [vmem:[%s1 + $0x30] sm:$0xff]
  %v2360 = vld [vmem:[%s1 + $0x38] sm:$0xff]
  %v2361 = vld [vmem:[%s1 + $0x40] sm:$0xff]
  %v2362 = vld [vmem:[%s1 + $0x48] sm:$0xff]
  %v2363 = vld [vmem:[%s1 + $0x50] sm:$0xff]
  %v2364 = vld [vmem:[%s1 + $0x58] sm:$0xff]
  %v2365 = vld [vmem:[%s1 + $0x60] sm:$0xff]
  %v2366 = vld [vmem:[%s1 + $0x68] sm:$0xff]
  %v2367 = vld [vmem:[%s1 + $0x70] sm:$0xff]
  %v2368 = vld [vmem:[%s1 + $0x78] sm:$0xff]
  %v2369 = vld [vmem:[%s1 + $0x80] sm:$0xff]
  %v2370 = vld [vmem:[%s1 + $0x88] sm:$0xff]
  %v2371 = vld [vmem:[%s1 + $0x90] sm:$0xff]
  %v2372 = vld [vmem:[%s1 + $0x98] sm:$0xff]
  %v2373 = vld [vmem:[%s1 + $0xa0] sm:$0xff]
  %v2374 = vld [vmem:[%s1 + $0xa8] sm:$0xff]
  %v2375 = vld [vmem:[%s1 + $0xb0] sm:$0xff]
  %v2376 = vld [vmem:[%s1 + $0xb8] sm:$0xff]
  %v2377 = vld [vmem:[%s1 + $0xc0] sm:$0xff]
  %v2378 = vld [vmem:[%s1 + $0xc8] sm:$0xff]
  %v2379 = vld [vmem:[%s1 + $0xd0] sm:$0xff]
  %v2380 = vld [vmem:[%s1 + $0xd8] sm:$0xff]
  %v2381 = vld [vmem:[%s1 + $0xe0] sm:$0xff]
  %v2382 = vld [vmem:[%s1 + $0xe8] sm:$0xff]
  %v2383 = vld [vmem:[%s1 + $0xf0] sm:$0xff]
  %v2384 = vld [vmem:[%s1 + $0xf8] sm:$0xff]
  %v2385 = vld [vmem:[%s1 + $0x100] sm:$0xff]
  %v2386 = vld [vmem:[%s1 + $0x108] sm:$0xff]
  %v2387 = vld [vmem:[%s1 + $0x110] sm:$0xff]
  %v2388 = vld [vmem:[%s1 + $0x118] sm:$0xff]
  %v2389 = vld [vmem:[%s1 + $0x120] sm:$0xff]
  %v2390 = vld [vmem:[%s1 + $0x128] sm:$0xff]
  %v2391 = vld [vmem:[%s1 + $0x130] sm:$0xff]
  %v2392 = vld [vmem:[%s1 + $0x138] sm:$0xff]
  %v2393 = vld [vmem:[%s1 + $0x140] sm:$0xff]
  %v2394 = vld [vmem:[%s1 + $0x148] sm:$0xff]
  %v2395 = vld [vmem:[%s1 + $0x150] sm:$0xff]
  %v2396 = vld [vmem:[%s1 + $0x158] sm:$0xff]
  %v2397 = vld [vmem:[%s1 + $0x160] sm:$0xff]
  %v2398 = vld [vmem:[%s1 + $0x168] sm:$0xff]
  %v2399 = vld [vmem:[%s1 + $0x170] sm:$0xff]
  %v2400 = vld [vmem:[%s1 + $0x178] sm:$0xff]
  %v2401 = vld [vmem:[%s1 + $0x180] sm:$0xff]
  %v2402 = vld [vmem:[%s1 + $0x188] sm:$0xff]
  %v2403 = vld [vmem:[%s1 + $0x190] sm:$0xff]
  %v2404 = vld [vmem:[%s1 + $0x198] sm:$0xff]
  %v2405 = vld [vmem:[%s1 + $0x1a0] sm:$0xff]
  %v2406 = vld [vmem:[%s1 + $0x1a8] sm:$0xff]
  %v2407 = vld [vmem:[%s1 + $0x1b0] sm:$0xff]
  %v2408 = vld [vmem:[%s1 + $0x1b8] sm:$0xff]
  %v2409 = vld [vmem:[%s1 + $0x1c0] sm:$0xff]
  %v2410 = vld [vmem:[%s1 + $0x1c8] sm:$0xff]
  %v2411 = vld [vmem:[%s1 + $0x1d0] sm:$0xff]
  %v2412 = vld [vmem:[%s1 + $0x1d8] sm:$0xff]
  %v2413 = vld [vmem:[%s1 + $0x1e0] sm:$0xff]
  %v2414 = vld [vmem:[%s1 + $0x1e8] sm:$0xff]
  %v2415 = vld [vmem:[%s1 + $0x1f0] sm:$0xff]
  %v2416 = vld [vmem:[%s1 + $0x1f8] sm:$0xff]
  %v2419 = vcombine.low %v2345, %v2346
  %v2421 = vunpack.c.l.s4 1966171168
  %v2422 = vunpack.c.0.s8 %v2421
  %v2423 = vlaneseq
  %v2424 = vshrl.u32 %v2423, 7
  %v2425 = vsub.s32 %v2422, %v2424
  %v2426 = vrot.slane %v2419, %v2425
  %v2428 = vunpack.c.l.s4 1966171168
  %v2429 = vunpack.c.0.s8 %v2428
  %v2430 = vlaneseq
  %v2431 = vshrl.u32 %v2430, 7
  %v2432 = vsub.s32 %v2429, %v2431
  %v2433 = vrot.slane %v2426, %v2432
  %2435 = vmatprep.subr.mxu0 %v2354
  %2436 = vmatpush1.msra.mxu0 %v2353
  %2437 = vmatprep.subr.mxu0 %v2358
  %2438 = vmatpush1.msra.mxu0 %v2357
  %2439 = vmatprep.subr.mxu0 %v2362
  %2440 = vmatpush1.msra.mxu0 %v2361
  %2441 = vmatprep.subr.mxu0 %v2366
  %2442 = vmatpush1.msra.mxu0 %v2365
  %2443 = vmatprep.subr.mxu0 %v2370
  %2444 = vmatpush1.msra.mxu0 %v2369
  %2445 = vmatprep.subr.mxu0 %v2374
  %2446 = vmatpush1.msra.mxu0 %v2373
  %2447 = vmatprep.subr.mxu0 %v2378
  %2448 = vmatpush1.msra.mxu0 %v2377
  %2449 = vmatprep.subr.mxu0 %v2382
  %2450 = vmatpush1.msra.mxu0 %v2381
  %2451 = vmatprep.subr.mxu0 %v2386
  %2452 = vmatpush1.msra.mxu0 %v2385
  %2453 = vmatprep.subr.mxu0 %v2390
  %2454 = vmatpush1.msra.mxu0 %v2389
  %2455 = vmatprep.subr.mxu0 %v2394
  %2456 = vmatpush1.msra.mxu0 %v2393
  %2457 = vmatprep.subr.mxu0 %v2398
  %2458 = vmatpush1.msra.mxu0 %v2397
  %2459 = vmatprep.subr.mxu0 %v2402
  %2460 = vmatpush1.msra.mxu0 %v2401
  %2461 = vmatprep.subr.mxu0 %v2406
  %2462 = vmatpush1.msra.mxu0 %v2405
  %2463 = vmatprep.subr.mxu0 %v2410
  %2464 = vmatpush1.msra.mxu0 %v2409
  %2465 = vmatprep.subr.mxu0 %v2414
  %2466 = vmatpush1.msra.mxu0 %v2413
  %2467 = vmatprep.subr.mxu0 0.0
  %2468 = vmatpush1.msra.mxu0 0.0
  %2469 = vmatprep.subr.mxu0 0.0
  %2470 = vmatpush1.msra.mxu0 0.0
  %2471 = vmatprep.subr.mxu0 0.0
  %2472 = vmatpush1.msra.mxu0 0.0
  %2473 = vmatprep.subr.mxu0 0.0
  %2474 = vmatpush1.msra.mxu0 0.0
  %2475 = vmatprep.subr.mxu0 0.0
  %2476 = vmatpush1.msra.mxu0 0.0
  %2477 = vmatprep.subr.mxu0 0.0
  %2478 = vmatpush1.msra.mxu0 0.0
  %2479 = vmatprep.subr.mxu0 0.0
  %2480 = vmatpush1.msra.mxu0 0.0
  %2481 = vmatprep.subr.mxu0 0.0
  %2482 = vmatpush1.msra.mxu0 0.0
  %2483 = vmatprep.subr.mxu0 0.0
  %2484 = vmatpush1.msra.mxu0 0.0
  %2485 = vmatprep.subr.mxu0 0.0
  %2486 = vmatpush1.msra.mxu0 0.0
  %2487 = vmatprep.subr.mxu0 0.0
  %2488 = vmatpush1.msra.mxu0 0.0
  %2489 = vmatprep.subr.mxu0 0.0
  %2490 = vmatpush1.msra.mxu0 0.0
  %2491 = vmatprep.subr.mxu0 0.0
  %2492 = vmatpush1.msra.mxu0 0.0
  %2493 = vmatprep.subr.mxu0 0.0
  %2494 = vmatpush1.msra.mxu0 0.0
  %2495 = vmatprep.subr.mxu0 0.0
  %2496 = vmatpush1.msra.mxu0 0.0
  %2497 = vmatprep.subr.mxu0 0.0
  %2498 = vmatpush1.msra.mxu0 0.0
  %2499 = vmatprep.mubr.f32.mxu0 0.0
  %2500 = vmatmul.mubr.f32.gmra.mrb[0].mxu0 %v2433
  %v2501 = vpop.f32.mrb[0].mxu0
  %v2502 = vadd.f32 0.0, %v2501
  %v2503 = vpop.f32.mrb[0].mxu0
  %v2504 = vadd.f32 0.0, %v2503
  %2505 = vdwg.mxu0
  %2506 = vmatprep.subr.mxu0 %v2356
  %2507 = vmatpush1.msra.mxu0 %v2355
  %2508 = vmatprep.subr.mxu0 %v2360
  %2509 = vmatpush1.msra.mxu0 %v2359
  %2510 = vmatprep.subr.mxu0 %v2364
  %2511 = vmatpush1.msra.mxu0 %v2363
  %2512 = vmatprep.subr.mxu0 %v2368
  %2513 = vmatpush1.msra.mxu0 %v2367
  %2514 = vmatprep.subr.mxu0 %v2372
  %2515 = vmatpush1.msra.mxu0 %v2371
  %2516 = vmatprep.subr.mxu0 %v2376
  %2517 = vmatpush1.msra.mxu0 %v2375
  %2518 = vmatprep.subr.mxu0 %v2380
  %2519 = vmatpush1.msra.mxu0 %v2379
  %2520 = vmatprep.subr.mxu0 %v2384
  %2521 = vmatpush1.msra.mxu0 %v2383
  %2522 = vmatprep.subr.mxu0 %v2388
  %2523 = vmatpush1.msra.mxu0 %v2387
  %2524 = vmatprep.subr.mxu0 %v2392
  %2525 = vmatpush1.msra.mxu0 %v2391
  %2526 = vmatprep.subr.mxu0 %v2396
  %2527 = vmatpush1.msra.mxu0 %v2395
  %2528 = vmatprep.subr.mxu0 %v2400
  %2529 = vmatpush1.msra.mxu0 %v2399
  %2530 = vmatprep.subr.mxu0 %v2404
  %2531 = vmatpush1.msra.mxu0 %v2403
  %2532 = vmatprep.subr.mxu0 %v2408
  %2533 = vmatpush1.msra.mxu0 %v2407
  %2534 = vmatprep.subr.mxu0 %v2412
  %2535 = vmatpush1.msra.mxu0 %v2411
  %2536 = vmatprep.subr.mxu0 %v2416
  %2537 = vmatpush1.msra.mxu0 %v2415
  %2538 = vmatprep.subr.mxu0 0.0
  %2539 = vmatpush1.msra.mxu0 0.0
  %2540 = vmatprep.subr.mxu0 0.0
  %2541 = vmatpush1.msra.mxu0 0.0
  %2542 = vmatprep.subr.mxu0 0.0
  %2543 = vmatpush1.msra.mxu0 0.0
  %2544 = vmatprep.subr.mxu0 0.0
  %2545 = vmatpush1.msra.mxu0 0.0
  %2546 = vmatprep.subr.mxu0 0.0
  %2547 = vmatpush1.msra.mxu0 0.0
  %2548 = vmatprep.subr.mxu0 0.0
  %2549 = vmatpush1.msra.mxu0 0.0
  %2550 = vmatprep.subr.mxu0 0.0
  %2551 = vmatpush1.msra.mxu0 0.0
  %2552 = vmatprep.subr.mxu0 0.0
  %2553 = vmatpush1.msra.mxu0 0.0
  %2554 = vmatprep.subr.mxu0 0.0
  %2555 = vmatpush1.msra.mxu0 0.0
  %2556 = vmatprep.subr.mxu0 0.0
  %2557 = vmatpush1.msra.mxu0 0.0
  %2558 = vmatprep.subr.mxu0 0.0
  %2559 = vmatpush1.msra.mxu0 0.0
  %2560 = vmatprep.subr.mxu0 0.0
  %2561 = vmatpush1.msra.mxu0 0.0
  %2562 = vmatprep.subr.mxu0 0.0
  %2563 = vmatpush1.msra.mxu0 0.0
  %2564 = vmatprep.subr.mxu0 0.0
  %2565 = vmatpush1.msra.mxu0 0.0
  %2566 = vmatprep.subr.mxu0 0.0
  %2567 = vmatpush1.msra.mxu0 0.0
  %2568 = vmatprep.subr.mxu0 0.0
  %2569 = vmatpush1.msra.mxu0 0.0
  %2570 = vmatprep.mubr.f32.mxu0 0.0
  %2571 = vmatmul.mubr.f32.gmra.mrb[0].mxu0 %v2433
  %v2572 = vpop.f32.mrb[0].mxu0
  %v2573 = vadd.f32 0.0, %v2572
  %v2574 = vpop.f32.mrb[0].mxu0
  %v2575 = vadd.f32 0.0, %v2574
  %2576 = vdwg.mxu0
  %v2581 = vcombine.low %v2502, %v2504
  %v2582 = vcombine.low %v2573, %v2575
  %v2584 = vunpack.c.l.s4 1966171168
  %v2585 = vunpack.c.0.s8 %v2584
  %v2586 = vlaneseq
  %v2587 = vshrl.u32 %v2586, 7
  %v2588 = vsub.s32 %v2585, %v2587
  %v2589 = vrot.slane %v2581, %v2588
  %v2591 = vunpack.c.l.s4 1966171168
  %v2592 = vunpack.c.0.s8 %v2591
  %v2593 = vlaneseq
  %v2594 = vshrl.u32 %v2593, 7
  %v2595 = vsub.s32 %v2592, %v2594
  %v2596 = vrot.slane %v2582, %v2595
  %v2597 = vcombine.low %v2589, %v2596
  %v2598 = vcombine.high %v2589, %v2596
  %v2600 = vunpack.c.l.s4 1966171168
  %v2601 = vunpack.c.0.s8 %v2600
  %v2602 = vlaneseq
  %v2603 = vshrl.u32 %v2602, 7
  %v2604 = vsub.s32 %v2601, %v2603
  %v2605 = vrot.slane %v2597, %v2604
  %v2607 = vunpack.c.l.s4 1966171168
  %v2608 = vunpack.c.0.s8 %v2607
  %v2609 = vlaneseq
  %v2610 = vshrl.u32 %v2609, 7
  %v2611 = vsub.s32 %v2608, %v2610
  %v2612 = vrot.slane %v2598, %v2611
  %v2615 = vadd.f32 %v2350, %v2605
  %v2616 = vadd.f32 %v2352, %v2612
  %v2617 = vxor.u32 %v2615, 2147483648
  %v2618 = vxor.u32 %v2616, 2147483648
  %v2619 = vmul.f32 %v2617, 1.442695
  %v2620 = vpow.pop %v2619
  %v2621 = vmul.f32 %v2618, 1.442695
  %v2622 = vpow.pop %v2621
  %v2623 = vadd.f32 %v2620, 1.0
  %v2624 = vadd.f32 %v2622, 1.0
  %v2625 = vrcp.pop %v2623
  %v2626 = vmul.f32 1.0, %v2625
  %v2627 = vrcp.pop %v2624
  %v2628 = vmul.f32 1.0, %v2627
  %v2631 = vrot.slane %v2615, 1
  %v2632 = vrot.slane %v2616, 1
  %v2635 = vxor.u32 %v2631, 2147483648
  %v2636 = vxor.u32 %v2632, 2147483648
  %v2637 = vmul.f32 %v2635, 1.442695
  %v2638 = vpow.pop %v2637
  %v2639 = vmul.f32 %v2636, 1.442695
  %v2640 = vpow.pop %v2639
  %v2641 = vadd.f32 %v2638, 1.0
  %v2642 = vadd.f32 %v2640, 1.0
  %v2643 = vrcp.pop %v2641
  %v2644 = vmul.f32 1.0, %v2643
  %v2645 = vrcp.pop %v2642
  %v2646 = vmul.f32 1.0, %v2645
  %v2647 = vrot.slane %v2615, 2
  %v2648 = vrot.slane %v2616, 2
  %v2651 = vtanh.pop %v2647
  %v2652 = vtanh.pop %v2648
  %v2653 = vrot.slane %v2615, 3
  %v2654 = vrot.slane %v2616, 3
  %v2657 = vxor.u32 %v2653, 2147483648
  %v2658 = vxor.u32 %v2654, 2147483648
  %v2659 = vmul.f32 %v2657, 1.442695
  %v2660 = vpow.pop %v2659
  %v2661 = vmul.f32 %v2658, 1.442695
  %v2662 = vpow.pop %v2661
  %v2663 = vadd.f32 %v2660, 1.0
  %v2664 = vadd.f32 %v2662, 1.0
  %v2665 = vrcp.pop %v2663
  %v2666 = vmul.f32 1.0, %v2665
  %v2667 = vrcp.pop %v2664
  %v2668 = vmul.f32 1.0, %v2667
  %v2669 = vmul.f32 %v2644, %v2341
  %v2670 = vmul.f32 %v2646, %v2342
  %v2671 = vmul.f32 %v2626, %v2651
  %v2672 = vmul.f32 %v2628, %v2652
  %v2673 = vadd.f32 %v2669, %v2671
  %v2674 = vadd.f32 %v2670, %v2672
  %v2675 = vtanh.pop %v2673
  %v2676 = vtanh.pop %v2674
  %v2677 = vmul.f32 %v2666, %v2675
  %v2678 = vmul.f32 %v2668, %v2676
  %2679 = vst [vmem:[%s2 + $0x7] sm:$0x1] %v2677
  %2680 = vst [vmem:[%s2 + $0xf] sm:$0x1] %v2678
  %v2683 = vcombine.low %v2677, %v2678
  %v2685 = vunpack.c.l.s4 1966171168
  %v2686 = vunpack.c.0.s8 %v2685
  %v2687 = vlaneseq
  %v2688 = vshrl.u32 %v2687, 7
  %v2689 = vsub.s32 %v2686, %v2688
  %v2690 = vrot.slane %v2683, %v2689
  %v2692 = vunpack.c.l.s4 1966171168
  %v2693 = vunpack.c.0.s8 %v2692
  %v2694 = vlaneseq
  %v2695 = vshrl.u32 %v2694, 7
  %v2696 = vsub.s32 %v2693, %v2695
  %v2697 = vrot.slane %v2690, %v2696
  %2699 = vst [vmem:[#allocation2] sm:$0x3] %v2697
  %v2702 = vcombine.low %v2673, %v2674
  %v2704 = vunpack.c.l.s4 1966171168
  %v2705 = vunpack.c.0.s8 %v2704
  %v2706 = vlaneseq
  %v2707 = vshrl.u32 %v2706, 7
  %v2708 = vsub.s32 %v2705, %v2707
  %v2709 = vrot.slane %v2702, %v2708
  %v2711 = vunpack.c.l.s4 1966171168
  %v2712 = vunpack.c.0.s8 %v2711
  %v2713 = vlaneseq
  %v2714 = vshrl.u32 %v2713, 7
  %v2715 = vsub.s32 %v2712, %v2714
  %v2716 = vrot.slane %v2709, %v2715
  %2718 = vst [vmem:[#allocation3] sm:$0x3] %v2716
  // Predicated region
  $region14: #{scst_forward.4} parent=0 // pred_check
    _
  $region15: #{scst_forward.4} parent=0 // pred_check_branch
    %2720 = sbr.rel (0) target = $region17
  $region16: #{scst_forward.4} parent=0 // pred_region
    _
  $region17: #{scst_forward.4} parent=0 // pred_fallthru
    _
  // Predicated region
  $region18: #{scst_forward.4} parent=0 // pred_check
    _
  $region19: #{scst_forward.4} parent=0 // pred_check_branch
    %2722 = sbr.rel (0) target = $region21
  $region20: #{scst_forward.4} parent=0 // pred_region
    _
  $region21: #{scst_forward.4} parent=0 // pred_fallthru
    _

</llo_original>
